<compile_context>
chip_gen: v7x
topology: tpu7x:2x2x1
jax: 0.10.0
libtpu: 0.0.40
codegen_flags: <defaults>
</compile_context>

<pallas_src>
import numpy as np
import jax
import jax.numpy as jnp
from jax.experimental import pallas as pl
from jax.experimental.pallas import tpu as pltpu

# ---- scaled-down hyperparameters (reference values from the PyTorch module in comments)
B, T = 2, 4            # batch, clip length
C, IMG = 3, 16         # channels, spatial size        (ref: 3, 224)
FEAT = 64              # backbone feature dim          (ref: resnet152 fc_in = 2048)
H1, H2 = 64, 48        # CNN_fc_hidden1/2              (ref: 1024, 768)
EMB = 32               # CNN_embed_dim                 (ref: 512)
HRNN, LRNN = 32, 3     # RNN hidden nodes / layers     (ref: 512, 3)
FCD = 32               # RNN_FC_dim                    (ref: 256)
K = 16                 # num classes                   (ref: 101)
KPAD = 128             # lane-dense padded class dim for the kernel output store
EPS = 1e-5             # BatchNorm1d eps
NFRAMES = B * T
NPIX = IMG * IMG

_VMEM = pl.BlockSpec(memory_space=pltpu.MemorySpace.VMEM)

# Batch-major (n = b*T + t) -> time-major (m = t*B + b) frame permutation matrix.
_PERM = np.zeros((NFRAMES, NFRAMES), np.float32)
for _t in range(T):
    for _b in range(B):
        _PERM[_t * B + _b, _b * T + _t] = 1.0


# ----------------------------------------------------------------------------
# Fused kernel: encoder + 3-layer LSTM + classification head
# ----------------------------------------------------------------------------
def predictor_kernel(x_ref, perm_ref, wc_ref, bc_ref,
                     w1_ref, b1_ref, w2_ref, b2_ref, w3_ref, b3_ref,
                     wih_ref, whh_ref, bl_ref,
                     wh1_ref, bh1_ref, wh2_ref, bh2_ref,
                     out_ref):
    # ------------------------- encoder (all frames at once) -------------------------
    # 1x1 conv as C rank-1 VPU updates over the whole (NFRAMES, FEAT, NPIX) slab
    # (no MXU K=3 contraction, no padding), then ReLU and a single XLU lane
    # reduction for the global average pool.
    inv_npix = 1.0 / float(NPIX)
    x = x_ref[...]                                                  # (NFRAMES, C, NPIX)
    feat = jnp.broadcast_to(bc_ref[...], (NFRAMES, FEAT, NPIX))     # bias
    for c in range(C):
        wcol = jnp.broadcast_to(wc_ref[:, :, c:c + 1], (NFRAMES, FEAT, NPIX))
        feat = feat + wcol * x[:, c:c + 1, :]
    feat = jnp.maximum(feat, 0.0)                                   # ReLU
    pooled_bm = jnp.sum(feat, axis=2) * inv_npix                    # (NFRAMES, FEAT), batch-major

    # Reorder frames batch-major -> time-major with one tiny MXU matmul so the
    # LSTM's per-timestep input is a contiguous row slice downstream.
    pooled = jnp.dot(perm_ref[...], pooled_bm,
                     preferred_element_type=jnp.float32)            # (NFRAMES, FEAT), time-major

    # fc1(+bn1 folded) -> relu -> fc2(+bn2 folded) -> relu -> fc3
    # drop_p = 0.0 -> dropout is identity in eval
    h = jnp.maximum(jnp.dot(pooled, w1_ref[...], preferred_element_type=jnp.float32)
                    + b1_ref[...], 0.0)
    h = jnp.maximum(jnp.dot(h, w2_ref[...], preferred_element_type=jnp.float32)
                    + b2_ref[...], 0.0)
    emb = jnp.dot(h, w3_ref[...], preferred_element_type=jnp.float32) + b3_ref[...]   # (NFRAMES, EMB)

    # ------------------------- LSTM (3 layers, PyTorch i,f,g,o order) -------------------------
    # Hoist weight/bias loads out of the unrolled recurrence, and hoist the
    # layer-0 input projection for all timesteps (one MXU matmul instead of T).
    whh0 = whh_ref[0]
    wih_l = [None] + [wih_ref[l] for l in range(1, LRNN)]
    whh_l = [None] + [whh_ref[l] for l in range(1, LRNN)]
    bl_l = [None] + [bl_ref[l] for l in range(1, LRNN)]
    xp0 = jnp.dot(emb, wih_ref[0], preferred_element_type=jnp.float32) + bl_ref[0]     # (NFRAMES, 4*HRNN)

    # State lives in vregs (Python carries), loops fully unrolled (T, LRNN static).
    hs = [jnp.zeros((B, HRNN), jnp.float32) for _ in range(LRNN)]
    cs = [jnp.zeros((B, HRNN), jnp.float32) for _ in range(LRNN)]
    for t in range(T):
        inp = None                               # layer 0 uses the hoisted projection
        for l in range(LRNN):
            if l == 0:
                gates = xp0[t * B:(t + 1) * B, :] + jnp.dot(
                    hs[0], whh0, preferred_element_type=jnp.float32)
            else:
                gates = (jnp.dot(inp, wih_l[l], preferred_element_type=jnp.float32)
                         + jnp.dot(hs[l], whh_l[l], preferred_element_type=jnp.float32)
                         + bl_l[l])              # biases pre-summed on host
            # One sigmoid + one tanh over the full (B, 4*HRNN) gates vreg, then slice.
            sig = jax.nn.sigmoid(gates)
            th = jnp.tanh(gates)
            i_g = sig[:, 0 * HRNN:1 * HRNN]
            f_g = sig[:, 1 * HRNN:2 * HRNN]
            g_g = th[:, 2 * HRNN:3 * HRNN]
            o_g = sig[:, 3 * HRNN:4 * HRNN]
            c_new = f_g * cs[l] + i_g * g_g
            h_new = o_g * jnp.tanh(c_new)
            hs[l] = h_new
            cs[l] = c_new
            inp = h_new

    # ------------------------- head -------------------------
    fh = jnp.maximum(jnp.dot(hs[LRNN - 1], wh1_ref[...], preferred_element_type=jnp.float32)
                     + bh1_ref[...], 0.0)
    # Lane-dense (B, KPAD) store; padded class columns are exact zeros.
    out_ref[...] = (jnp.dot(fh, wh2_ref[...], preferred_element_type=jnp.float32)
                    + bh2_ref[...]).astype(out_ref.dtype)


# ----------------------------------------------------------------------------
# Wrapper
# ----------------------------------------------------------------------------
def predictor_forward(X, enc, lstm, head):
    # NCHW frames -> (frame, channel, pixel): a pure reshape, no transpose / no pad.
    x = X.reshape(NFRAMES, C, NPIX)

    # Fold eval-mode BatchNorm1d (running stats) into the preceding fc weights/biases.
    s1 = enc['g1'] * jax.lax.rsqrt(enc['v1'] + EPS)
    w1f = enc['w1'] * s1
    b1f = (enc['b1'] - enc['m1']) * s1 + enc['be1']
    s2 = enc['g2'] * jax.lax.rsqrt(enc['v2'] + EPS)
    w2f = enc['w2'] * s2
    b2f = (enc['b2'] - enc['m2']) * s2 + enc['be2']

    wc3 = enc['wc'].T.reshape(1, FEAT, C)    # conv weight columns for rank-1 updates
    bc3 = enc['bc'].reshape(1, FEAT, 1)      # conv bias, broadcastable over pixels

    bl = lstm['bih'] + lstm['bhh']           # pre-summed LSTM biases (LRNN, 1, 4*HRNN)

    perm = jnp.asarray(_PERM)                # tiny constant, folded by XLA

    # Zero-pad the head output dim to a full 128-lane width (unmasked store);
    # real logits are the first K columns.
    wh2p = jnp.pad(head['w2'], ((0, 0), (0, KPAD - K)))
    bh2p = jnp.pad(head['b2'], ((0, 0), (0, KPAD - K)))

    out = pl.pallas_call(
        predictor_kernel,
        out_shape=jax.ShapeDtypeStruct((B, KPAD), jnp.float32),
        in_specs=[_VMEM] * 17,
        out_specs=_VMEM,
    )(x, perm, wc3, bc3, w1f, b1f, w2f, b2f, enc['w3'], enc['b3'],
      lstm['wih'], lstm['whh'], bl,
      head['w1'], head['b1'], wh2p, bh2p)

    logits = out[:, :K]
    # output.max(1, keepdim=True)[1] -> class indices
    y_pred = jnp.argmax(logits, axis=1)
    # TODO(synk): LabelEncoder class-name lookup (pickle + le.classes_) is host-side, not a kernel op.
    return y_pred, logits


# ----------------------------------------------------------------------------
# Pure-JAX reference for correctness check (unfused BN, separate LSTM biases)
# ----------------------------------------------------------------------------
def reference_forward(X, enc, lstm, head):
    frames = X.reshape(NFRAMES, C, NPIX).transpose(0, 2, 1).reshape(NFRAMES * NPIX, C)
    feat = jnp.maximum(frames @ enc['wc'] + enc['bc'], 0.0)
    pooled = feat.reshape(NFRAMES, NPIX, FEAT).mean(axis=1)
    h = pooled @ enc['w1'] + enc['b1']
    h = (h - enc['m1']) / jnp.sqrt(enc['v1'] + EPS) * enc['g1'] + enc['be1']
    h = jnp.maximum(h, 0.0)
    h = h @ enc['w2'] + enc['b2']
    h = (h - enc['m2']) / jnp.sqrt(enc['v2'] + EPS) * enc['g2'] + enc['be2']
    h = jnp.maximum(h, 0.0)
    emb = h @ enc['w3'] + enc['b3']
    x_seq = emb.reshape(B, T, EMB)

    hs = jnp.zeros((LRNN, B, HRNN), jnp.float32)
    cs = jnp.zeros((LRNN, B, HRNN), jnp.float32)
    for t in range(T):
        inp = x_seq[:, t]
        new_h, new_c = [], []
        for l in range(LRNN):
            gates = inp @ lstm['wih'][l] + hs[l] @ lstm['whh'][l] + lstm['bih'][l] + lstm['bhh'][l]
            i_g = jax.nn.sigmoid(gates[:, :HRNN])
            f_g = jax.nn.sigmoid(gates[:, HRNN:2 * HRNN])
            g_g = jnp.tanh(gates[:, 2 * HRNN:3 * HRNN])
            o_g = jax.nn.sigmoid(gates[:, 3 * HRNN:])
            c_new = f_g * cs[l] + i_g * g_g
            h_new = o_g * jnp.tanh(c_new)
            new_h.append(h_new)
            new_c.append(c_new)
            inp = h_new
        hs = jnp.stack(new_h)
        cs = jnp.stack(new_c)
    fh = jnp.maximum(hs[-1] @ head['w1'] + head['b1'], 0.0)
    return fh @ head['w2'] + head['b2']


# ----------------------------------------------------------------------------
# Deterministic synthetic parameters
# ----------------------------------------------------------------------------
def init_params(key):
    ks = jax.random.split(key, 16)
    s = 0.1
    enc = dict(
        wc=jax.random.normal(ks[0], (C, FEAT), jnp.float32) * s,
        bc=jax.random.normal(ks[1], (1, FEAT), jnp.float32) * s,
        w1=jax.random.normal(ks[2], (FEAT, H1), jnp.float32) * s,
        b1=jax.random.normal(ks[3], (1, H1), jnp.float32) * s,
        g1=jnp.ones((1, H1), jnp.float32),
        be1=jnp.zeros((1, H1), jnp.float32),
        m1=jax.random.normal(ks[4], (1, H1), jnp.float32) * s,
        v1=jnp.ones((1, H1), jnp.float32) + jax.random.uniform(ks[5], (1, H1)) * 0.1,
        w2=jax.random.normal(ks[6], (H1, H2), jnp.float32) * s,
        b2=jax.random.normal(ks[7], (1, H2), jnp.float32) * s,
        g2=jnp.ones((1, H2), jnp.float32),
        be2=jnp.zeros((1, H2), jnp.float32),
        m2=jax.random.normal(ks[8], (1, H2), jnp.float32) * s,
        v2=jnp.ones((1, H2), jnp.float32) + jax.random.uniform(ks[9], (1, H2)) * 0.1,
        w3=jax.random.normal(ks[10], (H2, EMB), jnp.float32) * s,
        b3=jax.random.normal(ks[11], (1, EMB), jnp.float32) * s,
    )
    lk = jax.random.split(ks[12], 4)
    lstm = dict(
        wih=jax.random.normal(lk[0], (LRNN, EMB, 4 * HRNN), jnp.float32) * s,   # EMB == HRNN
        whh=jax.random.normal(lk[1], (LRNN, HRNN, 4 * HRNN), jnp.float32) * s,
        bih=jax.random.normal(lk[2], (LRNN, 1, 4 * HRNN), jnp.float32) * s,
        bhh=jax.random.normal(lk[3], (LRNN, 1, 4 * HRNN), jnp.float32) * s,
    )
    hk = jax.random.split(ks[13], 4)
    head = dict(
        w1=jax.random.normal(hk[0], (HRNN, FCD), jnp.float32) * s,
        b1=jax.random.normal(hk[1], (1, FCD), jnp.float32) * s,
        w2=jax.random.normal(hk[2], (FCD, K), jnp.float32) * s,
        b2=jax.random.normal(hk[3], (1, K), jnp.float32) * s,
    )
    return enc, lstm, head


if __name__ == "__main__":
    key = jax.random.PRNGKey(0)
    pkey, xkey = jax.random.split(key)
    enc, lstm, head = init_params(pkey)
    X = jax.random.normal(xkey, (B, T, C, IMG, IMG), jnp.float32)

    fwd = jax.jit(predictor_forward)
    y_pred, logits = fwd(X, enc, lstm, head)
    jax.block_until_ready((y_pred, logits))

    logits_ref = reference_forward(X, enc, lstm, head)
    assert logits.shape == (B, K) and y_pred.shape == (B,)
    assert jnp.allclose(logits, logits_ref, atol=1e-2, rtol=1e-2), \
        f"max diff {jnp.max(jnp.abs(logits - logits_ref))}"
    assert jnp.array_equal(y_pred, jnp.argmax(logits_ref, axis=1))

    print("KERNEL_OK")
</pallas_src>

<mosaic_0001>
module attributes {stable_mosaic.version = 11 : i64} {
  func.func @predictor_kernel(%arg0: memref<8x3x256xf32, #tpu.memory_space<vmem>>, %arg1: memref<8x8xf32, #tpu.memory_space<vmem>>, %arg2: memref<1x64x3xf32, #tpu.memory_space<vmem>>, %arg3: memref<1x64x1xf32, #tpu.memory_space<vmem>>, %arg4: memref<64x64xf32, #tpu.memory_space<vmem>>, %arg5: memref<1x64xf32, #tpu.memory_space<vmem>>, %arg6: memref<64x48xf32, #tpu.memory_space<vmem>>, %arg7: memref<1x48xf32, #tpu.memory_space<vmem>>, %arg8: memref<48x32xf32, #tpu.memory_space<vmem>>, %arg9: memref<1x32xf32, #tpu.memory_space<vmem>>, %arg10: memref<3x32x128xf32, #tpu.memory_space<vmem>>, %arg11: memref<3x32x128xf32, #tpu.memory_space<vmem>>, %arg12: memref<3x1x128xf32, #tpu.memory_space<vmem>>, %arg13: memref<32x32xf32, #tpu.memory_space<vmem>>, %arg14: memref<1x32xf32, #tpu.memory_space<vmem>>, %arg15: memref<32x128xf32, #tpu.memory_space<vmem>>, %arg16: memref<1x128xf32, #tpu.memory_space<vmem>>, %arg17: memref<2x128xf32, #tpu.memory_space<vmem>>) attributes {dimension_semantics = [], scalar_prefetch = 0 : i64, scratch_operands = 0 : i64, tpu.core_type = #tpu.core_type<tc>} {
    %c0 = arith.constant 0 : index
    %c0_0 = arith.constant 0 : index
    %c0_1 = arith.constant 0 : index
    %0 = vector.load %arg0[%c0, %c0_0, %c0_1] : memref<8x3x256xf32, #tpu.memory_space<vmem>>, vector<8x3x256xf32>
    %c0_2 = arith.constant 0 : index
    %c0_3 = arith.constant 0 : index
    %c0_4 = arith.constant 0 : index
    %1 = vector.load %arg3[%c0_2, %c0_3, %c0_4] : memref<1x64x1xf32, #tpu.memory_space<vmem>>, vector<1x64x1xf32>
    %2 = vector.shape_cast %1 : vector<1x64x1xf32> to vector<1x64x1xf32>
    %3 = vector.broadcast %2 : vector<1x64x1xf32> to vector<8x64x256xf32>
    %c0_5 = arith.constant 0 : index
    %c0_6 = arith.constant 0 : index
    %c0_7 = arith.constant 0 : index
    %4 = vector.load %arg2[%c0_5, %c0_6, %c0_7] : memref<1x64x3xf32, #tpu.memory_space<vmem>>, vector<1x64x1xf32>
    %5 = vector.shape_cast %4 : vector<1x64x1xf32> to vector<1x64x1xf32>
    %6 = vector.broadcast %5 : vector<1x64x1xf32> to vector<8x64x256xf32>
    %7 = vector.extract_strided_slice %0 {offsets = [0, 0, 0], sizes = [8, 1, 256], strides = [1, 1, 1]} : vector<8x3x256xf32> to vector<8x1x256xf32>
    %8 = vector.broadcast %7 : vector<8x1x256xf32> to vector<8x64x256xf32>
    %9 = arith.mulf %6, %8 : vector<8x64x256xf32>
    %10 = arith.addf %3, %9 : vector<8x64x256xf32>
    %c0_8 = arith.constant 0 : index
    %c0_9 = arith.constant 0 : index
    %c1 = arith.constant 1 : index
    %11 = vector.load %arg2[%c0_8, %c0_9, %c1] : memref<1x64x3xf32, #tpu.memory_space<vmem>>, vector<1x64x1xf32>
    %12 = vector.shape_cast %11 : vector<1x64x1xf32> to vector<1x64x1xf32>
    %13 = vector.broadcast %12 : vector<1x64x1xf32> to vector<8x64x256xf32>
    %14 = vector.extract_strided_slice %0 {offsets = [0, 1, 0], sizes = [8, 1, 256], strides = [1, 1, 1]} : vector<8x3x256xf32> to vector<8x1x256xf32>
    %15 = vector.broadcast %14 : vector<8x1x256xf32> to vector<8x64x256xf32>
    %16 = arith.mulf %13, %15 : vector<8x64x256xf32>
    %17 = arith.addf %10, %16 : vector<8x64x256xf32>
    %c0_10 = arith.constant 0 : index
    %c0_11 = arith.constant 0 : index
    %c2 = arith.constant 2 : index
    %18 = vector.load %arg2[%c0_10, %c0_11, %c2] : memref<1x64x3xf32, #tpu.memory_space<vmem>>, vector<1x64x1xf32>
    %19 = vector.shape_cast %18 : vector<1x64x1xf32> to vector<1x64x1xf32>
    %20 = vector.broadcast %19 : vector<1x64x1xf32> to vector<8x64x256xf32>
    %21 = vector.extract_strided_slice %0 {offsets = [0, 2, 0], sizes = [8, 1, 256], strides = [1, 1, 1]} : vector<8x3x256xf32> to vector<8x1x256xf32>
    %22 = vector.broadcast %21 : vector<8x1x256xf32> to vector<8x64x256xf32>
    %23 = arith.mulf %20, %22 : vector<8x64x256xf32>
    %24 = arith.addf %17, %23 : vector<8x64x256xf32>
    %cst = arith.constant 0.000000e+00 : f32
    %25 = vector.broadcast %cst : f32 to vector<8x64x256xf32>
    %26 = arith.maximumf %24, %25 : vector<8x64x256xf32>
    %cst_12 = arith.constant dense<0.000000e+00> : vector<8x64xf32>
    %27 = vector.multi_reduction <add>, %26, %cst_12 [2] : vector<8x64x256xf32> to vector<8x64xf32>
    %cst_13 = arith.constant 3.906250e-03 : f32
    %28 = vector.broadcast %cst_13 : f32 to vector<8x64xf32>
    %29 = arith.mulf %27, %28 : vector<8x64xf32>
    %c0_14 = arith.constant 0 : index
    %c0_15 = arith.constant 0 : index
    %30 = vector.load %arg1[%c0_14, %c0_15] : memref<8x8xf32, #tpu.memory_space<vmem>>, vector<8x8xf32>
    %cst_16 = arith.constant dense<0.000000e+00> : vector<8x64xf32>
    %31 = tpu.matmul %30, %29, %cst_16 {dimension_numbers = #tpu.dot_dimension_numbers<[1], [0], [0], [1], [0, 0, 1, 1], [], []>} : vector<8x8xf32>, vector<8x64xf32>, vector<8x64xf32> -> vector<8x64xf32>
    %c0_17 = arith.constant 0 : index
    %c0_18 = arith.constant 0 : index
    %32 = vector.load %arg4[%c0_17, %c0_18] : memref<64x64xf32, #tpu.memory_space<vmem>>, vector<64x64xf32>
    %cst_19 = arith.constant dense<0.000000e+00> : vector<8x64xf32>
    %33 = tpu.matmul %31, %32, %cst_19 {dimension_numbers = #tpu.dot_dimension_numbers<[1], [0], [0], [1], [0, 0, 1, 1], [], []>} : vector<8x64xf32>, vector<64x64xf32>, vector<8x64xf32> -> vector<8x64xf32>
    %c0_20 = arith.constant 0 : index
    %c0_21 = arith.constant 0 : index
    %34 = vector.load %arg5[%c0_20, %c0_21] : memref<1x64xf32, #tpu.memory_space<vmem>>, vector<1x64xf32>
    %35 = vector.broadcast %34 : vector<1x64xf32> to vector<8x64xf32>
    %36 = arith.addf %33, %35 : vector<8x64xf32>
    %cst_22 = arith.constant 0.000000e+00 : f32
    %37 = vector.broadcast %cst_22 : f32 to vector<8x64xf32>
    %38 = arith.maximumf %36, %37 : vector<8x64xf32>
    %c0_23 = arith.constant 0 : index
    %c0_24 = arith.constant 0 : index
    %39 = vector.load %arg6[%c0_23, %c0_24] : memref<64x48xf32, #tpu.memory_space<vmem>>, vector<64x48xf32>
    %cst_25 = arith.constant dense<0.000000e+00> : vector<8x48xf32>
    %40 = tpu.matmul %38, %39, %cst_25 {dimension_numbers = #tpu.dot_dimension_numbers<[1], [0], [0], [1], [0, 0, 1, 1], [], []>} : vector<8x64xf32>, vector<64x48xf32>, vector<8x48xf32> -> vector<8x48xf32>
    %c0_26 = arith.constant 0 : index
    %c0_27 = arith.constant 0 : index
    %41 = vector.load %arg7[%c0_26, %c0_27] : memref<1x48xf32, #tpu.memory_space<vmem>>, vector<1x48xf32>
    %42 = vector.broadcast %41 : vector<1x48xf32> to vector<8x48xf32>
    %43 = arith.addf %40, %42 : vector<8x48xf32>
    %cst_28 = arith.constant 0.000000e+00 : f32
    %44 = vector.broadcast %cst_28 : f32 to vector<8x48xf32>
    %45 = arith.maximumf %43, %44 : vector<8x48xf32>
    %c0_29 = arith.constant 0 : index
    %c0_30 = arith.constant 0 : index
    %46 = vector.load %arg8[%c0_29, %c0_30] : memref<48x32xf32, #tpu.memory_space<vmem>>, vector<48x32xf32>
    %cst_31 = arith.constant dense<0.000000e+00> : vector<8x32xf32>
    %47 = tpu.matmul %45, %46, %cst_31 {dimension_numbers = #tpu.dot_dimension_numbers<[1], [0], [0], [1], [0, 0, 1, 1], [], []>} : vector<8x48xf32>, vector<48x32xf32>, vector<8x32xf32> -> vector<8x32xf32>
    %c0_32 = arith.constant 0 : index
    %c0_33 = arith.constant 0 : index
    %48 = vector.load %arg9[%c0_32, %c0_33] : memref<1x32xf32, #tpu.memory_space<vmem>>, vector<1x32xf32>
    %49 = vector.broadcast %48 : vector<1x32xf32> to vector<8x32xf32>
    %50 = arith.addf %47, %49 : vector<8x32xf32>
    %c0_34 = arith.constant 0 : index
    %c0_35 = arith.constant 0 : index
    %c0_36 = arith.constant 0 : index
    %51 = vector.load %arg11[%c0_34, %c0_35, %c0_36] : memref<3x32x128xf32, #tpu.memory_space<vmem>>, vector<1x32x128xf32>
    %52 = vector.shape_cast %51 : vector<1x32x128xf32> to vector<32x128xf32>
    %c1_37 = arith.constant 1 : index
    %c0_38 = arith.constant 0 : index
    %c0_39 = arith.constant 0 : index
    %53 = vector.load %arg10[%c1_37, %c0_38, %c0_39] : memref<3x32x128xf32, #tpu.memory_space<vmem>>, vector<1x32x128xf32>
    %54 = vector.shape_cast %53 : vector<1x32x128xf32> to vector<32x128xf32>
    %c2_40 = arith.constant 2 : index
    %c0_41 = arith.constant 0 : index
    %c0_42 = arith.constant 0 : index
    %55 = vector.load %arg10[%c2_40, %c0_41, %c0_42] : memref<3x32x128xf32, #tpu.memory_space<vmem>>, vector<1x32x128xf32>
    %56 = vector.shape_cast %55 : vector<1x32x128xf32> to vector<32x128xf32>
    %c1_43 = arith.constant 1 : index
    %c0_44 = arith.constant 0 : index
    %c0_45 = arith.constant 0 : index
    %57 = vector.load %arg11[%c1_43, %c0_44, %c0_45] : memref<3x32x128xf32, #tpu.memory_space<vmem>>, vector<1x32x128xf32>
    %58 = vector.shape_cast %57 : vector<1x32x128xf32> to vector<32x128xf32>
    %c2_46 = arith.constant 2 : index
    %c0_47 = arith.constant 0 : index
    %c0_48 = arith.constant 0 : index
    %59 = vector.load %arg11[%c2_46, %c0_47, %c0_48] : memref<3x32x128xf32, #tpu.memory_space<vmem>>, vector<1x32x128xf32>
    %60 = vector.shape_cast %59 : vector<1x32x128xf32> to vector<32x128xf32>
    %c1_49 = arith.constant 1 : index
    %c0_50 = arith.constant 0 : index
    %c0_51 = arith.constant 0 : index
    %61 = vector.load %arg12[%c1_49, %c0_50, %c0_51] : memref<3x1x128xf32, #tpu.memory_space<vmem>>, vector<1x1x128xf32>
    %62 = vector.shape_cast %61 : vector<1x1x128xf32> to vector<1x128xf32>
    %c2_52 = arith.constant 2 : index
    %c0_53 = arith.constant 0 : index
    %c0_54 = arith.constant 0 : index
    %63 = vector.load %arg12[%c2_52, %c0_53, %c0_54] : memref<3x1x128xf32, #tpu.memory_space<vmem>>, vector<1x1x128xf32>
    %64 = vector.shape_cast %63 : vector<1x1x128xf32> to vector<1x128xf32>
    %c0_55 = arith.constant 0 : index
    %c0_56 = arith.constant 0 : index
    %c0_57 = arith.constant 0 : index
    %65 = vector.load %arg10[%c0_55, %c0_56, %c0_57] : memref<3x32x128xf32, #tpu.memory_space<vmem>>, vector<1x32x128xf32>
    %66 = vector.shape_cast %65 : vector<1x32x128xf32> to vector<32x128xf32>
    %cst_58 = arith.constant dense<0.000000e+00> : vector<8x128xf32>
    %67 = tpu.matmul %50, %66, %cst_58 {dimension_numbers = #tpu.dot_dimension_numbers<[1], [0], [0], [1], [0, 0, 1, 1], [], []>} : vector<8x32xf32>, vector<32x128xf32>, vector<8x128xf32> -> vector<8x128xf32>
    %c0_59 = arith.constant 0 : index
    %c0_60 = arith.constant 0 : index
    %c0_61 = arith.constant 0 : index
    %68 = vector.load %arg12[%c0_59, %c0_60, %c0_61] : memref<3x1x128xf32, #tpu.memory_space<vmem>>, vector<1x1x128xf32>
    %69 = vector.shape_cast %68 : vector<1x1x128xf32> to vector<1x128xf32>
    %70 = vector.broadcast %69 : vector<1x128xf32> to vector<8x128xf32>
    %71 = arith.addf %67, %70 : vector<8x128xf32>
    %cst_62 = arith.constant 0.000000e+00 : f32
    %72 = vector.broadcast %cst_62 : f32 to vector<2x32xf32>
    %cst_63 = arith.constant 0.000000e+00 : f32
    %73 = vector.broadcast %cst_63 : f32 to vector<2x32xf32>
    %cst_64 = arith.constant 0.000000e+00 : f32
    %74 = vector.broadcast %cst_64 : f32 to vector<2x32xf32>
    %cst_65 = arith.constant 0.000000e+00 : f32
    %75 = vector.broadcast %cst_65 : f32 to vector<2x32xf32>
    %cst_66 = arith.constant 0.000000e+00 : f32
    %76 = vector.broadcast %cst_66 : f32 to vector<2x32xf32>
    %cst_67 = arith.constant 0.000000e+00 : f32
    %77 = vector.broadcast %cst_67 : f32 to vector<2x32xf32>
    %78 = vector.extract_strided_slice %71 {offsets = [0, 0], sizes = [2, 128], strides = [1, 1]} : vector<8x128xf32> to vector<2x128xf32>
    %cst_68 = arith.constant dense<0.000000e+00> : vector<2x128xf32>
    %79 = tpu.matmul %72, %52, %cst_68 {dimension_numbers = #tpu.dot_dimension_numbers<[1], [0], [0], [1], [0, 0, 1, 1], [], []>} : vector<2x32xf32>, vector<32x128xf32>, vector<2x128xf32> -> vector<2x128xf32>
    %80 = arith.addf %78, %79 : vector<2x128xf32>
    %81 = arith.negf %80 : vector<2x128xf32>
    %82 = math.exp %81 : vector<2x128xf32>
    %cst_69 = arith.constant 1.000000e+00 : f32
    %83 = vector.broadcast %cst_69 : f32 to vector<2x128xf32>
    %84 = arith.addf %83, %82 : vector<2x128xf32>
    %85 = arith.divf %83, %84 : vector<2x128xf32>
    %86 = math.tanh %80 : vector<2x128xf32>
    %87 = vector.extract_strided_slice %85 {offsets = [0, 0], sizes = [2, 32], strides = [1, 1]} : vector<2x128xf32> to vector<2x32xf32>
    %88 = vector.extract_strided_slice %85 {offsets = [0, 32], sizes = [2, 32], strides = [1, 1]} : vector<2x128xf32> to vector<2x32xf32>
    %89 = vector.extract_strided_slice %86 {offsets = [0, 64], sizes = [2, 32], strides = [1, 1]} : vector<2x128xf32> to vector<2x32xf32>
    %90 = vector.extract_strided_slice %85 {offsets = [0, 96], sizes = [2, 32], strides = [1, 1]} : vector<2x128xf32> to vector<2x32xf32>
    %91 = arith.mulf %88, %75 : vector<2x32xf32>
    %92 = arith.mulf %87, %89 : vector<2x32xf32>
    %93 = arith.addf %91, %92 : vector<2x32xf32>
    %94 = math.tanh %93 : vector<2x32xf32>
    %95 = arith.mulf %90, %94 : vector<2x32xf32>
    %cst_70 = arith.constant dense<0.000000e+00> : vector<2x128xf32>
    %96 = tpu.matmul %95, %54, %cst_70 {dimension_numbers = #tpu.dot_dimension_numbers<[1], [0], [0], [1], [0, 0, 1, 1], [], []>} : vector<2x32xf32>, vector<32x128xf32>, vector<2x128xf32> -> vector<2x128xf32>
    %cst_71 = arith.constant dense<0.000000e+00> : vector<2x128xf32>
    %97 = tpu.matmul %73, %58, %cst_71 {dimension_numbers = #tpu.dot_dimension_numbers<[1], [0], [0], [1], [0, 0, 1, 1], [], []>} : vector<2x32xf32>, vector<32x128xf32>, vector<2x128xf32> -> vector<2x128xf32>
    %98 = arith.addf %96, %97 : vector<2x128xf32>
    %99 = vector.broadcast %62 : vector<1x128xf32> to vector<2x128xf32>
    %100 = arith.addf %98, %99 : vector<2x128xf32>
    %101 = arith.negf %100 : vector<2x128xf32>
    %102 = math.exp %101 : vector<2x128xf32>
    %cst_72 = arith.constant 1.000000e+00 : f32
    %103 = vector.broadcast %cst_72 : f32 to vector<2x128xf32>
    %104 = arith.addf %103, %102 : vector<2x128xf32>
    %105 = arith.divf %103, %104 : vector<2x128xf32>
    %106 = math.tanh %100 : vector<2x128xf32>
    %107 = vector.extract_strided_slice %105 {offsets = [0, 0], sizes = [2, 32], strides = [1, 1]} : vector<2x128xf32> to vector<2x32xf32>
    %108 = vector.extract_strided_slice %105 {offsets = [0, 32], sizes = [2, 32], strides = [1, 1]} : vector<2x128xf32> to vector<2x32xf32>
    %109 = vector.extract_strided_slice %106 {offsets = [0, 64], sizes = [2, 32], strides = [1, 1]} : vector<2x128xf32> to vector<2x32xf32>
    %110 = vector.extract_strided_slice %105 {offsets = [0, 96], sizes = [2, 32], strides = [1, 1]} : vector<2x128xf32> to vector<2x32xf32>
    %111 = arith.mulf %108, %76 : vector<2x32xf32>
    %112 = arith.mulf %107, %109 : vector<2x32xf32>
    %113 = arith.addf %111, %112 : vector<2x32xf32>
    %114 = math.tanh %113 : vector<2x32xf32>
    %115 = arith.mulf %110, %114 : vector<2x32xf32>
    %cst_73 = arith.constant dense<0.000000e+00> : vector<2x128xf32>
    %116 = tpu.matmul %115, %56, %cst_73 {dimension_numbers = #tpu.dot_dimension_numbers<[1], [0], [0], [1], [0, 0, 1, 1], [], []>} : vector<2x32xf32>, vector<32x128xf32>, vector<2x128xf32> -> vector<2x128xf32>
    %cst_74 = arith.constant dense<0.000000e+00> : vector<2x128xf32>
    %117 = tpu.matmul %74, %60, %cst_74 {dimension_numbers = #tpu.dot_dimension_numbers<[1], [0], [0], [1], [0, 0, 1, 1], [], []>} : vector<2x32xf32>, vector<32x128xf32>, vector<2x128xf32> -> vector<2x128xf32>
    %118 = arith.addf %116, %117 : vector<2x128xf32>
    %119 = vector.broadcast %64 : vector<1x128xf32> to vector<2x128xf32>
    %120 = arith.addf %118, %119 : vector<2x128xf32>
    %121 = arith.negf %120 : vector<2x128xf32>
    %122 = math.exp %121 : vector<2x128xf32>
    %cst_75 = arith.constant 1.000000e+00 : f32
    %123 = vector.broadcast %cst_75 : f32 to vector<2x128xf32>
    %124 = arith.addf %123, %122 : vector<2x128xf32>
    %125 = arith.divf %123, %124 : vector<2x128xf32>
    %126 = math.tanh %120 : vector<2x128xf32>
    %127 = vector.extract_strided_slice %125 {offsets = [0, 0], sizes = [2, 32], strides = [1, 1]} : vector<2x128xf32> to vector<2x32xf32>
    %128 = vector.extract_strided_slice %125 {offsets = [0, 32], sizes = [2, 32], strides = [1, 1]} : vector<2x128xf32> to vector<2x32xf32>
    %129 = vector.extract_strided_slice %126 {offsets = [0, 64], sizes = [2, 32], strides = [1, 1]} : vector<2x128xf32> to vector<2x32xf32>
    %130 = vector.extract_strided_slice %125 {offsets = [0, 96], sizes = [2, 32], strides = [1, 1]} : vector<2x128xf32> to vector<2x32xf32>
    %131 = arith.mulf %128, %77 : vector<2x32xf32>
    %132 = arith.mulf %127, %129 : vector<2x32xf32>
    %133 = arith.addf %131, %132 : vector<2x32xf32>
    %134 = math.tanh %133 : vector<2x32xf32>
    %135 = arith.mulf %130, %134 : vector<2x32xf32>
    %136 = vector.extract_strided_slice %71 {offsets = [2, 0], sizes = [2, 128], strides = [1, 1]} : vector<8x128xf32> to vector<2x128xf32>
    %cst_76 = arith.constant dense<0.000000e+00> : vector<2x128xf32>
    %137 = tpu.matmul %95, %52, %cst_76 {dimension_numbers = #tpu.dot_dimension_numbers<[1], [0], [0], [1], [0, 0, 1, 1], [], []>} : vector<2x32xf32>, vector<32x128xf32>, vector<2x128xf32> -> vector<2x128xf32>
    %138 = arith.addf %136, %137 : vector<2x128xf32>
    %139 = arith.negf %138 : vector<2x128xf32>
    %140 = math.exp %139 : vector<2x128xf32>
    %cst_77 = arith.constant 1.000000e+00 : f32
    %141 = vector.broadcast %cst_77 : f32 to vector<2x128xf32>
    %142 = arith.addf %141, %140 : vector<2x128xf32>
    %143 = arith.divf %141, %142 : vector<2x128xf32>
    %144 = math.tanh %138 : vector<2x128xf32>
    %145 = vector.extract_strided_slice %143 {offsets = [0, 0], sizes = [2, 32], strides = [1, 1]} : vector<2x128xf32> to vector<2x32xf32>
    %146 = vector.extract_strided_slice %143 {offsets = [0, 32], sizes = [2, 32], strides = [1, 1]} : vector<2x128xf32> to vector<2x32xf32>
    %147 = vector.extract_strided_slice %144 {offsets = [0, 64], sizes = [2, 32], strides = [1, 1]} : vector<2x128xf32> to vector<2x32xf32>
    %148 = vector.extract_strided_slice %143 {offsets = [0, 96], sizes = [2, 32], strides = [1, 1]} : vector<2x128xf32> to vector<2x32xf32>
    %149 = arith.mulf %146, %93 : vector<2x32xf32>
    %150 = arith.mulf %145, %147 : vector<2x32xf32>
    %151 = arith.addf %149, %150 : vector<2x32xf32>
    %152 = math.tanh %151 : vector<2x32xf32>
    %153 = arith.mulf %148, %152 : vector<2x32xf32>
    %cst_78 = arith.constant dense<0.000000e+00> : vector<2x128xf32>
    %154 = tpu.matmul %153, %54, %cst_78 {dimension_numbers = #tpu.dot_dimension_numbers<[1], [0], [0], [1], [0, 0, 1, 1], [], []>} : vector<2x32xf32>, vector<32x128xf32>, vector<2x128xf32> -> vector<2x128xf32>
    %cst_79 = arith.constant dense<0.000000e+00> : vector<2x128xf32>
    %155 = tpu.matmul %115, %58, %cst_79 {dimension_numbers = #tpu.dot_dimension_numbers<[1], [0], [0], [1], [0, 0, 1, 1], [], []>} : vector<2x32xf32>, vector<32x128xf32>, vector<2x128xf32> -> vector<2x128xf32>
    %156 = arith.addf %154, %155 : vector<2x128xf32>
    %157 = vector.broadcast %62 : vector<1x128xf32> to vector<2x128xf32>
    %158 = arith.addf %156, %157 : vector<2x128xf32>
    %159 = arith.negf %158 : vector<2x128xf32>
    %160 = math.exp %159 : vector<2x128xf32>
    %cst_80 = arith.constant 1.000000e+00 : f32
    %161 = vector.broadcast %cst_80 : f32 to vector<2x128xf32>
    %162 = arith.addf %161, %160 : vector<2x128xf32>
    %163 = arith.divf %161, %162 : vector<2x128xf32>
    %164 = math.tanh %158 : vector<2x128xf32>
    %165 = vector.extract_strided_slice %163 {offsets = [0, 0], sizes = [2, 32], strides = [1, 1]} : vector<2x128xf32> to vector<2x32xf32>
    %166 = vector.extract_strided_slice %163 {offsets = [0, 32], sizes = [2, 32], strides = [1, 1]} : vector<2x128xf32> to vector<2x32xf32>
    %167 = vector.extract_strided_slice %164 {offsets = [0, 64], sizes = [2, 32], strides = [1, 1]} : vector<2x128xf32> to vector<2x32xf32>
    %168 = vector.extract_strided_slice %163 {offsets = [0, 96], sizes = [2, 32], strides = [1, 1]} : vector<2x128xf32> to vector<2x32xf32>
    %169 = arith.mulf %166, %113 : vector<2x32xf32>
    %170 = arith.mulf %165, %167 : vector<2x32xf32>
    %171 = arith.addf %169, %170 : vector<2x32xf32>
    %172 = math.tanh %171 : vector<2x32xf32>
    %173 = arith.mulf %168, %172 : vector<2x32xf32>
    %cst_81 = arith.constant dense<0.000000e+00> : vector<2x128xf32>
    %174 = tpu.matmul %173, %56, %cst_81 {dimension_numbers = #tpu.dot_dimension_numbers<[1], [0], [0], [1], [0, 0, 1, 1], [], []>} : vector<2x32xf32>, vector<32x128xf32>, vector<2x128xf32> -> vector<2x128xf32>
    %cst_82 = arith.constant dense<0.000000e+00> : vector<2x128xf32>
    %175 = tpu.matmul %135, %60, %cst_82 {dimension_numbers = #tpu.dot_dimension_numbers<[1], [0], [0], [1], [0, 0, 1, 1], [], []>} : vector<2x32xf32>, vector<32x128xf32>, vector<2x128xf32> -> vector<2x128xf32>
    %176 = arith.addf %174, %175 : vector<2x128xf32>
    %177 = vector.broadcast %64 : vector<1x128xf32> to vector<2x128xf32>
    %178 = arith.addf %176, %177 : vector<2x128xf32>
    %179 = arith.negf %178 : vector<2x128xf32>
    %180 = math.exp %179 : vector<2x128xf32>
    %cst_83 = arith.constant 1.000000e+00 : f32
    %181 = vector.broadcast %cst_83 : f32 to vector<2x128xf32>
    %182 = arith.addf %181, %180 : vector<2x128xf32>
    %183 = arith.divf %181, %182 : vector<2x128xf32>
    %184 = math.tanh %178 : vector<2x128xf32>
    %185 = vector.extract_strided_slice %183 {offsets = [0, 0], sizes = [2, 32], strides = [1, 1]} : vector<2x128xf32> to vector<2x32xf32>
    %186 = vector.extract_strided_slice %183 {offsets = [0, 32], sizes = [2, 32], strides = [1, 1]} : vector<2x128xf32> to vector<2x32xf32>
    %187 = vector.extract_strided_slice %184 {offsets = [0, 64], sizes = [2, 32], strides = [1, 1]} : vector<2x128xf32> to vector<2x32xf32>
    %188 = vector.extract_strided_slice %183 {offsets = [0, 96], sizes = [2, 32], strides = [1, 1]} : vector<2x128xf32> to vector<2x32xf32>
    %189 = arith.mulf %186, %133 : vector<2x32xf32>
    %190 = arith.mulf %185, %187 : vector<2x32xf32>
    %191 = arith.addf %189, %190 : vector<2x32xf32>
    %192 = math.tanh %191 : vector<2x32xf32>
    %193 = arith.mulf %188, %192 : vector<2x32xf32>
    %194 = vector.extract_strided_slice %71 {offsets = [4, 0], sizes = [2, 128], strides = [1, 1]} : vector<8x128xf32> to vector<2x128xf32>
    %cst_84 = arith.constant dense<0.000000e+00> : vector<2x128xf32>
    %195 = tpu.matmul %153, %52, %cst_84 {dimension_numbers = #tpu.dot_dimension_numbers<[1], [0], [0], [1], [0, 0, 1, 1], [], []>} : vector<2x32xf32>, vector<32x128xf32>, vector<2x128xf32> -> vector<2x128xf32>
    %196 = arith.addf %194, %195 : vector<2x128xf32>
    %197 = arith.negf %196 : vector<2x128xf32>
    %198 = math.exp %197 : vector<2x128xf32>
    %cst_85 = arith.constant 1.000000e+00 : f32
    %199 = vector.broadcast %cst_85 : f32 to vector<2x128xf32>
    %200 = arith.addf %199, %198 : vector<2x128xf32>
    %201 = arith.divf %199, %200 : vector<2x128xf32>
    %202 = math.tanh %196 : vector<2x128xf32>
    %203 = vector.extract_strided_slice %201 {offsets = [0, 0], sizes = [2, 32], strides = [1, 1]} : vector<2x128xf32> to vector<2x32xf32>
    %204 = vector.extract_strided_slice %201 {offsets = [0, 32], sizes = [2, 32], strides = [1, 1]} : vector<2x128xf32> to vector<2x32xf32>
    %205 = vector.extract_strided_slice %202 {offsets = [0, 64], sizes = [2, 32], strides = [1, 1]} : vector<2x128xf32> to vector<2x32xf32>
    %206 = vector.extract_strided_slice %201 {offsets = [0, 96], sizes = [2, 32], strides = [1, 1]} : vector<2x128xf32> to vector<2x32xf32>
    %207 = arith.mulf %204, %151 : vector<2x32xf32>
    %208 = arith.mulf %203, %205 : vector<2x32xf32>
    %209 = arith.addf %207, %208 : vector<2x32xf32>
    %210 = math.tanh %209 : vector<2x32xf32>
    %211 = arith.mulf %206, %210 : vector<2x32xf32>
    %cst_86 = arith.constant dense<0.000000e+00> : vector<2x128xf32>
    %212 = tpu.matmul %211, %54, %cst_86 {dimension_numbers = #tpu.dot_dimension_numbers<[1], [0], [0], [1], [0, 0, 1, 1], [], []>} : vector<2x32xf32>, vector<32x128xf32>, vector<2x128xf32> -> vector<2x128xf32>
    %cst_87 = arith.constant dense<0.000000e+00> : vector<2x128xf32>
    %213 = tpu.matmul %173, %58, %cst_87 {dimension_numbers = #tpu.dot_dimension_numbers<[1], [0], [0], [1], [0, 0, 1, 1], [], []>} : vector<2x32xf32>, vector<32x128xf32>, vector<2x128xf32> -> vector<2x128xf32>
    %214 = arith.addf %212, %213 : vector<2x128xf32>
    %215 = vector.broadcast %62 : vector<1x128xf32> to vector<2x128xf32>
    %216 = arith.addf %214, %215 : vector<2x128xf32>
    %217 = arith.negf %216 : vector<2x128xf32>
    %218 = math.exp %217 : vector<2x128xf32>
    %cst_88 = arith.constant 1.000000e+00 : f32
    %219 = vector.broadcast %cst_88 : f32 to vector<2x128xf32>
    %220 = arith.addf %219, %218 : vector<2x128xf32>
    %221 = arith.divf %219, %220 : vector<2x128xf32>
    %222 = math.tanh %216 : vector<2x128xf32>
    %223 = vector.extract_strided_slice %221 {offsets = [0, 0], sizes = [2, 32], strides = [1, 1]} : vector<2x128xf32> to vector<2x32xf32>
    %224 = vector.extract_strided_slice %221 {offsets = [0, 32], sizes = [2, 32], strides = [1, 1]} : vector<2x128xf32> to vector<2x32xf32>
    %225 = vector.extract_strided_slice %222 {offsets = [0, 64], sizes = [2, 32], strides = [1, 1]} : vector<2x128xf32> to vector<2x32xf32>
    %226 = vector.extract_strided_slice %221 {offsets = [0, 96], sizes = [2, 32], strides = [1, 1]} : vector<2x128xf32> to vector<2x32xf32>
    %227 = arith.mulf %224, %171 : vector<2x32xf32>
    %228 = arith.mulf %223, %225 : vector<2x32xf32>
    %229 = arith.addf %227, %228 : vector<2x32xf32>
    %230 = math.tanh %229 : vector<2x32xf32>
    %231 = arith.mulf %226, %230 : vector<2x32xf32>
    %cst_89 = arith.constant dense<0.000000e+00> : vector<2x128xf32>
    %232 = tpu.matmul %231, %56, %cst_89 {dimension_numbers = #tpu.dot_dimension_numbers<[1], [0], [0], [1], [0, 0, 1, 1], [], []>} : vector<2x32xf32>, vector<32x128xf32>, vector<2x128xf32> -> vector<2x128xf32>
    %cst_90 = arith.constant dense<0.000000e+00> : vector<2x128xf32>
    %233 = tpu.matmul %193, %60, %cst_90 {dimension_numbers = #tpu.dot_dimension_numbers<[1], [0], [0], [1], [0, 0, 1, 1], [], []>} : vector<2x32xf32>, vector<32x128xf32>, vector<2x128xf32> -> vector<2x128xf32>
    %234 = arith.addf %232, %233 : vector<2x128xf32>
    %235 = vector.broadcast %64 : vector<1x128xf32> to vector<2x128xf32>
    %236 = arith.addf %234, %235 : vector<2x128xf32>
    %237 = arith.negf %236 : vector<2x128xf32>
    %238 = math.exp %237 : vector<2x128xf32>
    %cst_91 = arith.constant 1.000000e+00 : f32
    %239 = vector.broadcast %cst_91 : f32 to vector<2x128xf32>
    %240 = arith.addf %239, %238 : vector<2x128xf32>
    %241 = arith.divf %239, %240 : vector<2x128xf32>
    %242 = math.tanh %236 : vector<2x128xf32>
    %243 = vector.extract_strided_slice %241 {offsets = [0, 0], sizes = [2, 32], strides = [1, 1]} : vector<2x128xf32> to vector<2x32xf32>
    %244 = vector.extract_strided_slice %241 {offsets = [0, 32], sizes = [2, 32], strides = [1, 1]} : vector<2x128xf32> to vector<2x32xf32>
    %245 = vector.extract_strided_slice %242 {offsets = [0, 64], sizes = [2, 32], strides = [1, 1]} : vector<2x128xf32> to vector<2x32xf32>
    %246 = vector.extract_strided_slice %241 {offsets = [0, 96], sizes = [2, 32], strides = [1, 1]} : vector<2x128xf32> to vector<2x32xf32>
    %247 = arith.mulf %244, %191 : vector<2x32xf32>
    %248 = arith.mulf %243, %245 : vector<2x32xf32>
    %249 = arith.addf %247, %248 : vector<2x32xf32>
    %250 = math.tanh %249 : vector<2x32xf32>
    %251 = arith.mulf %246, %250 : vector<2x32xf32>
    %252 = vector.extract_strided_slice %71 {offsets = [6, 0], sizes = [2, 128], strides = [1, 1]} : vector<8x128xf32> to vector<2x128xf32>
    %cst_92 = arith.constant dense<0.000000e+00> : vector<2x128xf32>
    %253 = tpu.matmul %211, %52, %cst_92 {dimension_numbers = #tpu.dot_dimension_numbers<[1], [0], [0], [1], [0, 0, 1, 1], [], []>} : vector<2x32xf32>, vector<32x128xf32>, vector<2x128xf32> -> vector<2x128xf32>
    %254 = arith.addf %252, %253 : vector<2x128xf32>
    %255 = arith.negf %254 : vector<2x128xf32>
    %256 = math.exp %255 : vector<2x128xf32>
    %cst_93 = arith.constant 1.000000e+00 : f32
    %257 = vector.broadcast %cst_93 : f32 to vector<2x128xf32>
    %258 = arith.addf %257, %256 : vector<2x128xf32>
    %259 = arith.divf %257, %258 : vector<2x128xf32>
    %260 = math.tanh %254 : vector<2x128xf32>
    %261 = vector.extract_strided_slice %259 {offsets = [0, 0], sizes = [2, 32], strides = [1, 1]} : vector<2x128xf32> to vector<2x32xf32>
    %262 = vector.extract_strided_slice %259 {offsets = [0, 32], sizes = [2, 32], strides = [1, 1]} : vector<2x128xf32> to vector<2x32xf32>
    %263 = vector.extract_strided_slice %260 {offsets = [0, 64], sizes = [2, 32], strides = [1, 1]} : vector<2x128xf32> to vector<2x32xf32>
    %264 = vector.extract_strided_slice %259 {offsets = [0, 96], sizes = [2, 32], strides = [1, 1]} : vector<2x128xf32> to vector<2x32xf32>
    %265 = arith.mulf %262, %209 : vector<2x32xf32>
    %266 = arith.mulf %261, %263 : vector<2x32xf32>
    %267 = arith.addf %265, %266 : vector<2x32xf32>
    %268 = math.tanh %267 : vector<2x32xf32>
    %269 = arith.mulf %264, %268 : vector<2x32xf32>
    %cst_94 = arith.constant dense<0.000000e+00> : vector<2x128xf32>
    %270 = tpu.matmul %269, %54, %cst_94 {dimension_numbers = #tpu.dot_dimension_numbers<[1], [0], [0], [1], [0, 0, 1, 1], [], []>} : vector<2x32xf32>, vector<32x128xf32>, vector<2x128xf32> -> vector<2x128xf32>
    %cst_95 = arith.constant dense<0.000000e+00> : vector<2x128xf32>
    %271 = tpu.matmul %231, %58, %cst_95 {dimension_numbers = #tpu.dot_dimension_numbers<[1], [0], [0], [1], [0, 0, 1, 1], [], []>} : vector<2x32xf32>, vector<32x128xf32>, vector<2x128xf32> -> vector<2x128xf32>
    %272 = arith.addf %270, %271 : vector<2x128xf32>
    %273 = vector.broadcast %62 : vector<1x128xf32> to vector<2x128xf32>
    %274 = arith.addf %272, %273 : vector<2x128xf32>
    %275 = arith.negf %274 : vector<2x128xf32>
    %276 = math.exp %275 : vector<2x128xf32>
    %cst_96 = arith.constant 1.000000e+00 : f32
    %277 = vector.broadcast %cst_96 : f32 to vector<2x128xf32>
    %278 = arith.addf %277, %276 : vector<2x128xf32>
    %279 = arith.divf %277, %278 : vector<2x128xf32>
    %280 = math.tanh %274 : vector<2x128xf32>
    %281 = vector.extract_strided_slice %279 {offsets = [0, 0], sizes = [2, 32], strides = [1, 1]} : vector<2x128xf32> to vector<2x32xf32>
    %282 = vector.extract_strided_slice %279 {offsets = [0, 32], sizes = [2, 32], strides = [1, 1]} : vector<2x128xf32> to vector<2x32xf32>
    %283 = vector.extract_strided_slice %280 {offsets = [0, 64], sizes = [2, 32], strides = [1, 1]} : vector<2x128xf32> to vector<2x32xf32>
    %284 = vector.extract_strided_slice %279 {offsets = [0, 96], sizes = [2, 32], strides = [1, 1]} : vector<2x128xf32> to vector<2x32xf32>
    %285 = arith.mulf %282, %229 : vector<2x32xf32>
    %286 = arith.mulf %281, %283 : vector<2x32xf32>
    %287 = arith.addf %285, %286 : vector<2x32xf32>
    %288 = math.tanh %287 : vector<2x32xf32>
    %289 = arith.mulf %284, %288 : vector<2x32xf32>
    %cst_97 = arith.constant dense<0.000000e+00> : vector<2x128xf32>
    %290 = tpu.matmul %289, %56, %cst_97 {dimension_numbers = #tpu.dot_dimension_numbers<[1], [0], [0], [1], [0, 0, 1, 1], [], []>} : vector<2x32xf32>, vector<32x128xf32>, vector<2x128xf32> -> vector<2x128xf32>
    %cst_98 = arith.constant dense<0.000000e+00> : vector<2x128xf32>
    %291 = tpu.matmul %251, %60, %cst_98 {dimension_numbers = #tpu.dot_dimension_numbers<[1], [0], [0], [1], [0, 0, 1, 1], [], []>} : vector<2x32xf32>, vector<32x128xf32>, vector<2x128xf32> -> vector<2x128xf32>
    %292 = arith.addf %290, %291 : vector<2x128xf32>
    %293 = vector.broadcast %64 : vector<1x128xf32> to vector<2x128xf32>
    %294 = arith.addf %292, %293 : vector<2x128xf32>
    %295 = arith.negf %294 : vector<2x128xf32>
    %296 = math.exp %295 : vector<2x128xf32>
    %cst_99 = arith.constant 1.000000e+00 : f32
    %297 = vector.broadcast %cst_99 : f32 to vector<2x128xf32>
    %298 = arith.addf %297, %296 : vector<2x128xf32>
    %299 = arith.divf %297, %298 : vector<2x128xf32>
    %300 = math.tanh %294 : vector<2x128xf32>
    %301 = vector.extract_strided_slice %299 {offsets = [0, 0], sizes = [2, 32], strides = [1, 1]} : vector<2x128xf32> to vector<2x32xf32>
    %302 = vector.extract_strided_slice %299 {offsets = [0, 32], sizes = [2, 32], strides = [1, 1]} : vector<2x128xf32> to vector<2x32xf32>
    %303 = vector.extract_strided_slice %300 {offsets = [0, 64], sizes = [2, 32], strides = [1, 1]} : vector<2x128xf32> to vector<2x32xf32>
    %304 = vector.extract_strided_slice %299 {offsets = [0, 96], sizes = [2, 32], strides = [1, 1]} : vector<2x128xf32> to vector<2x32xf32>
    %305 = arith.mulf %302, %249 : vector<2x32xf32>
    %306 = arith.mulf %301, %303 : vector<2x32xf32>
    %307 = arith.addf %305, %306 : vector<2x32xf32>
    %308 = math.tanh %307 : vector<2x32xf32>
    %309 = arith.mulf %304, %308 : vector<2x32xf32>
    %c0_100 = arith.constant 0 : index
    %c0_101 = arith.constant 0 : index
    %310 = vector.load %arg13[%c0_100, %c0_101] : memref<32x32xf32, #tpu.memory_space<vmem>>, vector<32x32xf32>
    %cst_102 = arith.constant dense<0.000000e+00> : vector<2x32xf32>
    %311 = tpu.matmul %309, %310, %cst_102 {dimension_numbers = #tpu.dot_dimension_numbers<[1], [0], [0], [1], [0, 0, 1, 1], [], []>} : vector<2x32xf32>, vector<32x32xf32>, vector<2x32xf32> -> vector<2x32xf32>
    %c0_103 = arith.constant 0 : index
    %c0_104 = arith.constant 0 : index
    %312 = vector.load %arg14[%c0_103, %c0_104] : memref<1x32xf32, #tpu.memory_space<vmem>>, vector<1x32xf32>
    %313 = vector.broadcast %312 : vector<1x32xf32> to vector<2x32xf32>
    %314 = arith.addf %311, %313 : vector<2x32xf32>
    %cst_105 = arith.constant 0.000000e+00 : f32
    %315 = vector.broadcast %cst_105 : f32 to vector<2x32xf32>
    %316 = arith.maximumf %314, %315 : vector<2x32xf32>
    %c0_106 = arith.constant 0 : index
    %c0_107 = arith.constant 0 : index
    %317 = vector.load %arg15[%c0_106, %c0_107] : memref<32x128xf32, #tpu.memory_space<vmem>>, vector<32x128xf32>
    %cst_108 = arith.constant dense<0.000000e+00> : vector<2x128xf32>
    %318 = tpu.matmul %316, %317, %cst_108 {dimension_numbers = #tpu.dot_dimension_numbers<[1], [0], [0], [1], [0, 0, 1, 1], [], []>} : vector<2x32xf32>, vector<32x128xf32>, vector<2x128xf32> -> vector<2x128xf32>
    %c0_109 = arith.constant 0 : index
    %c0_110 = arith.constant 0 : index
    %319 = vector.load %arg16[%c0_109, %c0_110] : memref<1x128xf32, #tpu.memory_space<vmem>>, vector<1x128xf32>
    %320 = vector.broadcast %319 : vector<1x128xf32> to vector<2x128xf32>
    %321 = arith.addf %318, %320 : vector<2x128xf32>
    %c0_111 = arith.constant 0 : index
    %c0_112 = arith.constant 0 : index
    %322 = vector.load %arg17[%c0_111, %c0_112] : memref<2x128xf32, #tpu.memory_space<vmem>>, vector<2x128xf32>
    tpu.vector_store %arg17[%c0_111, %c0_112], %321 {strides = array<i32>} : memref<2x128xf32, #tpu.memory_space<vmem>>, vector<2x128xf32>,
    return
  }
}

</mosaic_0001>

<llo_original>
// kernel: predictor_forward.1
$region0: #{predictor_forward.1}
  #allocation0 [shape = 'u32[]', space=smem, size = 0x4, offset = 0x4, fixed_abs, tag = 'smem constant byte address 0x4 - core index']
  #allocation1 [shape = 'u32[144,128]{1,0:T(1,128)}', space=vmem, size = 0x12000, scoped, tag = 'internal scratch']
  %s0 = inlined_call_operand.vmem [shape: f32[8,3,256], index: 0, kind: input, shape index: {}]
  %s1 = inlined_call_operand.vmem [shape: f32[8,8], index: 1, kind: input, shape index: {}]
  %s2 = inlined_call_operand.vmem [shape: f32[1,64,3], index: 2, kind: input, shape index: {}]
  %s3 = inlined_call_operand.vmem [shape: f32[1,64,1], index: 3, kind: input, shape index: {}]
  %s4 = inlined_call_operand.vmem [shape: f32[64,64], index: 4, kind: input, shape index: {}]
  %s5 = inlined_call_operand.vmem [shape: f32[1,64], index: 5, kind: input, shape index: {}]
  %s6 = inlined_call_operand.vmem [shape: f32[64,48], index: 6, kind: input, shape index: {}]
  %s7 = inlined_call_operand.vmem [shape: f32[1,48], index: 7, kind: input, shape index: {}]
  %s8 = inlined_call_operand.vmem [shape: f32[48,32], index: 8, kind: input, shape index: {}]
  %s9 = inlined_call_operand.vmem [shape: f32[1,32], index: 9, kind: input, shape index: {}]
  %s10 = inlined_call_operand.vmem [shape: f32[3,32,128], index: 10, kind: input, shape index: {}]
  %s11 = inlined_call_operand.vmem [shape: f32[3,32,128], index: 11, kind: input, shape index: {}]
  %s12 = inlined_call_operand.vmem [shape: f32[3,1,128], index: 12, kind: input, shape index: {}]
  %s13 = inlined_call_operand.vmem [shape: f32[32,32], index: 13, kind: input, shape index: {}]
  %s14 = inlined_call_operand.vmem [shape: f32[1,32], index: 14, kind: input, shape index: {}]
  %s15 = inlined_call_operand.vmem [shape: f32[32,128], index: 15, kind: input, shape index: {}]
  %s16 = inlined_call_operand.vmem [shape: f32[1,128], index: 16, kind: input, shape index: {}]
  %s17 = inlined_call_operand.vmem [shape: f32[2,128], index: 17, kind: output, shape index: {}]
  %s18 = sld [smem:[#allocation0]]
  $region78: #{predictor_forward.1} parent=0
    _
  %s20 = ssub.s32 1, %s18
  %s21 = scalar_select 0, %s20, %s18
  // Predicated region
  $region2: #{predictor_forward.1} parent=0 // pred_check
    _
  $region3: #{predictor_forward.1} parent=0 // pred_check_branch
    %23 = sbr.rel (0) target = $region5
  $region4: #{predictor_forward.1} parent=0 // pred_region
    _
  $region5: #{predictor_forward.1} parent=0 // pred_fallthru
    _
  // Predicated region
  $region6: #{predictor_forward.1} parent=0 // pred_check
    _
  $region7: #{predictor_forward.1} parent=0 // pred_check_branch
    %25 = sbr.rel (0) target = $region9
  $region8: #{predictor_forward.1} parent=0 // pred_region
    _
  $region9: #{predictor_forward.1} parent=0 // pred_fallthru
    _
  // Predicated region
  $region10: #{predictor_forward.1} parent=0 // pred_check
    _
  $region11: #{predictor_forward.1} parent=0 // pred_check_branch
    %27 = sbr.rel (0) target = $region13
  $region12: #{predictor_forward.1} parent=0 // pred_region
    _
  $region13: #{predictor_forward.1} parent=0 // pred_fallthru
    _
  // Predicated region
  $region14: #{predictor_forward.1} parent=0 // pred_check
    _
  $region15: #{predictor_forward.1} parent=0 // pred_check_branch
    %29 = sbr.rel (0) target = $region17
  $region16: #{predictor_forward.1} parent=0 // pred_region
    _
  $region17: #{predictor_forward.1} parent=0 // pred_fallthru
    _
  // Predicated region
  $region18: #{predictor_forward.1} parent=0 // pred_check
    _
  $region19: #{predictor_forward.1} parent=0 // pred_check_branch
    %31 = sbr.rel (0) target = $region21
  $region20: #{predictor_forward.1} parent=0 // pred_region
    _
  $region21: #{predictor_forward.1} parent=0 // pred_fallthru
    _
  // Predicated region
  $region22: #{predictor_forward.1} parent=0 // pred_check
    _
  $region23: #{predictor_forward.1} parent=0 // pred_check_branch
    %33 = sbr.rel (0) target = $region25
  $region24: #{predictor_forward.1} parent=0 // pred_region
    _
  $region25: #{predictor_forward.1} parent=0 // pred_fallthru
    _
  // Predicated region
  $region26: #{predictor_forward.1} parent=0 // pred_check
    _
  $region27: #{predictor_forward.1} parent=0 // pred_check_branch
    %35 = sbr.rel (0) target = $region29
  $region28: #{predictor_forward.1} parent=0 // pred_region
    _
  $region29: #{predictor_forward.1} parent=0 // pred_fallthru
    _
  // Predicated region
  $region30: #{predictor_forward.1} parent=0 // pred_check
    _
  $region31: #{predictor_forward.1} parent=0 // pred_check_branch
    %37 = sbr.rel (0) target = $region33
  $region32: #{predictor_forward.1} parent=0 // pred_region
    _
  $region33: #{predictor_forward.1} parent=0 // pred_fallthru
    _
  // Predicated region
  $region34: #{predictor_forward.1} parent=0 // pred_check
    _
  $region35: #{predictor_forward.1} parent=0 // pred_check_branch
    %39 = sbr.rel (0) target = $region37
  $region36: #{predictor_forward.1} parent=0 // pred_region
    _
  $region37: #{predictor_forward.1} parent=0 // pred_fallthru
    _
  // Predicated region
  $region38: #{predictor_forward.1} parent=0 // pred_check
    _
  $region39: #{predictor_forward.1} parent=0 // pred_check_branch
    %41 = sbr.rel (0) target = $region41
  $region40: #{predictor_forward.1} parent=0 // pred_region
    _
  $region41: #{predictor_forward.1} parent=0 // pred_fallthru
    _
  // Predicated region
  $region42: #{predictor_forward.1} parent=0 // pred_check
    _
  $region43: #{predictor_forward.1} parent=0 // pred_check_branch
    %43 = sbr.rel (0) target = $region45
  $region44: #{predictor_forward.1} parent=0 // pred_region
    _
  $region45: #{predictor_forward.1} parent=0 // pred_fallthru
    _
  // Predicated region
  $region46: #{predictor_forward.1} parent=0 // pred_check
    _
  $region47: #{predictor_forward.1} parent=0 // pred_check_branch
    %45 = sbr.rel (0) target = $region49
  $region48: #{predictor_forward.1} parent=0 // pred_region
    _
  $region49: #{predictor_forward.1} parent=0 // pred_fallthru
    _
  // Predicated region
  $region50: #{predictor_forward.1} parent=0 // pred_check
    _
  $region51: #{predictor_forward.1} parent=0 // pred_check_branch
    %47 = sbr.rel (0) target = $region53
  $region52: #{predictor_forward.1} parent=0 // pred_region
    _
  $region53: #{predictor_forward.1} parent=0 // pred_fallthru
    _
  // Predicated region
  $region54: #{predictor_forward.1} parent=0 // pred_check
    _
  $region55: #{predictor_forward.1} parent=0 // pred_check_branch
    %49 = sbr.rel (0) target = $region57
  $region56: #{predictor_forward.1} parent=0 // pred_region
    _
  $region57: #{predictor_forward.1} parent=0 // pred_fallthru
    _
  // Predicated region
  $region58: #{predictor_forward.1} parent=0 // pred_check
    _
  $region59: #{predictor_forward.1} parent=0 // pred_check_branch
    %51 = sbr.rel (0) target = $region61
  $region60: #{predictor_forward.1} parent=0 // pred_region
    _
  $region61: #{predictor_forward.1} parent=0 // pred_fallthru
    _
  // Predicated region
  $region62: #{predictor_forward.1} parent=0 // pred_check
    _
  $region63: #{predictor_forward.1} parent=0 // pred_check_branch
    %53 = sbr.rel (0) target = $region65
  $region64: #{predictor_forward.1} parent=0 // pred_region
    _
  $region65: #{predictor_forward.1} parent=0 // pred_fallthru
    _
  // Predicated region
  $region66: #{predictor_forward.1} parent=0 // pred_check
    _
  $region67: #{predictor_forward.1} parent=0 // pred_check_branch
    %55 = sbr.rel (0) target = $region69
  $region68: #{predictor_forward.1} parent=0 // pred_region
    _
  $region69: #{predictor_forward.1} parent=0 // pred_fallthru
    _
  %v56 = vld [vmem:[%s0] sm:$0x77]
  %v57 = vld [vmem:[%s0 + $0x8] sm:$0x77]
  %v58 = vld [vmem:[%s0 + $0x10] sm:$0x77]
  %v59 = vld [vmem:[%s0 + $0x18] sm:$0x77]
  %v60 = vld [vmem:[%s0 + $0x20] sm:$0x77]
  %v61 = vld [vmem:[%s0 + $0x28] sm:$0x77]
  %v62 = vld [vmem:[%s0 + $0x30] sm:$0x77]
  %v63 = vld [vmem:[%s0 + $0x38] sm:$0x77]
  %v64 = vld [vmem:[%s3] sm:$0xff]
  %v65 = vld [vmem:[%s3 + $0x8] sm:$0xff]
  %v66 = vld [vmem:[%s3 + $0x10] sm:$0xff]
  %v67 = vld [vmem:[%s3 + $0x18] sm:$0xff]
  %v68 = vld [vmem:[%s3 + $0x20] sm:$0xff]
  %v69 = vld [vmem:[%s3 + $0x28] sm:$0xff]
  %v70 = vld [vmem:[%s3 + $0x30] sm:$0xff]
  %v71 = vld [vmem:[%s3 + $0x38] sm:$0xff]
  %73 = vset.pattern.permute.xlu0 0
  %74 = vperm.xlu0 %73, %v64
  %v75 = vpop.permute.xlu0 %74
  %78 = vset.pattern.permute.xlu0 0
  %79 = vperm.xlu0 %78, %v65
  %v80 = vpop.permute.xlu0 %79
  %83 = vset.pattern.permute.xlu0 0
  %84 = vperm.xlu0 %83, %v66
  %v85 = vpop.permute.xlu0 %84
  %88 = vset.pattern.permute.xlu0 0
  %89 = vperm.xlu0 %88, %v67
  %v90 = vpop.permute.xlu0 %89
  %93 = vset.pattern.permute.xlu0 0
  %94 = vperm.xlu0 %93, %v68
  %v95 = vpop.permute.xlu0 %94
  %98 = vset.pattern.permute.xlu0 0
  %99 = vperm.xlu0 %98, %v69
  %v100 = vpop.permute.xlu0 %99
  %103 = vset.pattern.permute.xlu0 0
  %104 = vperm.xlu0 %103, %v70
  %v105 = vpop.permute.xlu0 %104
  %108 = vset.pattern.permute.xlu0 0
  %109 = vperm.xlu0 %108, %v71
  %v110 = vpop.permute.xlu0 %109
  %v112 = vld [vmem:[%s2] sm:$0xff]
  %v113 = vld [vmem:[%s2 + $0x8] sm:$0xff]
  %v114 = vld [vmem:[%s2 + $0x10] sm:$0xff]
  %v115 = vld [vmem:[%s2 + $0x18] sm:$0xff]
  %v116 = vld [vmem:[%s2 + $0x20] sm:$0xff]
  %v117 = vld [vmem:[%s2 + $0x28] sm:$0xff]
  %v118 = vld [vmem:[%s2 + $0x30] sm:$0xff]
  %v119 = vld [vmem:[%s2 + $0x38] sm:$0xff]
  %121 = vset.pattern.permute.xlu0 0
  %122 = vperm.xlu0 %121, %v112
  %v123 = vpop.permute.xlu0 %122
  %126 = vset.pattern.permute.xlu0 0
  %127 = vperm.xlu0 %126, %v113
  %v128 = vpop.permute.xlu0 %127
  %131 = vset.pattern.permute.xlu0 0
  %132 = vperm.xlu0 %131, %v114
  %v133 = vpop.permute.xlu0 %132
  %136 = vset.pattern.permute.xlu0 0
  %137 = vperm.xlu0 %136, %v115
  %v138 = vpop.permute.xlu0 %137
  %141 = vset.pattern.permute.xlu0 0
  %142 = vperm.xlu0 %141, %v116
  %v143 = vpop.permute.xlu0 %142
  %146 = vset.pattern.permute.xlu0 0
  %147 = vperm.xlu0 %146, %v117
  %v148 = vpop.permute.xlu0 %147
  %151 = vset.pattern.permute.xlu0 0
  %152 = vperm.xlu0 %151, %v118
  %v153 = vpop.permute.xlu0 %152
  %156 = vset.pattern.permute.xlu0 0
  %157 = vperm.xlu0 %156, %v119
  %v158 = vpop.permute.xlu0 %157
  %v168 = vlaneseq
  %v169 = vshrl.u32 %v168, 7
  %v170 = vsub.s32 0, %v169
  %v171 = vrot.slane %v56, %v170
  %v172 = vlaneseq
  %v173 = vshrl.u32 %v172, 7
  %v174 = vsub.s32 4, %v173
  %v175 = vrot.slane %v56, %v174
  %v176 = vlaneseq
  %v177 = vshrl.u32 %v176, 7
  %v178 = vsub.s32 0, %v177
  %v179 = vrot.slane %v57, %v178
  %v180 = vlaneseq
  %v181 = vshrl.u32 %v180, 7
  %v182 = vsub.s32 4, %v181
  %v183 = vrot.slane %v57, %v182
  %v184 = vlaneseq
  %v185 = vshrl.u32 %v184, 7
  %v186 = vsub.s32 0, %v185
  %v187 = vrot.slane %v58, %v186
  %v188 = vlaneseq
  %v189 = vshrl.u32 %v188, 7
  %v190 = vsub.s32 4, %v189
  %v191 = vrot.slane %v58, %v190
  %v192 = vlaneseq
  %v193 = vshrl.u32 %v192, 7
  %v194 = vsub.s32 0, %v193
  %v195 = vrot.slane %v59, %v194
  %v196 = vlaneseq
  %v197 = vshrl.u32 %v196, 7
  %v198 = vsub.s32 4, %v197
  %v199 = vrot.slane %v59, %v198
  %v200 = vlaneseq
  %v201 = vshrl.u32 %v200, 7
  %v202 = vsub.s32 0, %v201
  %v203 = vrot.slane %v60, %v202
  %v204 = vlaneseq
  %v205 = vshrl.u32 %v204, 7
  %v206 = vsub.s32 4, %v205
  %v207 = vrot.slane %v60, %v206
  %v208 = vlaneseq
  %v209 = vshrl.u32 %v208, 7
  %v210 = vsub.s32 0, %v209
  %v211 = vrot.slane %v61, %v210
  %v212 = vlaneseq
  %v213 = vshrl.u32 %v212, 7
  %v214 = vsub.s32 4, %v213
  %v215 = vrot.slane %v61, %v214
  %v216 = vlaneseq
  %v217 = vshrl.u32 %v216, 7
  %v218 = vsub.s32 0, %v217
  %v219 = vrot.slane %v62, %v218
  %v220 = vlaneseq
  %v221 = vshrl.u32 %v220, 7
  %v222 = vsub.s32 4, %v221
  %v223 = vrot.slane %v62, %v222
  %v224 = vlaneseq
  %v225 = vshrl.u32 %v224, 7
  %v226 = vsub.s32 0, %v225
  %v227 = vrot.slane %v63, %v226
  %v228 = vlaneseq
  %v229 = vshrl.u32 %v228, 7
  %v230 = vsub.s32 4, %v229
  %v231 = vrot.slane %v63, %v230
  %v248 = vlaneseq
  %v249 = vshrl.u32 %v248, 7
  %v250 = vsub.s32 0, %v249
  %v251 = vrot.slane %v171, %v250
  %v252 = vlaneseq
  %v253 = vshrl.u32 %v252, 7
  %v254 = vsub.s32 0, %v253
  %v255 = vrot.slane %v175, %v254
  %v256 = vlaneseq
  %v257 = vshrl.u32 %v256, 7
  %v258 = vsub.s32 0, %v257
  %v259 = vrot.slane %v179, %v258
  %v260 = vlaneseq
  %v261 = vshrl.u32 %v260, 7
  %v262 = vsub.s32 0, %v261
  %v263 = vrot.slane %v183, %v262
  %v264 = vlaneseq
  %v265 = vshrl.u32 %v264, 7
  %v266 = vsub.s32 0, %v265
  %v267 = vrot.slane %v187, %v266
  %v268 = vlaneseq
  %v269 = vshrl.u32 %v268, 7
  %v270 = vsub.s32 0, %v269
  %v271 = vrot.slane %v191, %v270
  %v272 = vlaneseq
  %v273 = vshrl.u32 %v272, 7
  %v274 = vsub.s32 0, %v273
  %v275 = vrot.slane %v195, %v274
  %v276 = vlaneseq
  %v277 = vshrl.u32 %v276, 7
  %v278 = vsub.s32 0, %v277
  %v279 = vrot.slane %v199, %v278
  %v280 = vlaneseq
  %v281 = vshrl.u32 %v280, 7
  %v282 = vsub.s32 0, %v281
  %v283 = vrot.slane %v203, %v282
  %v284 = vlaneseq
  %v285 = vshrl.u32 %v284, 7
  %v286 = vsub.s32 0, %v285
  %v287 = vrot.slane %v207, %v286
  %v288 = vlaneseq
  %v289 = vshrl.u32 %v288, 7
  %v290 = vsub.s32 0, %v289
  %v291 = vrot.slane %v211, %v290
  %v292 = vlaneseq
  %v293 = vshrl.u32 %v292, 7
  %v294 = vsub.s32 0, %v293
  %v295 = vrot.slane %v215, %v294
  %v296 = vlaneseq
  %v297 = vshrl.u32 %v296, 7
  %v298 = vsub.s32 0, %v297
  %v299 = vrot.slane %v219, %v298
  %v300 = vlaneseq
  %v301 = vshrl.u32 %v300, 7
  %v302 = vsub.s32 0, %v301
  %v303 = vrot.slane %v223, %v302
  %v304 = vlaneseq
  %v305 = vshrl.u32 %v304, 7
  %v306 = vsub.s32 0, %v305
  %v307 = vrot.slane %v227, %v306
  %v308 = vlaneseq
  %v309 = vshrl.u32 %v308, 7
  %v310 = vsub.s32 0, %v309
  %v311 = vrot.slane %v231, %v310
  %v312 = vmul.f32 %v123, %v251
  %v313 = vmul.f32 %v123, %v255
  %v314 = vmul.f32 %v128, %v251
  %v315 = vmul.f32 %v128, %v255
  %v316 = vmul.f32 %v133, %v251
  %v317 = vmul.f32 %v133, %v255
  %v318 = vmul.f32 %v138, %v251
  %v319 = vmul.f32 %v138, %v255
  %v320 = vmul.f32 %v143, %v251
  %v321 = vmul.f32 %v143, %v255
  %v322 = vmul.f32 %v148, %v251
  %v323 = vmul.f32 %v148, %v255
  %v324 = vmul.f32 %v153, %v251
  %v325 = vmul.f32 %v153, %v255
  %v326 = vmul.f32 %v158, %v251
  %v327 = vmul.f32 %v158, %v255
  %v328 = vmul.f32 %v123, %v259
  %v329 = vmul.f32 %v123, %v263
  %v330 = vmul.f32 %v128, %v259
  %v331 = vmul.f32 %v128, %v263
  %v332 = vmul.f32 %v133, %v259
  %v333 = vmul.f32 %v133, %v263
  %v334 = vmul.f32 %v138, %v259
  %v335 = vmul.f32 %v138, %v263
  %v336 = vmul.f32 %v143, %v259
  %v337 = vmul.f32 %v143, %v263
  %v338 = vmul.f32 %v148, %v259
  %v339 = vmul.f32 %v148, %v263
  %v340 = vmul.f32 %v153, %v259
  %v341 = vmul.f32 %v153, %v263
  %v342 = vmul.f32 %v158, %v259
  %v343 = vmul.f32 %v158, %v263
  %v344 = vmul.f32 %v123, %v267
  %v345 = vmul.f32 %v123, %v271
  %v346 = vmul.f32 %v128, %v267
  %v347 = vmul.f32 %v128, %v271
  %v348 = vmul.f32 %v133, %v267
  %v349 = vmul.f32 %v133, %v271
  %v350 = vmul.f32 %v138, %v267
  %v351 = vmul.f32 %v138, %v271
  %v352 = vmul.f32 %v143, %v267
  %v353 = vmul.f32 %v143, %v271
  %v354 = vmul.f32 %v148, %v267
  %v355 = vmul.f32 %v148, %v271
  %v356 = vmul.f32 %v153, %v267
  %v357 = vmul.f32 %v153, %v271
  %v358 = vmul.f32 %v158, %v267
  %v359 = vmul.f32 %v158, %v271
  %v360 = vmul.f32 %v123, %v275
  %v361 = vmul.f32 %v123, %v279
  %v362 = vmul.f32 %v128, %v275
  %v363 = vmul.f32 %v128, %v279
  %v364 = vmul.f32 %v133, %v275
  %v365 = vmul.f32 %v133, %v279
  %v366 = vmul.f32 %v138, %v275
  %v367 = vmul.f32 %v138, %v279
  %v368 = vmul.f32 %v143, %v275
  %v369 = vmul.f32 %v143, %v279
  %v370 = vmul.f32 %v148, %v275
  %v371 = vmul.f32 %v148, %v279
  %v372 = vmul.f32 %v153, %v275
  %v373 = vmul.f32 %v153, %v279
  %v374 = vmul.f32 %v158, %v275
  %v375 = vmul.f32 %v158, %v279
  %v376 = vmul.f32 %v123, %v283
  %v377 = vmul.f32 %v123, %v287
  %v378 = vmul.f32 %v128, %v283
  %v379 = vmul.f32 %v128, %v287
  %v380 = vmul.f32 %v133, %v283
  %v381 = vmul.f32 %v133, %v287
  %v382 = vmul.f32 %v138, %v283
  %v383 = vmul.f32 %v138, %v287
  %v384 = vmul.f32 %v143, %v283
  %v385 = vmul.f32 %v143, %v287
  %v386 = vmul.f32 %v148, %v283
  %v387 = vmul.f32 %v148, %v287
  %v388 = vmul.f32 %v153, %v283
  %v389 = vmul.f32 %v153, %v287
  %v390 = vmul.f32 %v158, %v283
  %v391 = vmul.f32 %v158, %v287
  %v392 = vmul.f32 %v123, %v291
  %v393 = vmul.f32 %v123, %v295
  %v394 = vmul.f32 %v128, %v291
  %v395 = vmul.f32 %v128, %v295
  %v396 = vmul.f32 %v133, %v291
  %v397 = vmul.f32 %v133, %v295
  %v398 = vmul.f32 %v138, %v291
  %v399 = vmul.f32 %v138, %v295
  %v400 = vmul.f32 %v143, %v291
  %v401 = vmul.f32 %v143, %v295
  %v402 = vmul.f32 %v148, %v291
  %v403 = vmul.f32 %v148, %v295
  %v404 = vmul.f32 %v153, %v291
  %v405 = vmul.f32 %v153, %v295
  %v406 = vmul.f32 %v158, %v291
  %v407 = vmul.f32 %v158, %v295
  %v408 = vmul.f32 %v123, %v299
  %v409 = vmul.f32 %v123, %v303
  %v410 = vmul.f32 %v128, %v299
  %v411 = vmul.f32 %v128, %v303
  %v412 = vmul.f32 %v133, %v299
  %v413 = vmul.f32 %v133, %v303
  %v414 = vmul.f32 %v138, %v299
  %v415 = vmul.f32 %v138, %v303
  %v416 = vmul.f32 %v143, %v299
  %v417 = vmul.f32 %v143, %v303
  %v418 = vmul.f32 %v148, %v299
  %v419 = vmul.f32 %v148, %v303
  %v420 = vmul.f32 %v153, %v299
  %v421 = vmul.f32 %v153, %v303
  %v422 = vmul.f32 %v158, %v299
  %v423 = vmul.f32 %v158, %v303
  %v424 = vmul.f32 %v123, %v307
  %v425 = vmul.f32 %v123, %v311
  %v426 = vmul.f32 %v128, %v307
  %v427 = vmul.f32 %v128, %v311
  %v428 = vmul.f32 %v133, %v307
  %v429 = vmul.f32 %v133, %v311
  %v430 = vmul.f32 %v138, %v307
  %v431 = vmul.f32 %v138, %v311
  %v432 = vmul.f32 %v143, %v307
  %v433 = vmul.f32 %v143, %v311
  %v434 = vmul.f32 %v148, %v307
  %v435 = vmul.f32 %v148, %v311
  %v436 = vmul.f32 %v153, %v307
  %v437 = vmul.f32 %v153, %v311
  %v438 = vmul.f32 %v158, %v307
  %v439 = vmul.f32 %v158, %v311
  %v440 = vadd.f32 %v75, %v312
  %v441 = vadd.f32 %v75, %v313
  %v442 = vadd.f32 %v80, %v314
  %v443 = vadd.f32 %v80, %v315
  %v444 = vadd.f32 %v85, %v316
  %v445 = vadd.f32 %v85, %v317
  %v446 = vadd.f32 %v90, %v318
  %v447 = vadd.f32 %v90, %v319
  %v448 = vadd.f32 %v95, %v320
  %v449 = vadd.f32 %v95, %v321
  %v450 = vadd.f32 %v100, %v322
  %v451 = vadd.f32 %v100, %v323
  %v452 = vadd.f32 %v105, %v324
  %v453 = vadd.f32 %v105, %v325
  %v454 = vadd.f32 %v110, %v326
  %v455 = vadd.f32 %v110, %v327
  %v456 = vadd.f32 %v75, %v328
  %v457 = vadd.f32 %v75, %v329
  %v458 = vadd.f32 %v80, %v330
  %v459 = vadd.f32 %v80, %v331
  %v460 = vadd.f32 %v85, %v332
  %v461 = vadd.f32 %v85, %v333
  %v462 = vadd.f32 %v90, %v334
  %v463 = vadd.f32 %v90, %v335
  %v464 = vadd.f32 %v95, %v336
  %v465 = vadd.f32 %v95, %v337
  %v466 = vadd.f32 %v100, %v338
  %v467 = vadd.f32 %v100, %v339
  %v468 = vadd.f32 %v105, %v340
  %v469 = vadd.f32 %v105, %v341
  %v470 = vadd.f32 %v110, %v342
  %v471 = vadd.f32 %v110, %v343
  %v472 = vadd.f32 %v75, %v344
  %v473 = vadd.f32 %v75, %v345
  %v474 = vadd.f32 %v80, %v346
  %v475 = vadd.f32 %v80, %v347
  %v476 = vadd.f32 %v85, %v348
  %v477 = vadd.f32 %v85, %v349
  %v478 = vadd.f32 %v90, %v350
  %v479 = vadd.f32 %v90, %v351
  %v480 = vadd.f32 %v95, %v352
  %v481 = vadd.f32 %v95, %v353
  %v482 = vadd.f32 %v100, %v354
  %v483 = vadd.f32 %v100, %v355
  %v484 = vadd.f32 %v105, %v356
  %v485 = vadd.f32 %v105, %v357
  %v486 = vadd.f32 %v110, %v358
  %v487 = vadd.f32 %v110, %v359
  %v488 = vadd.f32 %v75, %v360
  %v489 = vadd.f32 %v75, %v361
  %v490 = vadd.f32 %v80, %v362
  %v491 = vadd.f32 %v80, %v363
  %v492 = vadd.f32 %v85, %v364
  %v493 = vadd.f32 %v85, %v365
  %v494 = vadd.f32 %v90, %v366
  %v495 = vadd.f32 %v90, %v367
  %v496 = vadd.f32 %v95, %v368
  %v497 = vadd.f32 %v95, %v369
  %v498 = vadd.f32 %v100, %v370
  %v499 = vadd.f32 %v100, %v371
  %v500 = vadd.f32 %v105, %v372
  %v501 = vadd.f32 %v105, %v373
  %v502 = vadd.f32 %v110, %v374
  %v503 = vadd.f32 %v110, %v375
  %v504 = vadd.f32 %v75, %v376
  %v505 = vadd.f32 %v75, %v377
  %v506 = vadd.f32 %v80, %v378
  %v507 = vadd.f32 %v80, %v379
  %v508 = vadd.f32 %v85, %v380
  %v509 = vadd.f32 %v85, %v381
  %v510 = vadd.f32 %v90, %v382
  %v511 = vadd.f32 %v90, %v383
  %v512 = vadd.f32 %v95, %v384
  %v513 = vadd.f32 %v95, %v385
  %v514 = vadd.f32 %v100, %v386
  %v515 = vadd.f32 %v100, %v387
  %v516 = vadd.f32 %v105, %v388
  %v517 = vadd.f32 %v105, %v389
  %v518 = vadd.f32 %v110, %v390
  %v519 = vadd.f32 %v110, %v391
  %v520 = vadd.f32 %v75, %v392
  %v521 = vadd.f32 %v75, %v393
  %v522 = vadd.f32 %v80, %v394
  %v523 = vadd.f32 %v80, %v395
  %v524 = vadd.f32 %v85, %v396
  %v525 = vadd.f32 %v85, %v397
  %v526 = vadd.f32 %v90, %v398
  %v527 = vadd.f32 %v90, %v399
  %v528 = vadd.f32 %v95, %v400
  %v529 = vadd.f32 %v95, %v401
  %v530 = vadd.f32 %v100, %v402
  %v531 = vadd.f32 %v100, %v403
  %v532 = vadd.f32 %v105, %v404
  %v533 = vadd.f32 %v105, %v405
  %v534 = vadd.f32 %v110, %v406
  %v535 = vadd.f32 %v110, %v407
  %v536 = vadd.f32 %v75, %v408
  %v537 = vadd.f32 %v75, %v409
  %v538 = vadd.f32 %v80, %v410
  %v539 = vadd.f32 %v80, %v411
  %v540 = vadd.f32 %v85, %v412
  %v541 = vadd.f32 %v85, %v413
  %v542 = vadd.f32 %v90, %v414
  %v543 = vadd.f32 %v90, %v415
  %v544 = vadd.f32 %v95, %v416
  %v545 = vadd.f32 %v95, %v417
  %v546 = vadd.f32 %v100, %v418
  %v547 = vadd.f32 %v100, %v419
  %v548 = vadd.f32 %v105, %v420
  %v549 = vadd.f32 %v105, %v421
  %v550 = vadd.f32 %v110, %v422
  %v551 = vadd.f32 %v110, %v423
  %v552 = vadd.f32 %v75, %v424
  %v553 = vadd.f32 %v75, %v425
  %v554 = vadd.f32 %v80, %v426
  %v555 = vadd.f32 %v80, %v427
  %v556 = vadd.f32 %v85, %v428
  %v557 = vadd.f32 %v85, %v429
  %v558 = vadd.f32 %v90, %v430
  %v559 = vadd.f32 %v90, %v431
  %v560 = vadd.f32 %v95, %v432
  %v561 = vadd.f32 %v95, %v433
  %v562 = vadd.f32 %v100, %v434
  %v563 = vadd.f32 %v100, %v435
  %v564 = vadd.f32 %v105, %v436
  %v565 = vadd.f32 %v105, %v437
  %v566 = vadd.f32 %v110, %v438
  %v567 = vadd.f32 %v110, %v439
  %568 = vset.pattern.permute.xlu0 1
  %569 = vperm.xlu0 %568, %v112
  %v570 = vpop.permute.xlu0 %569
  %572 = vset.pattern.permute.xlu0 1
  %573 = vperm.xlu0 %572, %v113
  %v574 = vpop.permute.xlu0 %573
  %576 = vset.pattern.permute.xlu0 1
  %577 = vperm.xlu0 %576, %v114
  %v578 = vpop.permute.xlu0 %577
  %580 = vset.pattern.permute.xlu0 1
  %581 = vperm.xlu0 %580, %v115
  %v582 = vpop.permute.xlu0 %581
  %584 = vset.pattern.permute.xlu0 1
  %585 = vperm.xlu0 %584, %v116
  %v586 = vpop.permute.xlu0 %585
  %588 = vset.pattern.permute.xlu0 1
  %589 = vperm.xlu0 %588, %v117
  %v590 = vpop.permute.xlu0 %589
  %592 = vset.pattern.permute.xlu0 1
  %593 = vperm.xlu0 %592, %v118
  %v594 = vpop.permute.xlu0 %593
  %596 = vset.pattern.permute.xlu0 1
  %597 = vperm.xlu0 %596, %v119
  %v598 = vpop.permute.xlu0 %597
  %v600 = vlaneseq
  %v601 = vshrl.u32 %v600, 7
  %v602 = vsub.s32 1, %v601
  %v603 = vrot.slane %v56, %v602
  %v604 = vlaneseq
  %v605 = vshrl.u32 %v604, 7
  %v606 = vsub.s32 5, %v605
  %v607 = vrot.slane %v56, %v606
  %v608 = vlaneseq
  %v609 = vshrl.u32 %v608, 7
  %v610 = vsub.s32 1, %v609
  %v611 = vrot.slane %v57, %v610
  %v612 = vlaneseq
  %v613 = vshrl.u32 %v612, 7
  %v614 = vsub.s32 5, %v613
  %v615 = vrot.slane %v57, %v614
  %v616 = vlaneseq
  %v617 = vshrl.u32 %v616, 7
  %v618 = vsub.s32 1, %v617
  %v619 = vrot.slane %v58, %v618
  %v620 = vlaneseq
  %v621 = vshrl.u32 %v620, 7
  %v622 = vsub.s32 5, %v621
  %v623 = vrot.slane %v58, %v622
  %v624 = vlaneseq
  %v625 = vshrl.u32 %v624, 7
  %v626 = vsub.s32 1, %v625
  %v627 = vrot.slane %v59, %v626
  %v628 = vlaneseq
  %v629 = vshrl.u32 %v628, 7
  %v630 = vsub.s32 5, %v629
  %v631 = vrot.slane %v59, %v630
  %v632 = vlaneseq
  %v633 = vshrl.u32 %v632, 7
  %v634 = vsub.s32 1, %v633
  %v635 = vrot.slane %v60, %v634
  %v636 = vlaneseq
  %v637 = vshrl.u32 %v636, 7
  %v638 = vsub.s32 5, %v637
  %v639 = vrot.slane %v60, %v638
  %v640 = vlaneseq
  %v641 = vshrl.u32 %v640, 7
  %v642 = vsub.s32 1, %v641
  %v643 = vrot.slane %v61, %v642
  %v644 = vlaneseq
  %v645 = vshrl.u32 %v644, 7
  %v646 = vsub.s32 5, %v645
  %v647 = vrot.slane %v61, %v646
  %v648 = vlaneseq
  %v649 = vshrl.u32 %v648, 7
  %v650 = vsub.s32 1, %v649
  %v651 = vrot.slane %v62, %v650
  %v652 = vlaneseq
  %v653 = vshrl.u32 %v652, 7
  %v654 = vsub.s32 5, %v653
  %v655 = vrot.slane %v62, %v654
  %v656 = vlaneseq
  %v657 = vshrl.u32 %v656, 7
  %v658 = vsub.s32 1, %v657
  %v659 = vrot.slane %v63, %v658
  %v660 = vlaneseq
  %v661 = vshrl.u32 %v660, 7
  %v662 = vsub.s32 5, %v661
  %v663 = vrot.slane %v63, %v662
  %v680 = vlaneseq
  %v681 = vshrl.u32 %v680, 7
  %v682 = vsub.s32 1, %v681
  %v683 = vrot.slane %v603, %v682
  %v684 = vlaneseq
  %v685 = vshrl.u32 %v684, 7
  %v686 = vsub.s32 1, %v685
  %v687 = vrot.slane %v607, %v686
  %v688 = vlaneseq
  %v689 = vshrl.u32 %v688, 7
  %v690 = vsub.s32 1, %v689
  %v691 = vrot.slane %v611, %v690
  %v692 = vlaneseq
  %v693 = vshrl.u32 %v692, 7
  %v694 = vsub.s32 1, %v693
  %v695 = vrot.slane %v615, %v694
  %v696 = vlaneseq
  %v697 = vshrl.u32 %v696, 7
  %v698 = vsub.s32 1, %v697
  %v699 = vrot.slane %v619, %v698
  %v700 = vlaneseq
  %v701 = vshrl.u32 %v700, 7
  %v702 = vsub.s32 1, %v701
  %v703 = vrot.slane %v623, %v702
  %v704 = vlaneseq
  %v705 = vshrl.u32 %v704, 7
  %v706 = vsub.s32 1, %v705
  %v707 = vrot.slane %v627, %v706
  %v708 = vlaneseq
  %v709 = vshrl.u32 %v708, 7
  %v710 = vsub.s32 1, %v709
  %v711 = vrot.slane %v631, %v710
  %v712 = vlaneseq
  %v713 = vshrl.u32 %v712, 7
  %v714 = vsub.s32 1, %v713
  %v715 = vrot.slane %v635, %v714
  %v716 = vlaneseq
  %v717 = vshrl.u32 %v716, 7
  %v718 = vsub.s32 1, %v717
  %v719 = vrot.slane %v639, %v718
  %v720 = vlaneseq
  %v721 = vshrl.u32 %v720, 7
  %v722 = vsub.s32 1, %v721
  %v723 = vrot.slane %v643, %v722
  %v724 = vlaneseq
  %v725 = vshrl.u32 %v724, 7
  %v726 = vsub.s32 1, %v725
  %v727 = vrot.slane %v647, %v726
  %v728 = vlaneseq
  %v729 = vshrl.u32 %v728, 7
  %v730 = vsub.s32 1, %v729
  %v731 = vrot.slane %v651, %v730
  %v732 = vlaneseq
  %v733 = vshrl.u32 %v732, 7
  %v734 = vsub.s32 1, %v733
  %v735 = vrot.slane %v655, %v734
  %v736 = vlaneseq
  %v737 = vshrl.u32 %v736, 7
  %v738 = vsub.s32 1, %v737
  %v739 = vrot.slane %v659, %v738
  %v740 = vlaneseq
  %v741 = vshrl.u32 %v740, 7
  %v742 = vsub.s32 1, %v741
  %v743 = vrot.slane %v663, %v742
  %v744 = vmul.f32 %v570, %v683
  %v745 = vmul.f32 %v570, %v687
  %v746 = vmul.f32 %v574, %v683
  %v747 = vmul.f32 %v574, %v687
  %v748 = vmul.f32 %v578, %v683
  %v749 = vmul.f32 %v578, %v687
  %v750 = vmul.f32 %v582, %v683
  %v751 = vmul.f32 %v582, %v687
  %v752 = vmul.f32 %v586, %v683
  %v753 = vmul.f32 %v586, %v687
  %v754 = vmul.f32 %v590, %v683
  %v755 = vmul.f32 %v590, %v687
  %v756 = vmul.f32 %v594, %v683
  %v757 = vmul.f32 %v594, %v687
  %v758 = vmul.f32 %v598, %v683
  %v759 = vmul.f32 %v598, %v687
  %v760 = vmul.f32 %v570, %v691
  %v761 = vmul.f32 %v570, %v695
  %v762 = vmul.f32 %v574, %v691
  %v763 = vmul.f32 %v574, %v695
  %v764 = vmul.f32 %v578, %v691
  %v765 = vmul.f32 %v578, %v695
  %v766 = vmul.f32 %v582, %v691
  %v767 = vmul.f32 %v582, %v695
  %v768 = vmul.f32 %v586, %v691
  %v769 = vmul.f32 %v586, %v695
  %v770 = vmul.f32 %v590, %v691
  %v771 = vmul.f32 %v590, %v695
  %v772 = vmul.f32 %v594, %v691
  %v773 = vmul.f32 %v594, %v695
  %v774 = vmul.f32 %v598, %v691
  %v775 = vmul.f32 %v598, %v695
  %v776 = vmul.f32 %v570, %v699
  %v777 = vmul.f32 %v570, %v703
  %v778 = vmul.f32 %v574, %v699
  %v779 = vmul.f32 %v574, %v703
  %v780 = vmul.f32 %v578, %v699
  %v781 = vmul.f32 %v578, %v703
  %v782 = vmul.f32 %v582, %v699
  %v783 = vmul.f32 %v582, %v703
  %v784 = vmul.f32 %v586, %v699
  %v785 = vmul.f32 %v586, %v703
  %v786 = vmul.f32 %v590, %v699
  %v787 = vmul.f32 %v590, %v703
  %v788 = vmul.f32 %v594, %v699
  %v789 = vmul.f32 %v594, %v703
  %v790 = vmul.f32 %v598, %v699
  %v791 = vmul.f32 %v598, %v703
  %v792 = vmul.f32 %v570, %v707
  %v793 = vmul.f32 %v570, %v711
  %v794 = vmul.f32 %v574, %v707
  %v795 = vmul.f32 %v574, %v711
  %v796 = vmul.f32 %v578, %v707
  %v797 = vmul.f32 %v578, %v711
  %v798 = vmul.f32 %v582, %v707
  %v799 = vmul.f32 %v582, %v711
  %v800 = vmul.f32 %v586, %v707
  %v801 = vmul.f32 %v586, %v711
  %v802 = vmul.f32 %v590, %v707
  %v803 = vmul.f32 %v590, %v711
  %v804 = vmul.f32 %v594, %v707
  %v805 = vmul.f32 %v594, %v711
  %v806 = vmul.f32 %v598, %v707
  %v807 = vmul.f32 %v598, %v711
  %v808 = vmul.f32 %v570, %v715
  %v809 = vmul.f32 %v570, %v719
  %v810 = vmul.f32 %v574, %v715
  %v811 = vmul.f32 %v574, %v719
  %v812 = vmul.f32 %v578, %v715
  %v813 = vmul.f32 %v578, %v719
  %v814 = vmul.f32 %v582, %v715
  %v815 = vmul.f32 %v582, %v719
  %v816 = vmul.f32 %v586, %v715
  %v817 = vmul.f32 %v586, %v719
  %v818 = vmul.f32 %v590, %v715
  %v819 = vmul.f32 %v590, %v719
  %v820 = vmul.f32 %v594, %v715
  %v821 = vmul.f32 %v594, %v719
  %v822 = vmul.f32 %v598, %v715
  %v823 = vmul.f32 %v598, %v719
  %v824 = vmul.f32 %v570, %v723
  %v825 = vmul.f32 %v570, %v727
  %v826 = vmul.f32 %v574, %v723
  %v827 = vmul.f32 %v574, %v727
  %v828 = vmul.f32 %v578, %v723
  %v829 = vmul.f32 %v578, %v727
  %v830 = vmul.f32 %v582, %v723
  %v831 = vmul.f32 %v582, %v727
  %v832 = vmul.f32 %v586, %v723
  %v833 = vmul.f32 %v586, %v727
  %v834 = vmul.f32 %v590, %v723
  %v835 = vmul.f32 %v590, %v727
  %v836 = vmul.f32 %v594, %v723
  %v837 = vmul.f32 %v594, %v727
  %v838 = vmul.f32 %v598, %v723
  %v839 = vmul.f32 %v598, %v727
  %v840 = vmul.f32 %v570, %v731
  %v841 = vmul.f32 %v570, %v735
  %v842 = vmul.f32 %v574, %v731
  %v843 = vmul.f32 %v574, %v735
  %v844 = vmul.f32 %v578, %v731
  %v845 = vmul.f32 %v578, %v735
  %v846 = vmul.f32 %v582, %v731
  %v847 = vmul.f32 %v582, %v735
  %v848 = vmul.f32 %v586, %v731
  %v849 = vmul.f32 %v586, %v735
  %v850 = vmul.f32 %v590, %v731
  %v851 = vmul.f32 %v590, %v735
  %v852 = vmul.f32 %v594, %v731
  %v853 = vmul.f32 %v594, %v735
  %v854 = vmul.f32 %v598, %v731
  %v855 = vmul.f32 %v598, %v735
  %v856 = vmul.f32 %v570, %v739
  %v857 = vmul.f32 %v570, %v743
  %v858 = vmul.f32 %v574, %v739
  %v859 = vmul.f32 %v574, %v743
  %v860 = vmul.f32 %v578, %v739
  %v861 = vmul.f32 %v578, %v743
  %v862 = vmul.f32 %v582, %v739
  %v863 = vmul.f32 %v582, %v743
  %v864 = vmul.f32 %v586, %v739
  %v865 = vmul.f32 %v586, %v743
  %v866 = vmul.f32 %v590, %v739
  %v867 = vmul.f32 %v590, %v743
  %v868 = vmul.f32 %v594, %v739
  %v869 = vmul.f32 %v594, %v743
  %v870 = vmul.f32 %v598, %v739
  %v871 = vmul.f32 %v598, %v743
  %v872 = vadd.f32 %v440, %v744
  %v873 = vadd.f32 %v441, %v745
  %v874 = vadd.f32 %v442, %v746
  %v875 = vadd.f32 %v443, %v747
  %v876 = vadd.f32 %v444, %v748
  %v877 = vadd.f32 %v445, %v749
  %v878 = vadd.f32 %v446, %v750
  %v879 = vadd.f32 %v447, %v751
  %v880 = vadd.f32 %v448, %v752
  %v881 = vadd.f32 %v449, %v753
  %v882 = vadd.f32 %v450, %v754
  %v883 = vadd.f32 %v451, %v755
  %v884 = vadd.f32 %v452, %v756
  %v885 = vadd.f32 %v453, %v757
  %v886 = vadd.f32 %v454, %v758
  %v887 = vadd.f32 %v455, %v759
  %v888 = vadd.f32 %v456, %v760
  %v889 = vadd.f32 %v457, %v761
  %v890 = vadd.f32 %v458, %v762
  %v891 = vadd.f32 %v459, %v763
  %v892 = vadd.f32 %v460, %v764
  %v893 = vadd.f32 %v461, %v765
  %v894 = vadd.f32 %v462, %v766
  %v895 = vadd.f32 %v463, %v767
  %v896 = vadd.f32 %v464, %v768
  %v897 = vadd.f32 %v465, %v769
  %v898 = vadd.f32 %v466, %v770
  %v899 = vadd.f32 %v467, %v771
  %v900 = vadd.f32 %v468, %v772
  %v901 = vadd.f32 %v469, %v773
  %v902 = vadd.f32 %v470, %v774
  %v903 = vadd.f32 %v471, %v775
  %v904 = vadd.f32 %v472, %v776
  %v905 = vadd.f32 %v473, %v777
  %v906 = vadd.f32 %v474, %v778
  %v907 = vadd.f32 %v475, %v779
  %v908 = vadd.f32 %v476, %v780
  %v909 = vadd.f32 %v477, %v781
  %v910 = vadd.f32 %v478, %v782
  %v911 = vadd.f32 %v479, %v783
  %v912 = vadd.f32 %v480, %v784
  %v913 = vadd.f32 %v481, %v785
  %v914 = vadd.f32 %v482, %v786
  %v915 = vadd.f32 %v483, %v787
  %v916 = vadd.f32 %v484, %v788
  %v917 = vadd.f32 %v485, %v789
  %v918 = vadd.f32 %v486, %v790
  %v919 = vadd.f32 %v487, %v791
  %v920 = vadd.f32 %v488, %v792
  %v921 = vadd.f32 %v489, %v793
  %v922 = vadd.f32 %v490, %v794
  %v923 = vadd.f32 %v491, %v795
  %v924 = vadd.f32 %v492, %v796
  %v925 = vadd.f32 %v493, %v797
  %v926 = vadd.f32 %v494, %v798
  %v927 = vadd.f32 %v495, %v799
  %v928 = vadd.f32 %v496, %v800
  %v929 = vadd.f32 %v497, %v801
  %v930 = vadd.f32 %v498, %v802
  %v931 = vadd.f32 %v499, %v803
  %v932 = vadd.f32 %v500, %v804
  %v933 = vadd.f32 %v501, %v805
  %v934 = vadd.f32 %v502, %v806
  %v935 = vadd.f32 %v503, %v807
  %v936 = vadd.f32 %v504, %v808
  %v937 = vadd.f32 %v505, %v809
  %v938 = vadd.f32 %v506, %v810
  %v939 = vadd.f32 %v507, %v811
  %v940 = vadd.f32 %v508, %v812
  %v941 = vadd.f32 %v509, %v813
  %v942 = vadd.f32 %v510, %v814
  %v943 = vadd.f32 %v511, %v815
  %v944 = vadd.f32 %v512, %v816
  %v945 = vadd.f32 %v513, %v817
  %v946 = vadd.f32 %v514, %v818
  %v947 = vadd.f32 %v515, %v819
  %v948 = vadd.f32 %v516, %v820
  %v949 = vadd.f32 %v517, %v821
  %v950 = vadd.f32 %v518, %v822
  %v951 = vadd.f32 %v519, %v823
  %v952 = vadd.f32 %v520, %v824
  %v953 = vadd.f32 %v521, %v825
  %v954 = vadd.f32 %v522, %v826
  %v955 = vadd.f32 %v523, %v827
  %v956 = vadd.f32 %v524, %v828
  %v957 = vadd.f32 %v525, %v829
  %v958 = vadd.f32 %v526, %v830
  %v959 = vadd.f32 %v527, %v831
  %v960 = vadd.f32 %v528, %v832
  %v961 = vadd.f32 %v529, %v833
  %v962 = vadd.f32 %v530, %v834
  %v963 = vadd.f32 %v531, %v835
  %v964 = vadd.f32 %v532, %v836
  %v965 = vadd.f32 %v533, %v837
  %v966 = vadd.f32 %v534, %v838
  %v967 = vadd.f32 %v535, %v839
  %v968 = vadd.f32 %v536, %v840
  %v969 = vadd.f32 %v537, %v841
  %v970 = vadd.f32 %v538, %v842
  %v971 = vadd.f32 %v539, %v843
  %v972 = vadd.f32 %v540, %v844
  %v973 = vadd.f32 %v541, %v845
  %v974 = vadd.f32 %v542, %v846
  %v975 = vadd.f32 %v543, %v847
  %v976 = vadd.f32 %v544, %v848
  %v977 = vadd.f32 %v545, %v849
  %v978 = vadd.f32 %v546, %v850
  %v979 = vadd.f32 %v547, %v851
  %v980 = vadd.f32 %v548, %v852
  %v981 = vadd.f32 %v549, %v853
  %v982 = vadd.f32 %v550, %v854
  %v983 = vadd.f32 %v551, %v855
  %v984 = vadd.f32 %v552, %v856
  %v985 = vadd.f32 %v553, %v857
  %v986 = vadd.f32 %v554, %v858
  %v987 = vadd.f32 %v555, %v859
  %v988 = vadd.f32 %v556, %v860
  %v989 = vadd.f32 %v557, %v861
  %v990 = vadd.f32 %v558, %v862
  %v991 = vadd.f32 %v559, %v863
  %v992 = vadd.f32 %v560, %v864
  %v993 = vadd.f32 %v561, %v865
  %v994 = vadd.f32 %v562, %v866
  %v995 = vadd.f32 %v563, %v867
  %v996 = vadd.f32 %v564, %v868
  %v997 = vadd.f32 %v565, %v869
  %v998 = vadd.f32 %v566, %v870
  %v999 = vadd.f32 %v567, %v871
  %1000 = vset.pattern.permute.xlu0 2
  %1001 = vperm.xlu0 %1000, %v112
  %v1002 = vpop.permute.xlu0 %1001
  %1004 = vset.pattern.permute.xlu0 2
  %1005 = vperm.xlu0 %1004, %v113
  %v1006 = vpop.permute.xlu0 %1005
  %1008 = vset.pattern.permute.xlu0 2
  %1009 = vperm.xlu0 %1008, %v114
  %v1010 = vpop.permute.xlu0 %1009
  %1012 = vset.pattern.permute.xlu0 2
  %1013 = vperm.xlu0 %1012, %v115
  %v1014 = vpop.permute.xlu0 %1013
  %1016 = vset.pattern.permute.xlu0 2
  %1017 = vperm.xlu0 %1016, %v116
  %v1018 = vpop.permute.xlu0 %1017
  %1020 = vset.pattern.permute.xlu0 2
  %1021 = vperm.xlu0 %1020, %v117
  %v1022 = vpop.permute.xlu0 %1021
  %1024 = vset.pattern.permute.xlu0 2
  %1025 = vperm.xlu0 %1024, %v118
  %v1026 = vpop.permute.xlu0 %1025
  %1028 = vset.pattern.permute.xlu0 2
  %1029 = vperm.xlu0 %1028, %v119
  %v1030 = vpop.permute.xlu0 %1029
  %v1032 = vlaneseq
  %v1033 = vshrl.u32 %v1032, 7
  %v1034 = vsub.s32 2, %v1033
  %v1035 = vrot.slane %v56, %v1034
  %v1036 = vlaneseq
  %v1037 = vshrl.u32 %v1036, 7
  %v1038 = vsub.s32 6, %v1037
  %v1039 = vrot.slane %v56, %v1038
  %v1040 = vlaneseq
  %v1041 = vshrl.u32 %v1040, 7
  %v1042 = vsub.s32 2, %v1041
  %v1043 = vrot.slane %v57, %v1042
  %v1044 = vlaneseq
  %v1045 = vshrl.u32 %v1044, 7
  %v1046 = vsub.s32 6, %v1045
  %v1047 = vrot.slane %v57, %v1046
  %v1048 = vlaneseq
  %v1049 = vshrl.u32 %v1048, 7
  %v1050 = vsub.s32 2, %v1049
  %v1051 = vrot.slane %v58, %v1050
  %v1052 = vlaneseq
  %v1053 = vshrl.u32 %v1052, 7
  %v1054 = vsub.s32 6, %v1053
  %v1055 = vrot.slane %v58, %v1054
  %v1056 = vlaneseq
  %v1057 = vshrl.u32 %v1056, 7
  %v1058 = vsub.s32 2, %v1057
  %v1059 = vrot.slane %v59, %v1058
  %v1060 = vlaneseq
  %v1061 = vshrl.u32 %v1060, 7
  %v1062 = vsub.s32 6, %v1061
  %v1063 = vrot.slane %v59, %v1062
  %v1064 = vlaneseq
  %v1065 = vshrl.u32 %v1064, 7
  %v1066 = vsub.s32 2, %v1065
  %v1067 = vrot.slane %v60, %v1066
  %v1068 = vlaneseq
  %v1069 = vshrl.u32 %v1068, 7
  %v1070 = vsub.s32 6, %v1069
  %v1071 = vrot.slane %v60, %v1070
  %v1072 = vlaneseq
  %v1073 = vshrl.u32 %v1072, 7
  %v1074 = vsub.s32 2, %v1073
  %v1075 = vrot.slane %v61, %v1074
  %v1076 = vlaneseq
  %v1077 = vshrl.u32 %v1076, 7
  %v1078 = vsub.s32 6, %v1077
  %v1079 = vrot.slane %v61, %v1078
  %v1080 = vlaneseq
  %v1081 = vshrl.u32 %v1080, 7
  %v1082 = vsub.s32 2, %v1081
  %v1083 = vrot.slane %v62, %v1082
  %v1084 = vlaneseq
  %v1085 = vshrl.u32 %v1084, 7
  %v1086 = vsub.s32 6, %v1085
  %v1087 = vrot.slane %v62, %v1086
  %v1088 = vlaneseq
  %v1089 = vshrl.u32 %v1088, 7
  %v1090 = vsub.s32 2, %v1089
  %v1091 = vrot.slane %v63, %v1090
  %v1092 = vlaneseq
  %v1093 = vshrl.u32 %v1092, 7
  %v1094 = vsub.s32 6, %v1093
  %v1095 = vrot.slane %v63, %v1094
  %v1112 = vlaneseq
  %v1113 = vshrl.u32 %v1112, 7
  %v1114 = vsub.s32 2, %v1113
  %v1115 = vrot.slane %v1035, %v1114
  %v1116 = vlaneseq
  %v1117 = vshrl.u32 %v1116, 7
  %v1118 = vsub.s32 2, %v1117
  %v1119 = vrot.slane %v1039, %v1118
  %v1120 = vlaneseq
  %v1121 = vshrl.u32 %v1120, 7
  %v1122 = vsub.s32 2, %v1121
  %v1123 = vrot.slane %v1043, %v1122
  %v1124 = vlaneseq
  %v1125 = vshrl.u32 %v1124, 7
  %v1126 = vsub.s32 2, %v1125
  %v1127 = vrot.slane %v1047, %v1126
  %v1128 = vlaneseq
  %v1129 = vshrl.u32 %v1128, 7
  %v1130 = vsub.s32 2, %v1129
  %v1131 = vrot.slane %v1051, %v1130
  %v1132 = vlaneseq
  %v1133 = vshrl.u32 %v1132, 7
  %v1134 = vsub.s32 2, %v1133
  %v1135 = vrot.slane %v1055, %v1134
  %v1136 = vlaneseq
  %v1137 = vshrl.u32 %v1136, 7
  %v1138 = vsub.s32 2, %v1137
  %v1139 = vrot.slane %v1059, %v1138
  %v1140 = vlaneseq
  %v1141 = vshrl.u32 %v1140, 7
  %v1142 = vsub.s32 2, %v1141
  %v1143 = vrot.slane %v1063, %v1142
  %v1144 = vlaneseq
  %v1145 = vshrl.u32 %v1144, 7
  %v1146 = vsub.s32 2, %v1145
  %v1147 = vrot.slane %v1067, %v1146
  %v1148 = vlaneseq
  %v1149 = vshrl.u32 %v1148, 7
  %v1150 = vsub.s32 2, %v1149
  %v1151 = vrot.slane %v1071, %v1150
  %v1152 = vlaneseq
  %v1153 = vshrl.u32 %v1152, 7
  %v1154 = vsub.s32 2, %v1153
  %v1155 = vrot.slane %v1075, %v1154
  %v1156 = vlaneseq
  %v1157 = vshrl.u32 %v1156, 7
  %v1158 = vsub.s32 2, %v1157
  %v1159 = vrot.slane %v1079, %v1158
  %v1160 = vlaneseq
  %v1161 = vshrl.u32 %v1160, 7
  %v1162 = vsub.s32 2, %v1161
  %v1163 = vrot.slane %v1083, %v1162
  %v1164 = vlaneseq
  %v1165 = vshrl.u32 %v1164, 7
  %v1166 = vsub.s32 2, %v1165
  %v1167 = vrot.slane %v1087, %v1166
  %v1168 = vlaneseq
  %v1169 = vshrl.u32 %v1168, 7
  %v1170 = vsub.s32 2, %v1169
  %v1171 = vrot.slane %v1091, %v1170
  %v1172 = vlaneseq
  %v1173 = vshrl.u32 %v1172, 7
  %v1174 = vsub.s32 2, %v1173
  %v1175 = vrot.slane %v1095, %v1174
  %v1176 = vmul.f32 %v1002, %v1115
  %v1177 = vmul.f32 %v1002, %v1119
  %v1178 = vmul.f32 %v1006, %v1115
  %v1179 = vmul.f32 %v1006, %v1119
  %v1180 = vmul.f32 %v1010, %v1115
  %v1181 = vmul.f32 %v1010, %v1119
  %v1182 = vmul.f32 %v1014, %v1115
  %v1183 = vmul.f32 %v1014, %v1119
  %v1184 = vmul.f32 %v1018, %v1115
  %v1185 = vmul.f32 %v1018, %v1119
  %v1186 = vmul.f32 %v1022, %v1115
  %v1187 = vmul.f32 %v1022, %v1119
  %v1188 = vmul.f32 %v1026, %v1115
  %v1189 = vmul.f32 %v1026, %v1119
  %v1190 = vmul.f32 %v1030, %v1115
  %v1191 = vmul.f32 %v1030, %v1119
  %v1192 = vmul.f32 %v1002, %v1123
  %v1193 = vmul.f32 %v1002, %v1127
  %v1194 = vmul.f32 %v1006, %v1123
  %v1195 = vmul.f32 %v1006, %v1127
  %v1196 = vmul.f32 %v1010, %v1123
  %v1197 = vmul.f32 %v1010, %v1127
  %v1198 = vmul.f32 %v1014, %v1123
  %v1199 = vmul.f32 %v1014, %v1127
  %v1200 = vmul.f32 %v1018, %v1123
  %v1201 = vmul.f32 %v1018, %v1127
  %v1202 = vmul.f32 %v1022, %v1123
  %v1203 = vmul.f32 %v1022, %v1127
  %v1204 = vmul.f32 %v1026, %v1123
  %v1205 = vmul.f32 %v1026, %v1127
  %v1206 = vmul.f32 %v1030, %v1123
  %v1207 = vmul.f32 %v1030, %v1127
  %v1208 = vmul.f32 %v1002, %v1131
  %v1209 = vmul.f32 %v1002, %v1135
  %v1210 = vmul.f32 %v1006, %v1131
  %v1211 = vmul.f32 %v1006, %v1135
  %v1212 = vmul.f32 %v1010, %v1131
  %v1213 = vmul.f32 %v1010, %v1135
  %v1214 = vmul.f32 %v1014, %v1131
  %v1215 = vmul.f32 %v1014, %v1135
  %v1216 = vmul.f32 %v1018, %v1131
  %v1217 = vmul.f32 %v1018, %v1135
  %v1218 = vmul.f32 %v1022, %v1131
  %v1219 = vmul.f32 %v1022, %v1135
  %v1220 = vmul.f32 %v1026, %v1131
  %v1221 = vmul.f32 %v1026, %v1135
  %v1222 = vmul.f32 %v1030, %v1131
  %v1223 = vmul.f32 %v1030, %v1135
  %v1224 = vmul.f32 %v1002, %v1139
  %v1225 = vmul.f32 %v1002, %v1143
  %v1226 = vmul.f32 %v1006, %v1139
  %v1227 = vmul.f32 %v1006, %v1143
  %v1228 = vmul.f32 %v1010, %v1139
  %v1229 = vmul.f32 %v1010, %v1143
  %v1230 = vmul.f32 %v1014, %v1139
  %v1231 = vmul.f32 %v1014, %v1143
  %v1232 = vmul.f32 %v1018, %v1139
  %v1233 = vmul.f32 %v1018, %v1143
  %v1234 = vmul.f32 %v1022, %v1139
  %v1235 = vmul.f32 %v1022, %v1143
  %v1236 = vmul.f32 %v1026, %v1139
  %v1237 = vmul.f32 %v1026, %v1143
  %v1238 = vmul.f32 %v1030, %v1139
  %v1239 = vmul.f32 %v1030, %v1143
  %v1240 = vmul.f32 %v1002, %v1147
  %v1241 = vmul.f32 %v1002, %v1151
  %v1242 = vmul.f32 %v1006, %v1147
  %v1243 = vmul.f32 %v1006, %v1151
  %v1244 = vmul.f32 %v1010, %v1147
  %v1245 = vmul.f32 %v1010, %v1151
  %v1246 = vmul.f32 %v1014, %v1147
  %v1247 = vmul.f32 %v1014, %v1151
  %v1248 = vmul.f32 %v1018, %v1147
  %v1249 = vmul.f32 %v1018, %v1151
  %v1250 = vmul.f32 %v1022, %v1147
  %v1251 = vmul.f32 %v1022, %v1151
  %v1252 = vmul.f32 %v1026, %v1147
  %v1253 = vmul.f32 %v1026, %v1151
  %v1254 = vmul.f32 %v1030, %v1147
  %v1255 = vmul.f32 %v1030, %v1151
  %v1256 = vmul.f32 %v1002, %v1155
  %v1257 = vmul.f32 %v1002, %v1159
  %v1258 = vmul.f32 %v1006, %v1155
  %v1259 = vmul.f32 %v1006, %v1159
  %v1260 = vmul.f32 %v1010, %v1155
  %v1261 = vmul.f32 %v1010, %v1159
  %v1262 = vmul.f32 %v1014, %v1155
  %v1263 = vmul.f32 %v1014, %v1159
  %v1264 = vmul.f32 %v1018, %v1155
  %v1265 = vmul.f32 %v1018, %v1159
  %v1266 = vmul.f32 %v1022, %v1155
  %v1267 = vmul.f32 %v1022, %v1159
  %v1268 = vmul.f32 %v1026, %v1155
  %v1269 = vmul.f32 %v1026, %v1159
  %v1270 = vmul.f32 %v1030, %v1155
  %v1271 = vmul.f32 %v1030, %v1159
  %v1272 = vmul.f32 %v1002, %v1163
  %v1273 = vmul.f32 %v1002, %v1167
  %v1274 = vmul.f32 %v1006, %v1163
  %v1275 = vmul.f32 %v1006, %v1167
  %v1276 = vmul.f32 %v1010, %v1163
  %v1277 = vmul.f32 %v1010, %v1167
  %v1278 = vmul.f32 %v1014, %v1163
  %v1279 = vmul.f32 %v1014, %v1167
  %v1280 = vmul.f32 %v1018, %v1163
  %v1281 = vmul.f32 %v1018, %v1167
  %v1282 = vmul.f32 %v1022, %v1163
  %v1283 = vmul.f32 %v1022, %v1167
  %v1284 = vmul.f32 %v1026, %v1163
  %v1285 = vmul.f32 %v1026, %v1167
  %v1286 = vmul.f32 %v1030, %v1163
  %v1287 = vmul.f32 %v1030, %v1167
  %v1288 = vmul.f32 %v1002, %v1171
  %v1289 = vmul.f32 %v1002, %v1175
  %v1290 = vmul.f32 %v1006, %v1171
  %v1291 = vmul.f32 %v1006, %v1175
  %v1292 = vmul.f32 %v1010, %v1171
  %v1293 = vmul.f32 %v1010, %v1175
  %v1294 = vmul.f32 %v1014, %v1171
  %v1295 = vmul.f32 %v1014, %v1175
  %v1296 = vmul.f32 %v1018, %v1171
  %v1297 = vmul.f32 %v1018, %v1175
  %v1298 = vmul.f32 %v1022, %v1171
  %v1299 = vmul.f32 %v1022, %v1175
  %v1300 = vmul.f32 %v1026, %v1171
  %v1301 = vmul.f32 %v1026, %v1175
  %v1302 = vmul.f32 %v1030, %v1171
  %v1303 = vmul.f32 %v1030, %v1175
  %v1304 = vadd.f32 %v872, %v1176
  %v1305 = vadd.f32 %v873, %v1177
  %v1306 = vadd.f32 %v874, %v1178
  %v1307 = vadd.f32 %v875, %v1179
  %v1308 = vadd.f32 %v876, %v1180
  %v1309 = vadd.f32 %v877, %v1181
  %v1310 = vadd.f32 %v878, %v1182
  %v1311 = vadd.f32 %v879, %v1183
  %v1312 = vadd.f32 %v880, %v1184
  %v1313 = vadd.f32 %v881, %v1185
  %v1314 = vadd.f32 %v882, %v1186
  %v1315 = vadd.f32 %v883, %v1187
  %v1316 = vadd.f32 %v884, %v1188
  %v1317 = vadd.f32 %v885, %v1189
  %v1318 = vadd.f32 %v886, %v1190
  %v1319 = vadd.f32 %v887, %v1191
  %v1320 = vadd.f32 %v888, %v1192
  %v1321 = vadd.f32 %v889, %v1193
  %v1322 = vadd.f32 %v890, %v1194
  %v1323 = vadd.f32 %v891, %v1195
  %v1324 = vadd.f32 %v892, %v1196
  %v1325 = vadd.f32 %v893, %v1197
  %v1326 = vadd.f32 %v894, %v1198
  %v1327 = vadd.f32 %v895, %v1199
  %v1328 = vadd.f32 %v896, %v1200
  %v1329 = vadd.f32 %v897, %v1201
  %v1330 = vadd.f32 %v898, %v1202
  %v1331 = vadd.f32 %v899, %v1203
  %v1332 = vadd.f32 %v900, %v1204
  %v1333 = vadd.f32 %v901, %v1205
  %v1334 = vadd.f32 %v902, %v1206
  %v1335 = vadd.f32 %v903, %v1207
  %v1336 = vadd.f32 %v904, %v1208
  %v1337 = vadd.f32 %v905, %v1209
  %v1338 = vadd.f32 %v906, %v1210
  %v1339 = vadd.f32 %v907, %v1211
  %v1340 = vadd.f32 %v908, %v1212
  %v1341 = vadd.f32 %v909, %v1213
  %v1342 = vadd.f32 %v910, %v1214
  %v1343 = vadd.f32 %v911, %v1215
  %v1344 = vadd.f32 %v912, %v1216
  %v1345 = vadd.f32 %v913, %v1217
  %v1346 = vadd.f32 %v914, %v1218
  %v1347 = vadd.f32 %v915, %v1219
  %v1348 = vadd.f32 %v916, %v1220
  %v1349 = vadd.f32 %v917, %v1221
  %v1350 = vadd.f32 %v918, %v1222
  %v1351 = vadd.f32 %v919, %v1223
  %v1352 = vadd.f32 %v920, %v1224
  %v1353 = vadd.f32 %v921, %v1225
  %v1354 = vadd.f32 %v922, %v1226
  %v1355 = vadd.f32 %v923, %v1227
  %v1356 = vadd.f32 %v924, %v1228
  %v1357 = vadd.f32 %v925, %v1229
  %v1358 = vadd.f32 %v926, %v1230
  %v1359 = vadd.f32 %v927, %v1231
  %v1360 = vadd.f32 %v928, %v1232
  %v1361 = vadd.f32 %v929, %v1233
  %v1362 = vadd.f32 %v930, %v1234
  %v1363 = vadd.f32 %v931, %v1235
  %v1364 = vadd.f32 %v932, %v1236
  %v1365 = vadd.f32 %v933, %v1237
  %v1366 = vadd.f32 %v934, %v1238
  %v1367 = vadd.f32 %v935, %v1239
  %v1368 = vadd.f32 %v936, %v1240
  %v1369 = vadd.f32 %v937, %v1241
  %v1370 = vadd.f32 %v938, %v1242
  %v1371 = vadd.f32 %v939, %v1243
  %v1372 = vadd.f32 %v940, %v1244
  %v1373 = vadd.f32 %v941, %v1245
  %v1374 = vadd.f32 %v942, %v1246
  %v1375 = vadd.f32 %v943, %v1247
  %v1376 = vadd.f32 %v944, %v1248
  %v1377 = vadd.f32 %v945, %v1249
  %v1378 = vadd.f32 %v946, %v1250
  %v1379 = vadd.f32 %v947, %v1251
  %v1380 = vadd.f32 %v948, %v1252
  %v1381 = vadd.f32 %v949, %v1253
  %v1382 = vadd.f32 %v950, %v1254
  %v1383 = vadd.f32 %v951, %v1255
  %v1384 = vadd.f32 %v952, %v1256
  %v1385 = vadd.f32 %v953, %v1257
  %v1386 = vadd.f32 %v954, %v1258
  %v1387 = vadd.f32 %v955, %v1259
  %v1388 = vadd.f32 %v956, %v1260
  %v1389 = vadd.f32 %v957, %v1261
  %v1390 = vadd.f32 %v958, %v1262
  %v1391 = vadd.f32 %v959, %v1263
  %v1392 = vadd.f32 %v960, %v1264
  %v1393 = vadd.f32 %v961, %v1265
  %v1394 = vadd.f32 %v962, %v1266
  %v1395 = vadd.f32 %v963, %v1267
  %v1396 = vadd.f32 %v964, %v1268
  %v1397 = vadd.f32 %v965, %v1269
  %v1398 = vadd.f32 %v966, %v1270
  %v1399 = vadd.f32 %v967, %v1271
  %v1400 = vadd.f32 %v968, %v1272
  %v1401 = vadd.f32 %v969, %v1273
  %v1402 = vadd.f32 %v970, %v1274
  %v1403 = vadd.f32 %v971, %v1275
  %v1404 = vadd.f32 %v972, %v1276
  %v1405 = vadd.f32 %v973, %v1277
  %v1406 = vadd.f32 %v974, %v1278
  %v1407 = vadd.f32 %v975, %v1279
  %v1408 = vadd.f32 %v976, %v1280
  %v1409 = vadd.f32 %v977, %v1281
  %v1410 = vadd.f32 %v978, %v1282
  %v1411 = vadd.f32 %v979, %v1283
  %v1412 = vadd.f32 %v980, %v1284
  %v1413 = vadd.f32 %v981, %v1285
  %v1414 = vadd.f32 %v982, %v1286
  %v1415 = vadd.f32 %v983, %v1287
  %v1416 = vadd.f32 %v984, %v1288
  %v1417 = vadd.f32 %v985, %v1289
  %v1418 = vadd.f32 %v986, %v1290
  %v1419 = vadd.f32 %v987, %v1291
  %v1420 = vadd.f32 %v988, %v1292
  %v1421 = vadd.f32 %v989, %v1293
  %v1422 = vadd.f32 %v990, %v1294
  %v1423 = vadd.f32 %v991, %v1295
  %v1424 = vadd.f32 %v992, %v1296
  %v1425 = vadd.f32 %v993, %v1297
  %v1426 = vadd.f32 %v994, %v1298
  %v1427 = vadd.f32 %v995, %v1299
  %v1428 = vadd.f32 %v996, %v1300
  %v1429 = vadd.f32 %v997, %v1301
  %v1430 = vadd.f32 %v998, %v1302
  %v1431 = vadd.f32 %v999, %v1303
  %v1432 = vmax.f32 %v1304, 0.0
  %v1433 = vmax.f32 %v1305, 0.0
  %v1434 = vmax.f32 %v1306, 0.0
  %v1435 = vmax.f32 %v1307, 0.0
  %v1436 = vmax.f32 %v1308, 0.0
  %v1437 = vmax.f32 %v1309, 0.0
  %v1438 = vmax.f32 %v1310, 0.0
  %v1439 = vmax.f32 %v1311, 0.0
  %v1440 = vmax.f32 %v1312, 0.0
  %v1441 = vmax.f32 %v1313, 0.0
  %v1442 = vmax.f32 %v1314, 0.0
  %v1443 = vmax.f32 %v1315, 0.0
  %v1444 = vmax.f32 %v1316, 0.0
  %v1445 = vmax.f32 %v1317, 0.0
  %v1446 = vmax.f32 %v1318, 0.0
  %v1447 = vmax.f32 %v1319, 0.0
  %v1448 = vmax.f32 %v1320, 0.0
  %v1449 = vmax.f32 %v1321, 0.0
  %v1450 = vmax.f32 %v1322, 0.0
  %v1451 = vmax.f32 %v1323, 0.0
  %v1452 = vmax.f32 %v1324, 0.0
  %v1453 = vmax.f32 %v1325, 0.0
  %v1454 = vmax.f32 %v1326, 0.0
  %v1455 = vmax.f32 %v1327, 0.0
  %v1456 = vmax.f32 %v1328, 0.0
  %v1457 = vmax.f32 %v1329, 0.0
  %v1458 = vmax.f32 %v1330, 0.0
  %v1459 = vmax.f32 %v1331, 0.0
  %v1460 = vmax.f32 %v1332, 0.0
  %v1461 = vmax.f32 %v1333, 0.0
  %v1462 = vmax.f32 %v1334, 0.0
  %v1463 = vmax.f32 %v1335, 0.0
  %v1464 = vmax.f32 %v1336, 0.0
  %v1465 = vmax.f32 %v1337, 0.0
  %v1466 = vmax.f32 %v1338, 0.0
  %v1467 = vmax.f32 %v1339, 0.0
  %v1468 = vmax.f32 %v1340, 0.0
  %v1469 = vmax.f32 %v1341, 0.0
  %v1470 = vmax.f32 %v1342, 0.0
  %v1471 = vmax.f32 %v1343, 0.0
  %v1472 = vmax.f32 %v1344, 0.0
  %v1473 = vmax.f32 %v1345, 0.0
  %v1474 = vmax.f32 %v1346, 0.0
  %v1475 = vmax.f32 %v1347, 0.0
  %v1476 = vmax.f32 %v1348, 0.0
  %v1477 = vmax.f32 %v1349, 0.0
  %v1478 = vmax.f32 %v1350, 0.0
  %v1479 = vmax.f32 %v1351, 0.0
  %v1480 = vmax.f32 %v1352, 0.0
  %v1481 = vmax.f32 %v1353, 0.0
  %v1482 = vmax.f32 %v1354, 0.0
  %v1483 = vmax.f32 %v1355, 0.0
  %v1484 = vmax.f32 %v1356, 0.0
  %v1485 = vmax.f32 %v1357, 0.0
  %v1486 = vmax.f32 %v1358, 0.0
  %v1487 = vmax.f32 %v1359, 0.0
  %v1488 = vmax.f32 %v1360, 0.0
  %v1489 = vmax.f32 %v1361, 0.0
  %v1490 = vmax.f32 %v1362, 0.0
  %v1491 = vmax.f32 %v1363, 0.0
  %v1492 = vmax.f32 %v1364, 0.0
  %v1493 = vmax.f32 %v1365, 0.0
  %v1494 = vmax.f32 %v1366, 0.0
  %v1495 = vmax.f32 %v1367, 0.0
  %v1496 = vmax.f32 %v1368, 0.0
  %v1497 = vmax.f32 %v1369, 0.0
  %v1498 = vmax.f32 %v1370, 0.0
  %v1499 = vmax.f32 %v1371, 0.0
  %v1500 = vmax.f32 %v1372, 0.0
  %v1501 = vmax.f32 %v1373, 0.0
  %v1502 = vmax.f32 %v1374, 0.0
  %v1503 = vmax.f32 %v1375, 0.0
  %v1504 = vmax.f32 %v1376, 0.0
  %v1505 = vmax.f32 %v1377, 0.0
  %v1506 = vmax.f32 %v1378, 0.0
  %v1507 = vmax.f32 %v1379, 0.0
  %v1508 = vmax.f32 %v1380, 0.0
  %v1509 = vmax.f32 %v1381, 0.0
  %v1510 = vmax.f32 %v1382, 0.0
  %v1511 = vmax.f32 %v1383, 0.0
  %v1512 = vmax.f32 %v1384, 0.0
  %v1513 = vmax.f32 %v1385, 0.0
  %v1514 = vmax.f32 %v1386, 0.0
  %v1515 = vmax.f32 %v1387, 0.0
  %v1516 = vmax.f32 %v1388, 0.0
  %v1517 = vmax.f32 %v1389, 0.0
  %v1518 = vmax.f32 %v1390, 0.0
  %v1519 = vmax.f32 %v1391, 0.0
  %v1520 = vmax.f32 %v1392, 0.0
  %v1521 = vmax.f32 %v1393, 0.0
  %v1522 = vmax.f32 %v1394, 0.0
  %v1523 = vmax.f32 %v1395, 0.0
  %v1524 = vmax.f32 %v1396, 0.0
  %v1525 = vmax.f32 %v1397, 0.0
  %v1526 = vmax.f32 %v1398, 0.0
  %v1527 = vmax.f32 %v1399, 0.0
  %v1528 = vmax.f32 %v1400, 0.0
  %v1529 = vmax.f32 %v1401, 0.0
  %v1530 = vmax.f32 %v1402, 0.0
  %v1531 = vmax.f32 %v1403, 0.0
  %v1532 = vmax.f32 %v1404, 0.0
  %v1533 = vmax.f32 %v1405, 0.0
  %v1534 = vmax.f32 %v1406, 0.0
  %v1535 = vmax.f32 %v1407, 0.0
  %v1536 = vmax.f32 %v1408, 0.0
  %v1537 = vmax.f32 %v1409, 0.0
  %v1538 = vmax.f32 %v1410, 0.0
  %v1539 = vmax.f32 %v1411, 0.0
  %v1540 = vmax.f32 %v1412, 0.0
  %v1541 = vmax.f32 %v1413, 0.0
  %v1542 = vmax.f32 %v1414, 0.0
  %v1543 = vmax.f32 %v1415, 0.0
  %v1544 = vmax.f32 %v1416, 0.0
  %v1545 = vmax.f32 %v1417, 0.0
  %v1546 = vmax.f32 %v1418, 0.0
  %v1547 = vmax.f32 %v1419, 0.0
  %v1548 = vmax.f32 %v1420, 0.0
  %v1549 = vmax.f32 %v1421, 0.0
  %v1550 = vmax.f32 %v1422, 0.0
  %v1551 = vmax.f32 %v1423, 0.0
  %v1552 = vmax.f32 %v1424, 0.0
  %v1553 = vmax.f32 %v1425, 0.0
  %v1554 = vmax.f32 %v1426, 0.0
  %v1555 = vmax.f32 %v1427, 0.0
  %v1556 = vmax.f32 %v1428, 0.0
  %v1557 = vmax.f32 %v1429, 0.0
  %v1558 = vmax.f32 %v1430, 0.0
  %v1559 = vmax.f32 %v1431, 0.0
  %v1560 = vadd.f32 %v1432, %v1433
  %1561 = vadd.xlane.f32.xlu0 %v1560
  %v1562 = vpop.xlane.xlu0 %1561
  %v1563 = vadd.f32 %v1434, %v1435
  %1564 = vadd.xlane.f32.xlu0 %v1563
  %v1565 = vpop.xlane.xlu0 %1564
  %v1566 = vadd.f32 %v1436, %v1437
  %1567 = vadd.xlane.f32.xlu0 %v1566
  %v1568 = vpop.xlane.xlu0 %1567
  %v1569 = vadd.f32 %v1438, %v1439
  %1570 = vadd.xlane.f32.xlu0 %v1569
  %v1571 = vpop.xlane.xlu0 %1570
  %v1572 = vadd.f32 %v1440, %v1441
  %1573 = vadd.xlane.f32.xlu0 %v1572
  %v1574 = vpop.xlane.xlu0 %1573
  %v1575 = vadd.f32 %v1442, %v1443
  %1576 = vadd.xlane.f32.xlu0 %v1575
  %v1577 = vpop.xlane.xlu0 %1576
  %v1578 = vadd.f32 %v1444, %v1445
  %1579 = vadd.xlane.f32.xlu0 %v1578
  %v1580 = vpop.xlane.xlu0 %1579
  %v1581 = vadd.f32 %v1446, %v1447
  %1582 = vadd.xlane.f32.xlu0 %v1581
  %v1583 = vpop.xlane.xlu0 %1582
  %v1584 = vadd.f32 %v1448, %v1449
  %1585 = vadd.xlane.f32.xlu0 %v1584
  %v1586 = vpop.xlane.xlu0 %1585
  %v1587 = vadd.f32 %v1450, %v1451
  %1588 = vadd.xlane.f32.xlu0 %v1587
  %v1589 = vpop.xlane.xlu0 %1588
  %v1590 = vadd.f32 %v1452, %v1453
  %1591 = vadd.xlane.f32.xlu0 %v1590
  %v1592 = vpop.xlane.xlu0 %1591
  %v1593 = vadd.f32 %v1454, %v1455
  %1594 = vadd.xlane.f32.xlu0 %v1593
  %v1595 = vpop.xlane.xlu0 %1594
  %v1596 = vadd.f32 %v1456, %v1457
  %1597 = vadd.xlane.f32.xlu0 %v1596
  %v1598 = vpop.xlane.xlu0 %1597
  %v1599 = vadd.f32 %v1458, %v1459
  %1600 = vadd.xlane.f32.xlu0 %v1599
  %v1601 = vpop.xlane.xlu0 %1600
  %v1602 = vadd.f32 %v1460, %v1461
  %1603 = vadd.xlane.f32.xlu0 %v1602
  %v1604 = vpop.xlane.xlu0 %1603
  %v1605 = vadd.f32 %v1462, %v1463
  %1606 = vadd.xlane.f32.xlu0 %v1605
  %v1607 = vpop.xlane.xlu0 %1606
  %v1608 = vadd.f32 %v1464, %v1465
  %1609 = vadd.xlane.f32.xlu0 %v1608
  %v1610 = vpop.xlane.xlu0 %1609
  %v1611 = vadd.f32 %v1466, %v1467
  %1612 = vadd.xlane.f32.xlu0 %v1611
  %v1613 = vpop.xlane.xlu0 %1612
  %v1614 = vadd.f32 %v1468, %v1469
  %1615 = vadd.xlane.f32.xlu0 %v1614
  %v1616 = vpop.xlane.xlu0 %1615
  %v1617 = vadd.f32 %v1470, %v1471
  %1618 = vadd.xlane.f32.xlu0 %v1617
  %v1619 = vpop.xlane.xlu0 %1618
  %v1620 = vadd.f32 %v1472, %v1473
  %1621 = vadd.xlane.f32.xlu0 %v1620
  %v1622 = vpop.xlane.xlu0 %1621
  %v1623 = vadd.f32 %v1474, %v1475
  %1624 = vadd.xlane.f32.xlu0 %v1623
  %v1625 = vpop.xlane.xlu0 %1624
  %v1626 = vadd.f32 %v1476, %v1477
  %1627 = vadd.xlane.f32.xlu0 %v1626
  %v1628 = vpop.xlane.xlu0 %1627
  %v1629 = vadd.f32 %v1478, %v1479
  %1630 = vadd.xlane.f32.xlu0 %v1629
  %v1631 = vpop.xlane.xlu0 %1630
  %v1632 = vadd.f32 %v1480, %v1481
  %1633 = vadd.xlane.f32.xlu0 %v1632
  %v1634 = vpop.xlane.xlu0 %1633
  %v1635 = vadd.f32 %v1482, %v1483
  %1636 = vadd.xlane.f32.xlu0 %v1635
  %v1637 = vpop.xlane.xlu0 %1636
  %v1638 = vadd.f32 %v1484, %v1485
  %1639 = vadd.xlane.f32.xlu0 %v1638
  %v1640 = vpop.xlane.xlu0 %1639
  %v1641 = vadd.f32 %v1486, %v1487
  %1642 = vadd.xlane.f32.xlu0 %v1641
  %v1643 = vpop.xlane.xlu0 %1642
  %v1644 = vadd.f32 %v1488, %v1489
  %1645 = vadd.xlane.f32.xlu0 %v1644
  %v1646 = vpop.xlane.xlu0 %1645
  %v1647 = vadd.f32 %v1490, %v1491
  %1648 = vadd.xlane.f32.xlu0 %v1647
  %v1649 = vpop.xlane.xlu0 %1648
  %v1650 = vadd.f32 %v1492, %v1493
  %1651 = vadd.xlane.f32.xlu0 %v1650
  %v1652 = vpop.xlane.xlu0 %1651
  %v1653 = vadd.f32 %v1494, %v1495
  %1654 = vadd.xlane.f32.xlu0 %v1653
  %v1655 = vpop.xlane.xlu0 %1654
  %v1656 = vadd.f32 %v1496, %v1497
  %1657 = vadd.xlane.f32.xlu0 %v1656
  %v1658 = vpop.xlane.xlu0 %1657
  %v1659 = vadd.f32 %v1498, %v1499
  %1660 = vadd.xlane.f32.xlu0 %v1659
  %v1661 = vpop.xlane.xlu0 %1660
  %v1662 = vadd.f32 %v1500, %v1501
  %1663 = vadd.xlane.f32.xlu0 %v1662
  %v1664 = vpop.xlane.xlu0 %1663
  %v1665 = vadd.f32 %v1502, %v1503
  %1666 = vadd.xlane.f32.xlu0 %v1665
  %v1667 = vpop.xlane.xlu0 %1666
  %v1668 = vadd.f32 %v1504, %v1505
  %1669 = vadd.xlane.f32.xlu0 %v1668
  %v1670 = vpop.xlane.xlu0 %1669
  %v1671 = vadd.f32 %v1506, %v1507
  %1672 = vadd.xlane.f32.xlu0 %v1671
  %v1673 = vpop.xlane.xlu0 %1672
  %v1674 = vadd.f32 %v1508, %v1509
  %1675 = vadd.xlane.f32.xlu0 %v1674
  %v1676 = vpop.xlane.xlu0 %1675
  %v1677 = vadd.f32 %v1510, %v1511
  %1678 = vadd.xlane.f32.xlu0 %v1677
  %v1679 = vpop.xlane.xlu0 %1678
  %v1680 = vadd.f32 %v1512, %v1513
  %1681 = vadd.xlane.f32.xlu0 %v1680
  %v1682 = vpop.xlane.xlu0 %1681
  %v1683 = vadd.f32 %v1514, %v1515
  %1684 = vadd.xlane.f32.xlu0 %v1683
  %v1685 = vpop.xlane.xlu0 %1684
  %v1686 = vadd.f32 %v1516, %v1517
  %1687 = vadd.xlane.f32.xlu0 %v1686
  %v1688 = vpop.xlane.xlu0 %1687
  %v1689 = vadd.f32 %v1518, %v1519
  %1690 = vadd.xlane.f32.xlu0 %v1689
  %v1691 = vpop.xlane.xlu0 %1690
  %v1692 = vadd.f32 %v1520, %v1521
  %1693 = vadd.xlane.f32.xlu0 %v1692
  %v1694 = vpop.xlane.xlu0 %1693
  %v1695 = vadd.f32 %v1522, %v1523
  %1696 = vadd.xlane.f32.xlu0 %v1695
  %v1697 = vpop.xlane.xlu0 %1696
  %v1698 = vadd.f32 %v1524, %v1525
  %1699 = vadd.xlane.f32.xlu0 %v1698
  %v1700 = vpop.xlane.xlu0 %1699
  %v1701 = vadd.f32 %v1526, %v1527
  %1702 = vadd.xlane.f32.xlu0 %v1701
  %v1703 = vpop.xlane.xlu0 %1702
  %v1704 = vadd.f32 %v1528, %v1529
  %1705 = vadd.xlane.f32.xlu0 %v1704
  %v1706 = vpop.xlane.xlu0 %1705
  %v1707 = vadd.f32 %v1530, %v1531
  %1708 = vadd.xlane.f32.xlu0 %v1707
  %v1709 = vpop.xlane.xlu0 %1708
  %v1710 = vadd.f32 %v1532, %v1533
  %1711 = vadd.xlane.f32.xlu0 %v1710
  %v1712 = vpop.xlane.xlu0 %1711
  %v1713 = vadd.f32 %v1534, %v1535
  %1714 = vadd.xlane.f32.xlu0 %v1713
  %v1715 = vpop.xlane.xlu0 %1714
  %v1716 = vadd.f32 %v1536, %v1537
  %1717 = vadd.xlane.f32.xlu0 %v1716
  %v1718 = vpop.xlane.xlu0 %1717
  %v1719 = vadd.f32 %v1538, %v1539
  %1720 = vadd.xlane.f32.xlu0 %v1719
  %v1721 = vpop.xlane.xlu0 %1720
  %v1722 = vadd.f32 %v1540, %v1541
  %1723 = vadd.xlane.f32.xlu0 %v1722
  %v1724 = vpop.xlane.xlu0 %1723
  %v1725 = vadd.f32 %v1542, %v1543
  %1726 = vadd.xlane.f32.xlu0 %v1725
  %v1727 = vpop.xlane.xlu0 %1726
  %v1728 = vadd.f32 %v1544, %v1545
  %1729 = vadd.xlane.f32.xlu0 %v1728
  %v1730 = vpop.xlane.xlu0 %1729
  %v1731 = vadd.f32 %v1546, %v1547
  %1732 = vadd.xlane.f32.xlu0 %v1731
  %v1733 = vpop.xlane.xlu0 %1732
  %v1734 = vadd.f32 %v1548, %v1549
  %1735 = vadd.xlane.f32.xlu0 %v1734
  %v1736 = vpop.xlane.xlu0 %1735
  %v1737 = vadd.f32 %v1550, %v1551
  %1738 = vadd.xlane.f32.xlu0 %v1737
  %v1739 = vpop.xlane.xlu0 %1738
  %v1740 = vadd.f32 %v1552, %v1553
  %1741 = vadd.xlane.f32.xlu0 %v1740
  %v1742 = vpop.xlane.xlu0 %1741
  %v1743 = vadd.f32 %v1554, %v1555
  %1744 = vadd.xlane.f32.xlu0 %v1743
  %v1745 = vpop.xlane.xlu0 %1744
  %v1746 = vadd.f32 %v1556, %v1557
  %1747 = vadd.xlane.f32.xlu0 %v1746
  %v1748 = vpop.xlane.xlu0 %1747
  %v1749 = vadd.f32 %v1558, %v1559
  %1750 = vadd.xlane.f32.xlu0 %v1749
  %v1751 = vpop.xlane.xlu0 %1750
  %v1752 = vmul.f32 %v1562, 0.00390625
  %v1753 = vmul.f32 %v1565, 0.00390625
  %v1754 = vmul.f32 %v1568, 0.00390625
  %v1755 = vmul.f32 %v1571, 0.00390625
  %v1756 = vmul.f32 %v1574, 0.00390625
  %v1757 = vmul.f32 %v1577, 0.00390625
  %v1758 = vmul.f32 %v1580, 0.00390625
  %v1759 = vmul.f32 %v1583, 0.00390625
  %v1760 = vmul.f32 %v1586, 0.00390625
  %v1761 = vmul.f32 %v1589, 0.00390625
  %v1762 = vmul.f32 %v1592, 0.00390625
  %v1763 = vmul.f32 %v1595, 0.00390625
  %v1764 = vmul.f32 %v1598, 0.00390625
  %v1765 = vmul.f32 %v1601, 0.00390625
  %v1766 = vmul.f32 %v1604, 0.00390625
  %v1767 = vmul.f32 %v1607, 0.00390625
  %v1768 = vmul.f32 %v1610, 0.00390625
  %v1769 = vmul.f32 %v1613, 0.00390625
  %v1770 = vmul.f32 %v1616, 0.00390625
  %v1771 = vmul.f32 %v1619, 0.00390625
  %v1772 = vmul.f32 %v1622, 0.00390625
  %v1773 = vmul.f32 %v1625, 0.00390625
  %v1774 = vmul.f32 %v1628, 0.00390625
  %v1775 = vmul.f32 %v1631, 0.00390625
  %v1776 = vmul.f32 %v1634, 0.00390625
  %v1777 = vmul.f32 %v1637, 0.00390625
  %v1778 = vmul.f32 %v1640, 0.00390625
  %v1779 = vmul.f32 %v1643, 0.00390625
  %v1780 = vmul.f32 %v1646, 0.00390625
  %v1781 = vmul.f32 %v1649, 0.00390625
  %v1782 = vmul.f32 %v1652, 0.00390625
  %v1783 = vmul.f32 %v1655, 0.00390625
  %v1784 = vmul.f32 %v1658, 0.00390625
  %v1785 = vmul.f32 %v1661, 0.00390625
  %v1786 = vmul.f32 %v1664, 0.00390625
  %v1787 = vmul.f32 %v1667, 0.00390625
  %v1788 = vmul.f32 %v1670, 0.00390625
  %v1789 = vmul.f32 %v1673, 0.00390625
  %v1790 = vmul.f32 %v1676, 0.00390625
  %v1791 = vmul.f32 %v1679, 0.00390625
  %v1792 = vmul.f32 %v1682, 0.00390625
  %v1793 = vmul.f32 %v1685, 0.00390625
  %v1794 = vmul.f32 %v1688, 0.00390625
  %v1795 = vmul.f32 %v1691, 0.00390625
  %v1796 = vmul.f32 %v1694, 0.00390625
  %v1797 = vmul.f32 %v1697, 0.00390625
  %v1798 = vmul.f32 %v1700, 0.00390625
  %v1799 = vmul.f32 %v1703, 0.00390625
  %v1800 = vmul.f32 %v1706, 0.00390625
  %v1801 = vmul.f32 %v1709, 0.00390625
  %v1802 = vmul.f32 %v1712, 0.00390625
  %v1803 = vmul.f32 %v1715, 0.00390625
  %v1804 = vmul.f32 %v1718, 0.00390625
  %v1805 = vmul.f32 %v1721, 0.00390625
  %v1806 = vmul.f32 %v1724, 0.00390625
  %v1807 = vmul.f32 %v1727, 0.00390625
  %v1808 = vmul.f32 %v1730, 0.00390625
  %v1809 = vmul.f32 %v1733, 0.00390625
  %v1810 = vmul.f32 %v1736, 0.00390625
  %v1811 = vmul.f32 %v1739, 0.00390625
  %v1812 = vmul.f32 %v1742, 0.00390625
  %v1813 = vmul.f32 %v1745, 0.00390625
  %v1814 = vmul.f32 %v1748, 0.00390625
  %v1815 = vmul.f32 %v1751, 0.00390625
  %v1816 = vld [vmem:[%s1] sm:$0xff]
  %v1881 = vlaneseq
  %v1882 = vand.u32 %v1881, 127
  %v1883 = vlaneseq
  %v1884 = vshrl.u32 %v1883, 7
  %v1885 = vsub.s32 %v1882, %v1884
  %v1886 = vrot.slane %v1752, %v1885
  %v1887 = vadd.s32 %v1882, 4294967288
  %v1888 = vlaneseq
  %v1889 = vshrl.u32 %v1888, 7
  %v1890 = vsub.s32 %v1887, %v1889
  %v1891 = vrot.slane %v1753, %v1890
  %vm1892 = vcmask 130112
  %v1893 = vsel %vm1892, %v1891, %v1886
  %v1894 = vadd.s32 %v1882, 4294967280
  %v1895 = vlaneseq
  %v1896 = vshrl.u32 %v1895, 7
  %v1897 = vsub.s32 %v1894, %v1896
  %v1898 = vrot.slane %v1754, %v1897
  %vm1899 = vcmask 195712
  %v1900 = vsel %vm1899, %v1898, %v1893
  %v1901 = vadd.s32 %v1882, 4294967272
  %v1902 = vlaneseq
  %v1903 = vshrl.u32 %v1902, 7
  %v1904 = vsub.s32 %v1901, %v1903
  %v1905 = vrot.slane %v1755, %v1904
  %vm1906 = vcmask 261312
  %v1907 = vsel %vm1906, %v1905, %v1900
  %v1908 = vadd.s32 %v1882, 4294967264
  %v1909 = vlaneseq
  %v1910 = vshrl.u32 %v1909, 7
  %v1911 = vsub.s32 %v1908, %v1910
  %v1912 = vrot.slane %v1756, %v1911
  %vm1913 = vcmask 326912
  %v1914 = vsel %vm1913, %v1912, %v1907
  %v1915 = vadd.s32 %v1882, 4294967256
  %v1916 = vlaneseq
  %v1917 = vshrl.u32 %v1916, 7
  %v1918 = vsub.s32 %v1915, %v1917
  %v1919 = vrot.slane %v1757, %v1918
  %vm1920 = vcmask 392512
  %v1921 = vsel %vm1920, %v1919, %v1914
  %v1922 = vadd.s32 %v1882, 4294967248
  %v1923 = vlaneseq
  %v1924 = vshrl.u32 %v1923, 7
  %v1925 = vsub.s32 %v1922, %v1924
  %v1926 = vrot.slane %v1758, %v1925
  %vm1927 = vcmask 458112
  %v1928 = vsel %vm1927, %v1926, %v1921
  %v1929 = vadd.s32 %v1882, 4294967240
  %v1930 = vlaneseq
  %v1931 = vshrl.u32 %v1930, 7
  %v1932 = vsub.s32 %v1929, %v1931
  %v1933 = vrot.slane %v1759, %v1932
  %vm1934 = vcmask 523712
  %v1935 = vsel %vm1934, %v1933, %v1928
  %v1936 = vlaneseq
  %v1937 = vshrl.u32 %v1936, 7
  %v1938 = vsub.s32 %v1882, %v1937
  %v1939 = vrot.slane %v1760, %v1938
  %v1940 = vlaneseq
  %v1941 = vshrl.u32 %v1940, 7
  %v1942 = vsub.s32 %v1887, %v1941
  %v1943 = vrot.slane %v1761, %v1942
  %v1944 = vsel %vm1892, %v1943, %v1939
  %v1945 = vlaneseq
  %v1946 = vshrl.u32 %v1945, 7
  %v1947 = vsub.s32 %v1894, %v1946
  %v1948 = vrot.slane %v1762, %v1947
  %v1949 = vsel %vm1899, %v1948, %v1944
  %v1950 = vlaneseq
  %v1951 = vshrl.u32 %v1950, 7
  %v1952 = vsub.s32 %v1901, %v1951
  %v1953 = vrot.slane %v1763, %v1952
  %v1954 = vsel %vm1906, %v1953, %v1949
  %v1955 = vlaneseq
  %v1956 = vshrl.u32 %v1955, 7
  %v1957 = vsub.s32 %v1908, %v1956
  %v1958 = vrot.slane %v1764, %v1957
  %v1959 = vsel %vm1913, %v1958, %v1954
  %v1960 = vlaneseq
  %v1961 = vshrl.u32 %v1960, 7
  %v1962 = vsub.s32 %v1915, %v1961
  %v1963 = vrot.slane %v1765, %v1962
  %v1964 = vsel %vm1920, %v1963, %v1959
  %v1965 = vlaneseq
  %v1966 = vshrl.u32 %v1965, 7
  %v1967 = vsub.s32 %v1922, %v1966
  %v1968 = vrot.slane %v1766, %v1967
  %v1969 = vsel %vm1927, %v1968, %v1964
  %v1970 = vlaneseq
  %v1971 = vshrl.u32 %v1970, 7
  %v1972 = vsub.s32 %v1929, %v1971
  %v1973 = vrot.slane %v1767, %v1972
  %v1974 = vsel %vm1934, %v1973, %v1969
  %v1975 = vlaneseq
  %v1976 = vshrl.u32 %v1975, 7
  %v1977 = vsub.s32 %v1882, %v1976
  %v1978 = vrot.slane %v1768, %v1977
  %v1979 = vlaneseq
  %v1980 = vshrl.u32 %v1979, 7
  %v1981 = vsub.s32 %v1887, %v1980
  %v1982 = vrot.slane %v1769, %v1981
  %v1983 = vsel %vm1892, %v1982, %v1978
  %v1984 = vlaneseq
  %v1985 = vshrl.u32 %v1984, 7
  %v1986 = vsub.s32 %v1894, %v1985
  %v1987 = vrot.slane %v1770, %v1986
  %v1988 = vsel %vm1899, %v1987, %v1983
  %v1989 = vlaneseq
  %v1990 = vshrl.u32 %v1989, 7
  %v1991 = vsub.s32 %v1901, %v1990
  %v1992 = vrot.slane %v1771, %v1991
  %v1993 = vsel %vm1906, %v1992, %v1988
  %v1994 = vlaneseq
  %v1995 = vshrl.u32 %v1994, 7
  %v1996 = vsub.s32 %v1908, %v1995
  %v1997 = vrot.slane %v1772, %v1996
  %v1998 = vsel %vm1913, %v1997, %v1993
  %v1999 = vlaneseq
  %v2000 = vshrl.u32 %v1999, 7
  %v2001 = vsub.s32 %v1915, %v2000
  %v2002 = vrot.slane %v1773, %v2001
  %v2003 = vsel %vm1920, %v2002, %v1998
  %v2004 = vlaneseq
  %v2005 = vshrl.u32 %v2004, 7
  %v2006 = vsub.s32 %v1922, %v2005
  %v2007 = vrot.slane %v1774, %v2006
  %v2008 = vsel %vm1927, %v2007, %v2003
  %v2009 = vlaneseq
  %v2010 = vshrl.u32 %v2009, 7
  %v2011 = vsub.s32 %v1929, %v2010
  %v2012 = vrot.slane %v1775, %v2011
  %v2013 = vsel %vm1934, %v2012, %v2008
  %v2014 = vlaneseq
  %v2015 = vshrl.u32 %v2014, 7
  %v2016 = vsub.s32 %v1882, %v2015
  %v2017 = vrot.slane %v1776, %v2016
  %v2018 = vlaneseq
  %v2019 = vshrl.u32 %v2018, 7
  %v2020 = vsub.s32 %v1887, %v2019
  %v2021 = vrot.slane %v1777, %v2020
  %v2022 = vsel %vm1892, %v2021, %v2017
  %v2023 = vlaneseq
  %v2024 = vshrl.u32 %v2023, 7
  %v2025 = vsub.s32 %v1894, %v2024
  %v2026 = vrot.slane %v1778, %v2025
  %v2027 = vsel %vm1899, %v2026, %v2022
  %v2028 = vlaneseq
  %v2029 = vshrl.u32 %v2028, 7
  %v2030 = vsub.s32 %v1901, %v2029
  %v2031 = vrot.slane %v1779, %v2030
  %v2032 = vsel %vm1906, %v2031, %v2027
  %v2033 = vlaneseq
  %v2034 = vshrl.u32 %v2033, 7
  %v2035 = vsub.s32 %v1908, %v2034
  %v2036 = vrot.slane %v1780, %v2035
  %v2037 = vsel %vm1913, %v2036, %v2032
  %v2038 = vlaneseq
  %v2039 = vshrl.u32 %v2038, 7
  %v2040 = vsub.s32 %v1915, %v2039
  %v2041 = vrot.slane %v1781, %v2040
  %v2042 = vsel %vm1920, %v2041, %v2037
  %v2043 = vlaneseq
  %v2044 = vshrl.u32 %v2043, 7
  %v2045 = vsub.s32 %v1922, %v2044
  %v2046 = vrot.slane %v1782, %v2045
  %v2047 = vsel %vm1927, %v2046, %v2042
  %v2048 = vlaneseq
  %v2049 = vshrl.u32 %v2048, 7
  %v2050 = vsub.s32 %v1929, %v2049
  %v2051 = vrot.slane %v1783, %v2050
  %v2052 = vsel %vm1934, %v2051, %v2047
  %v2053 = vlaneseq
  %v2054 = vshrl.u32 %v2053, 7
  %v2055 = vsub.s32 %v1882, %v2054
  %v2056 = vrot.slane %v1784, %v2055
  %v2057 = vlaneseq
  %v2058 = vshrl.u32 %v2057, 7
  %v2059 = vsub.s32 %v1887, %v2058
  %v2060 = vrot.slane %v1785, %v2059
  %v2061 = vsel %vm1892, %v2060, %v2056
  %v2062 = vlaneseq
  %v2063 = vshrl.u32 %v2062, 7
  %v2064 = vsub.s32 %v1894, %v2063
  %v2065 = vrot.slane %v1786, %v2064
  %v2066 = vsel %vm1899, %v2065, %v2061
  %v2067 = vlaneseq
  %v2068 = vshrl.u32 %v2067, 7
  %v2069 = vsub.s32 %v1901, %v2068
  %v2070 = vrot.slane %v1787, %v2069
  %v2071 = vsel %vm1906, %v2070, %v2066
  %v2072 = vlaneseq
  %v2073 = vshrl.u32 %v2072, 7
  %v2074 = vsub.s32 %v1908, %v2073
  %v2075 = vrot.slane %v1788, %v2074
  %v2076 = vsel %vm1913, %v2075, %v2071
  %v2077 = vlaneseq
  %v2078 = vshrl.u32 %v2077, 7
  %v2079 = vsub.s32 %v1915, %v2078
  %v2080 = vrot.slane %v1789, %v2079
  %v2081 = vsel %vm1920, %v2080, %v2076
  %v2082 = vlaneseq
  %v2083 = vshrl.u32 %v2082, 7
  %v2084 = vsub.s32 %v1922, %v2083
  %v2085 = vrot.slane %v1790, %v2084
  %v2086 = vsel %vm1927, %v2085, %v2081
  %v2087 = vlaneseq
  %v2088 = vshrl.u32 %v2087, 7
  %v2089 = vsub.s32 %v1929, %v2088
  %v2090 = vrot.slane %v1791, %v2089
  %v2091 = vsel %vm1934, %v2090, %v2086
  %v2092 = vlaneseq
  %v2093 = vshrl.u32 %v2092, 7
  %v2094 = vsub.s32 %v1882, %v2093
  %v2095 = vrot.slane %v1792, %v2094
  %v2096 = vlaneseq
  %v2097 = vshrl.u32 %v2096, 7
  %v2098 = vsub.s32 %v1887, %v2097
  %v2099 = vrot.slane %v1793, %v2098
  %v2100 = vsel %vm1892, %v2099, %v2095
  %v2101 = vlaneseq
  %v2102 = vshrl.u32 %v2101, 7
  %v2103 = vsub.s32 %v1894, %v2102
  %v2104 = vrot.slane %v1794, %v2103
  %v2105 = vsel %vm1899, %v2104, %v2100
  %v2106 = vlaneseq
  %v2107 = vshrl.u32 %v2106, 7
  %v2108 = vsub.s32 %v1901, %v2107
  %v2109 = vrot.slane %v1795, %v2108
  %v2110 = vsel %vm1906, %v2109, %v2105
  %v2111 = vlaneseq
  %v2112 = vshrl.u32 %v2111, 7
  %v2113 = vsub.s32 %v1908, %v2112
  %v2114 = vrot.slane %v1796, %v2113
  %v2115 = vsel %vm1913, %v2114, %v2110
  %v2116 = vlaneseq
  %v2117 = vshrl.u32 %v2116, 7
  %v2118 = vsub.s32 %v1915, %v2117
  %v2119 = vrot.slane %v1797, %v2118
  %v2120 = vsel %vm1920, %v2119, %v2115
  %v2121 = vlaneseq
  %v2122 = vshrl.u32 %v2121, 7
  %v2123 = vsub.s32 %v1922, %v2122
  %v2124 = vrot.slane %v1798, %v2123
  %v2125 = vsel %vm1927, %v2124, %v2120
  %v2126 = vlaneseq
  %v2127 = vshrl.u32 %v2126, 7
  %v2128 = vsub.s32 %v1929, %v2127
  %v2129 = vrot.slane %v1799, %v2128
  %v2130 = vsel %vm1934, %v2129, %v2125
  %v2131 = vlaneseq
  %v2132 = vshrl.u32 %v2131, 7
  %v2133 = vsub.s32 %v1882, %v2132
  %v2134 = vrot.slane %v1800, %v2133
  %v2135 = vlaneseq
  %v2136 = vshrl.u32 %v2135, 7
  %v2137 = vsub.s32 %v1887, %v2136
  %v2138 = vrot.slane %v1801, %v2137
  %v2139 = vsel %vm1892, %v2138, %v2134
  %v2140 = vlaneseq
  %v2141 = vshrl.u32 %v2140, 7
  %v2142 = vsub.s32 %v1894, %v2141
  %v2143 = vrot.slane %v1802, %v2142
  %v2144 = vsel %vm1899, %v2143, %v2139
  %v2145 = vlaneseq
  %v2146 = vshrl.u32 %v2145, 7
  %v2147 = vsub.s32 %v1901, %v2146
  %v2148 = vrot.slane %v1803, %v2147
  %v2149 = vsel %vm1906, %v2148, %v2144
  %v2150 = vlaneseq
  %v2151 = vshrl.u32 %v2150, 7
  %v2152 = vsub.s32 %v1908, %v2151
  %v2153 = vrot.slane %v1804, %v2152
  %v2154 = vsel %vm1913, %v2153, %v2149
  %v2155 = vlaneseq
  %v2156 = vshrl.u32 %v2155, 7
  %v2157 = vsub.s32 %v1915, %v2156
  %v2158 = vrot.slane %v1805, %v2157
  %v2159 = vsel %vm1920, %v2158, %v2154
  %v2160 = vlaneseq
  %v2161 = vshrl.u32 %v2160, 7
  %v2162 = vsub.s32 %v1922, %v2161
  %v2163 = vrot.slane %v1806, %v2162
  %v2164 = vsel %vm1927, %v2163, %v2159
  %v2165 = vlaneseq
  %v2166 = vshrl.u32 %v2165, 7
  %v2167 = vsub.s32 %v1929, %v2166
  %v2168 = vrot.slane %v1807, %v2167
  %v2169 = vsel %vm1934, %v2168, %v2164
  %v2170 = vlaneseq
  %v2171 = vshrl.u32 %v2170, 7
  %v2172 = vsub.s32 %v1882, %v2171
  %v2173 = vrot.slane %v1808, %v2172
  %v2174 = vlaneseq
  %v2175 = vshrl.u32 %v2174, 7
  %v2176 = vsub.s32 %v1887, %v2175
  %v2177 = vrot.slane %v1809, %v2176
  %v2178 = vsel %vm1892, %v2177, %v2173
  %v2179 = vlaneseq
  %v2180 = vshrl.u32 %v2179, 7
  %v2181 = vsub.s32 %v1894, %v2180
  %v2182 = vrot.slane %v1810, %v2181
  %v2183 = vsel %vm1899, %v2182, %v2178
  %v2184 = vlaneseq
  %v2185 = vshrl.u32 %v2184, 7
  %v2186 = vsub.s32 %v1901, %v2185
  %v2187 = vrot.slane %v1811, %v2186
  %v2188 = vsel %vm1906, %v2187, %v2183
  %v2189 = vlaneseq
  %v2190 = vshrl.u32 %v2189, 7
  %v2191 = vsub.s32 %v1908, %v2190
  %v2192 = vrot.slane %v1812, %v2191
  %v2193 = vsel %vm1913, %v2192, %v2188
  %v2194 = vlaneseq
  %v2195 = vshrl.u32 %v2194, 7
  %v2196 = vsub.s32 %v1915, %v2195
  %v2197 = vrot.slane %v1813, %v2196
  %v2198 = vsel %vm1920, %v2197, %v2193
  %v2199 = vlaneseq
  %v2200 = vshrl.u32 %v2199, 7
  %v2201 = vsub.s32 %v1922, %v2200
  %v2202 = vrot.slane %v1814, %v2201
  %v2203 = vsel %vm1927, %v2202, %v2198
  %v2204 = vlaneseq
  %v2205 = vshrl.u32 %v2204, 7
  %v2206 = vsub.s32 %v1929, %v2205
  %v2207 = vrot.slane %v1815, %v2206
  %v2208 = vsel %vm1934, %v2207, %v2203
  %vm2209 = vcmask 1041409
  %v2210 = vsel %vm2209, %v1974, %v1935
  %vm2211 = vcmask 1042434
  %v2212 = vsel %vm2211, %v2013, %v2210
  %vm2213 = vcmask 1043459
  %v2214 = vsel %vm2213, %v2052, %v2212
  %vm2215 = vcmask 1044484
  %v2216 = vsel %vm2215, %v2091, %v2214
  %vm2217 = vcmask 1045509
  %v2218 = vsel %vm2217, %v2130, %v2216
  %vm2219 = vcmask 1046534
  %v2220 = vsel %vm2219, %v2169, %v2218
  %vm2221 = vcmask 1047559
  %v2222 = vsel %vm2221, %v2208, %v2220
  %vm2224 = vcmask 64512
  %v2226 = vsel %vm2224, %v1816, 0
  %2228 = vmatprep.subr.mxu0 0.0
  %2229 = vmatpush1.msra.mxu0 %v2222
  %2230 = vmatprep.subr.mxu0 0.0
  %2231 = vmatpush1.msra.mxu0 0.0
  %2232 = vmatprep.subr.mxu0 0.0
  %2233 = vmatpush1.msra.mxu0 0.0
  %2234 = vmatprep.subr.mxu0 0.0
  %2235 = vmatpush1.msra.mxu0 0.0
  %2236 = vmatprep.subr.mxu0 0.0
  %2237 = vmatpush1.msra.mxu0 0.0
  %2238 = vmatprep.subr.mxu0 0.0
  %2239 = vmatpush1.msra.mxu0 0.0
  %2240 = vmatprep.subr.mxu0 0.0
  %2241 = vmatpush1.msra.mxu0 0.0
  %2242 = vmatprep.subr.mxu0 0.0
  %2243 = vmatpush1.msra.mxu0 0.0
  %2244 = vmatprep.subr.mxu0 0.0
  %2245 = vmatpush1.msra.mxu0 0.0
  %2246 = vmatprep.subr.mxu0 0.0
  %2247 = vmatpush1.msra.mxu0 0.0
  %2248 = vmatprep.subr.mxu0 0.0
  %2249 = vmatpush1.msra.mxu0 0.0
  %2250 = vmatprep.subr.mxu0 0.0
  %2251 = vmatpush1.msra.mxu0 0.0
  %2252 = vmatprep.subr.mxu0 0.0
  %2253 = vmatpush1.msra.mxu0 0.0
  %2254 = vmatprep.subr.mxu0 0.0
  %2255 = vmatpush1.msra.mxu0 0.0
  %2256 = vmatprep.subr.mxu0 0.0
  %2257 = vmatpush1.msra.mxu0 0.0
  %2258 = vmatprep.subr.mxu0 0.0
  %2259 = vmatpush1.msra.mxu0 0.0
  %2260 = vmatprep.subr.mxu0 0.0
  %2261 = vmatpush1.msra.mxu0 0.0
  %2262 = vmatprep.subr.mxu0 0.0
  %2263 = vmatpush1.msra.mxu0 0.0
  %2264 = vmatprep.subr.mxu0 0.0
  %2265 = vmatpush1.msra.mxu0 0.0
  %2266 = vmatprep.subr.mxu0 0.0
  %2267 = vmatpush1.msra.mxu0 0.0
  %2268 = vmatprep.subr.mxu0 0.0
  %2269 = vmatpush1.msra.mxu0 0.0
  %2270 = vmatprep.subr.mxu0 0.0
  %2271 = vmatpush1.msra.mxu0 0.0
  %2272 = vmatprep.subr.mxu0 0.0
  %2273 = vmatpush1.msra.mxu0 0.0
  %2274 = vmatprep.subr.mxu0 0.0
  %2275 = vmatpush1.msra.mxu0 0.0
  %2276 = vmatprep.subr.mxu0 0.0
  %2277 = vmatpush1.msra.mxu0 0.0
  %2278 = vmatprep.subr.mxu0 0.0
  %2279 = vmatpush1.msra.mxu0 0.0
  %2280 = vmatprep.subr.mxu0 0.0
  %2281 = vmatpush1.msra.mxu0 0.0
  %2282 = vmatprep.subr.mxu0 0.0
  %2283 = vmatpush1.msra.mxu0 0.0
  %2284 = vmatprep.subr.mxu0 0.0
  %2285 = vmatpush1.msra.mxu0 0.0
  %2286 = vmatprep.subr.mxu0 0.0
  %2287 = vmatpush1.msra.mxu0 0.0
  %2288 = vmatprep.subr.mxu0 0.0
  %2289 = vmatpush1.msra.mxu0 0.0
  %2290 = vmatprep.subr.mxu0 0.0
  %2291 = vmatpush1.msra.mxu0 0.0
  %2292 = vmatprep.mubr.f32.mxu0 0.0
  %2293 = vmatmul.mubr.f32.gmra.mrb[0].mxu0 %v2226
  %v2294 = vpop.f32.mrb[0].mxu0
  %v2295 = vadd.f32 0.0, %v2294
  %v2296 = vpop.f32.mrb[0].mxu0
  %2297 = vdwg.mxu0
  %v2298 = vld [vmem:[%s4] sm:$0xff]
  %v2299 = vld [vmem:[%s4 + $0x8] sm:$0xff]
  %v2300 = vld [vmem:[%s4 + $0x10] sm:$0xff]
  %v2301 = vld [vmem:[%s4 + $0x18] sm:$0xff]
  %v2302 = vld [vmem:[%s4 + $0x20] sm:$0xff]
  %v2303 = vld [vmem:[%s4 + $0x28] sm:$0xff]
  %v2304 = vld [vmem:[%s4 + $0x30] sm:$0xff]
  %v2305 = vld [vmem:[%s4 + $0x38] sm:$0xff]
  %v2306 = vld [vmem:[%s5] sm:$0x1]
  %v2308 = vlaneseq
  %v2309 = vshrl.u32 %v2308, 7
  %v2310 = vsub.s32 0, %v2309
  %v2311 = vrot.slane %v2306, %v2310
  %vm2313 = vcmask 523264
  %v2315 = vsel %vm2313, %v2295, 0
  %2317 = vmatprep.subr.mxu0 0.0
  %2318 = vmatpush1.msra.mxu0 %v2298
  %2319 = vmatprep.subr.mxu0 0.0
  %2320 = vmatpush1.msra.mxu0 %v2299
  %2321 = vmatprep.subr.mxu0 0.0
  %2322 = vmatpush1.msra.mxu0 %v2300
  %2323 = vmatprep.subr.mxu0 0.0
  %2324 = vmatpush1.msra.mxu0 %v2301
  %2325 = vmatprep.subr.mxu0 0.0
  %2326 = vmatpush1.msra.mxu0 %v2302
  %2327 = vmatprep.subr.mxu0 0.0
  %2328 = vmatpush1.msra.mxu0 %v2303
  %2329 = vmatprep.subr.mxu0 0.0
  %2330 = vmatpush1.msra.mxu0 %v2304
  %2331 = vmatprep.subr.mxu0 0.0
  %2332 = vmatpush1.msra.mxu0 %v2305
  %2333 = vmatprep.subr.mxu0 0.0
  %2334 = vmatpush1.msra.mxu0 0.0
  %2335 = vmatprep.subr.mxu0 0.0
  %2336 = vmatpush1.msra.mxu0 0.0
  %2337 = vmatprep.subr.mxu0 0.0
  %2338 = vmatpush1.msra.mxu0 0.0
  %2339 = vmatprep.subr.mxu0 0.0
  %2340 = vmatpush1.msra.mxu0 0.0
  %2341 = vmatprep.subr.mxu0 0.0
  %2342 = vmatpush1.msra.mxu0 0.0
  %2343 = vmatprep.subr.mxu0 0.0
  %2344 = vmatpush1.msra.mxu0 0.0
  %2345 = vmatprep.subr.mxu0 0.0
  %2346 = vmatpush1.msra.mxu0 0.0
  %2347 = vmatprep.subr.mxu0 0.0
  %2348 = vmatpush1.msra.mxu0 0.0
  %2349 = vmatprep.subr.mxu0 0.0
  %2350 = vmatpush1.msra.mxu0 0.0
  %2351 = vmatprep.subr.mxu0 0.0
  %2352 = vmatpush1.msra.mxu0 0.0
  %2353 = vmatprep.subr.mxu0 0.0
  %2354 = vmatpush1.msra.mxu0 0.0
  %2355 = vmatprep.subr.mxu0 0.0
  %2356 = vmatpush1.msra.mxu0 0.0
  %2357 = vmatprep.subr.mxu0 0.0
  %2358 = vmatpush1.msra.mxu0 0.0
  %2359 = vmatprep.subr.mxu0 0.0
  %2360 = vmatpush1.msra.mxu0 0.0
  %2361 = vmatprep.subr.mxu0 0.0
  %2362 = vmatpush1.msra.mxu0 0.0
  %2363 = vmatprep.subr.mxu0 0.0
  %2364 = vmatpush1.msra.mxu0 0.0
  %2365 = vmatprep.subr.mxu0 0.0
  %2366 = vmatpush1.msra.mxu0 0.0
  %2367 = vmatprep.subr.mxu0 0.0
  %2368 = vmatpush1.msra.mxu0 0.0
  %2369 = vmatprep.subr.mxu0 0.0
  %2370 = vmatpush1.msra.mxu0 0.0
  %2371 = vmatprep.subr.mxu0 0.0
  %2372 = vmatpush1.msra.mxu0 0.0
  %2373 = vmatprep.subr.mxu0 0.0
  %2374 = vmatpush1.msra.mxu0 0.0
  %2375 = vmatprep.subr.mxu0 0.0
  %2376 = vmatpush1.msra.mxu0 0.0
  %2377 = vmatprep.subr.mxu0 0.0
  %2378 = vmatpush1.msra.mxu0 0.0
  %2379 = vmatprep.subr.mxu0 0.0
  %2380 = vmatpush1.msra.mxu0 0.0
  %2381 = vmatprep.mubr.f32.mxu0 0.0
  %2382 = vmatmul.mubr.f32.gmra.mrb[0].mxu0 %v2315
  %v2383 = vpop.f32.mrb[0].mxu0
  %v2384 = vadd.f32 %v2311, %v2383
  %v2385 = vpop.f32.mrb[0].mxu0
  %2386 = vdwg.mxu0
  %v2387 = vmax.f32 %v2384, 0.0
  %v2388 = vld [vmem:[%s6] sm:$0xff]
  %v2389 = vld [vmem:[%s6 + $0x8] sm:$0xff]
  %v2390 = vld [vmem:[%s6 + $0x10] sm:$0xff]
  %v2391 = vld [vmem:[%s6 + $0x18] sm:$0xff]
  %v2392 = vld [vmem:[%s6 + $0x20] sm:$0xff]
  %v2393 = vld [vmem:[%s6 + $0x28] sm:$0xff]
  %v2394 = vld [vmem:[%s6 + $0x30] sm:$0xff]
  %v2395 = vld [vmem:[%s6 + $0x38] sm:$0xff]
  %v2396 = vld [vmem:[%s7] sm:$0x1]
  %v2398 = vlaneseq
  %v2399 = vshrl.u32 %v2398, 7
  %v2400 = vsub.s32 0, %v2399
  %v2401 = vrot.slane %v2396, %v2400
  %v2404 = vsel %vm2313, %v2387, 0
  %2406 = vmatprep.subr.mxu0 0.0
  %2407 = vmatpush1.msra.mxu0 %v2388
  %2408 = vmatprep.subr.mxu0 0.0
  %2409 = vmatpush1.msra.mxu0 %v2389
  %2410 = vmatprep.subr.mxu0 0.0
  %2411 = vmatpush1.msra.mxu0 %v2390
  %2412 = vmatprep.subr.mxu0 0.0
  %2413 = vmatpush1.msra.mxu0 %v2391
  %2414 = vmatprep.subr.mxu0 0.0
  %2415 = vmatpush1.msra.mxu0 %v2392
  %2416 = vmatprep.subr.mxu0 0.0
  %2417 = vmatpush1.msra.mxu0 %v2393
  %2418 = vmatprep.subr.mxu0 0.0
  %2419 = vmatpush1.msra.mxu0 %v2394
  %2420 = vmatprep.subr.mxu0 0.0
  %2421 = vmatpush1.msra.mxu0 %v2395
  %2422 = vmatprep.subr.mxu0 0.0
  %2423 = vmatpush1.msra.mxu0 0.0
  %2424 = vmatprep.subr.mxu0 0.0
  %2425 = vmatpush1.msra.mxu0 0.0
  %2426 = vmatprep.subr.mxu0 0.0
  %2427 = vmatpush1.msra.mxu0 0.0
  %2428 = vmatprep.subr.mxu0 0.0
  %2429 = vmatpush1.msra.mxu0 0.0
  %2430 = vmatprep.subr.mxu0 0.0
  %2431 = vmatpush1.msra.mxu0 0.0
  %2432 = vmatprep.subr.mxu0 0.0
  %2433 = vmatpush1.msra.mxu0 0.0
  %2434 = vmatprep.subr.mxu0 0.0
  %2435 = vmatpush1.msra.mxu0 0.0
  %2436 = vmatprep.subr.mxu0 0.0
  %2437 = vmatpush1.msra.mxu0 0.0
  %2438 = vmatprep.subr.mxu0 0.0
  %2439 = vmatpush1.msra.mxu0 0.0
  %2440 = vmatprep.subr.mxu0 0.0
  %2441 = vmatpush1.msra.mxu0 0.0
  %2442 = vmatprep.subr.mxu0 0.0
  %2443 = vmatpush1.msra.mxu0 0.0
  %2444 = vmatprep.subr.mxu0 0.0
  %2445 = vmatpush1.msra.mxu0 0.0
  %2446 = vmatprep.subr.mxu0 0.0
  %2447 = vmatpush1.msra.mxu0 0.0
  %2448 = vmatprep.subr.mxu0 0.0
  %2449 = vmatpush1.msra.mxu0 0.0
  %2450 = vmatprep.subr.mxu0 0.0
  %2451 = vmatpush1.msra.mxu0 0.0
  %2452 = vmatprep.subr.mxu0 0.0
  %2453 = vmatpush1.msra.mxu0 0.0
  %2454 = vmatprep.subr.mxu0 0.0
  %2455 = vmatpush1.msra.mxu0 0.0
  %2456 = vmatprep.subr.mxu0 0.0
  %2457 = vmatpush1.msra.mxu0 0.0
  %2458 = vmatprep.subr.mxu0 0.0
  %2459 = vmatpush1.msra.mxu0 0.0
  %2460 = vmatprep.subr.mxu0 0.0
  %2461 = vmatpush1.msra.mxu0 0.0
  %2462 = vmatprep.subr.mxu0 0.0
  %2463 = vmatpush1.msra.mxu0 0.0
  %2464 = vmatprep.subr.mxu0 0.0
  %2465 = vmatpush1.msra.mxu0 0.0
  %2466 = vmatprep.subr.mxu0 0.0
  %2467 = vmatpush1.msra.mxu0 0.0
  %2468 = vmatprep.subr.mxu0 0.0
  %2469 = vmatpush1.msra.mxu0 0.0
  %2470 = vmatprep.mubr.f32.mxu0 0.0
  %2471 = vmatmul.mubr.f32.gmra.mrb[0].mxu0 %v2404
  %v2472 = vpop.f32.mrb[0].mxu0
  %v2473 = vadd.f32 %v2401, %v2472
  %v2474 = vpop.f32.mrb[0].mxu0
  %2475 = vdwg.mxu0
  %v2476 = vmax.f32 %v2473, 0.0
  %v2477 = vld [vmem:[%s8] sm:$0xff]
  %v2478 = vld [vmem:[%s8 + $0x8] sm:$0xff]
  %v2479 = vld [vmem:[%s8 + $0x10] sm:$0xff]
  %v2480 = vld [vmem:[%s8 + $0x18] sm:$0xff]
  %v2481 = vld [vmem:[%s8 + $0x20] sm:$0xff]
  %v2482 = vld [vmem:[%s8 + $0x28] sm:$0xff]
  %v2483 = vld [vmem:[%s9] sm:$0x1]
  %v2485 = vlaneseq
  %v2486 = vshrl.u32 %v2485, 7
  %v2487 = vsub.s32 0, %v2486
  %v2488 = vrot.slane %v2483, %v2487
  %vm2490 = vcmask 392192
  %v2492 = vsel %vm2490, %v2476, 0
  %2494 = vmatprep.subr.mxu0 0.0
  %2495 = vmatpush1.msra.mxu0 %v2477
  %2496 = vmatprep.subr.mxu0 0.0
  %2497 = vmatpush1.msra.mxu0 %v2478
  %2498 = vmatprep.subr.mxu0 0.0
  %2499 = vmatpush1.msra.mxu0 %v2479
  %2500 = vmatprep.subr.mxu0 0.0
  %2501 = vmatpush1.msra.mxu0 %v2480
  %2502 = vmatprep.subr.mxu0 0.0
  %2503 = vmatpush1.msra.mxu0 %v2481
  %2504 = vmatprep.subr.mxu0 0.0
  %2505 = vmatpush1.msra.mxu0 %v2482
  %2506 = vmatprep.subr.mxu0 0.0
  %2507 = vmatpush1.msra.mxu0 0.0
  %2508 = vmatprep.subr.mxu0 0.0
  %2509 = vmatpush1.msra.mxu0 0.0
  %2510 = vmatprep.subr.mxu0 0.0
  %2511 = vmatpush1.msra.mxu0 0.0
  %2512 = vmatprep.subr.mxu0 0.0
  %2513 = vmatpush1.msra.mxu0 0.0
  %2514 = vmatprep.subr.mxu0 0.0
  %2515 = vmatpush1.msra.mxu0 0.0
  %2516 = vmatprep.subr.mxu0 0.0
  %2517 = vmatpush1.msra.mxu0 0.0
  %2518 = vmatprep.subr.mxu0 0.0
  %2519 = vmatpush1.msra.mxu0 0.0
  %2520 = vmatprep.subr.mxu0 0.0
  %2521 = vmatpush1.msra.mxu0 0.0
  %2522 = vmatprep.subr.mxu0 0.0
  %2523 = vmatpush1.msra.mxu0 0.0
  %2524 = vmatprep.subr.mxu0 0.0
  %2525 = vmatpush1.msra.mxu0 0.0
  %2526 = vmatprep.subr.mxu0 0.0
  %2527 = vmatpush1.msra.mxu0 0.0
  %2528 = vmatprep.subr.mxu0 0.0
  %2529 = vmatpush1.msra.mxu0 0.0
  %2530 = vmatprep.subr.mxu0 0.0
  %2531 = vmatpush1.msra.mxu0 0.0
  %2532 = vmatprep.subr.mxu0 0.0
  %2533 = vmatpush1.msra.mxu0 0.0
  %2534 = vmatprep.subr.mxu0 0.0
  %2535 = vmatpush1.msra.mxu0 0.0
  %2536 = vmatprep.subr.mxu0 0.0
  %2537 = vmatpush1.msra.mxu0 0.0
  %2538 = vmatprep.subr.mxu0 0.0
  %2539 = vmatpush1.msra.mxu0 0.0
  %2540 = vmatprep.subr.mxu0 0.0
  %2541 = vmatpush1.msra.mxu0 0.0
  %2542 = vmatprep.subr.mxu0 0.0
  %2543 = vmatpush1.msra.mxu0 0.0
  %2544 = vmatprep.subr.mxu0 0.0
  %2545 = vmatpush1.msra.mxu0 0.0
  %2546 = vmatprep.subr.mxu0 0.0
  %2547 = vmatpush1.msra.mxu0 0.0
  %2548 = vmatprep.subr.mxu0 0.0
  %2549 = vmatpush1.msra.mxu0 0.0
  %2550 = vmatprep.subr.mxu0 0.0
  %2551 = vmatpush1.msra.mxu0 0.0
  %2552 = vmatprep.subr.mxu0 0.0
  %2553 = vmatpush1.msra.mxu0 0.0
  %2554 = vmatprep.subr.mxu0 0.0
  %2555 = vmatpush1.msra.mxu0 0.0
  %2556 = vmatprep.subr.mxu0 0.0
  %2557 = vmatpush1.msra.mxu0 0.0
  %2558 = vmatprep.mubr.f32.mxu0 0.0
  %2559 = vmatmul.mubr.f32.gmra.mrb[0].mxu0 %v2492
  %v2560 = vpop.f32.mrb[0].mxu0
  %v2561 = vadd.f32 %v2488, %v2560
  %v2562 = vpop.f32.mrb[0].mxu0
  %2563 = vdwg.mxu0
  %v2564 = vld [vmem:[%s11] sm:$0xff]
  %v2565 = vld [vmem:[%s11 + $0x8] sm:$0xff]
  %v2566 = vld [vmem:[%s11 + $0x10] sm:$0xff]
  %v2567 = vld [vmem:[%s11 + $0x18] sm:$0xff]
  %s2568 = scalar_lea.vmem %s10, 32
  %v2569 = vld [vmem:[%s2568] sm:$0xff]
  %v2570 = vld [vmem:[%s2568 + $0x8] sm:$0xff]
  %v2571 = vld [vmem:[%s2568 + $0x10] sm:$0xff]
  %v2572 = vld [vmem:[%s2568 + $0x18] sm:$0xff]
  %s2573 = scalar_lea.vmem %s10, 64
  %v2574 = vld [vmem:[%s2573] sm:$0xff]
  %v2575 = vld [vmem:[%s2573 + $0x8] sm:$0xff]
  %v2576 = vld [vmem:[%s2573 + $0x10] sm:$0xff]
  %v2577 = vld [vmem:[%s2573 + $0x18] sm:$0xff]
  %s2578 = scalar_lea.vmem %s11, 32
  %v2579 = vld [vmem:[%s2578] sm:$0xff]
  %v2580 = vld [vmem:[%s2578 + $0x8] sm:$0xff]
  %v2581 = vld [vmem:[%s2578 + $0x10] sm:$0xff]
  %v2582 = vld [vmem:[%s2578 + $0x18] sm:$0xff]
  %s2583 = scalar_lea.vmem %s11, 64
  %v2584 = vld [vmem:[%s2583] sm:$0xff]
  %v2585 = vld [vmem:[%s2583 + $0x8] sm:$0xff]
  %v2586 = vld [vmem:[%s2583 + $0x10] sm:$0xff]
  %v2587 = vld [vmem:[%s2583 + $0x18] sm:$0xff]
  %s2588 = scalar_lea.vmem %s12, 1
  %v2589 = vld [vmem:[%s2588] sm:$0x1]
  %s2590 = scalar_lea.vmem %s12, 2
  %v2591 = vld [vmem:[%s2590] sm:$0x1]
  %v2592 = vld [vmem:[%s10] sm:$0xff]
  %v2593 = vld [vmem:[%s10 + $0x8] sm:$0xff]
  %v2594 = vld [vmem:[%s10 + $0x10] sm:$0xff]
  %v2595 = vld [vmem:[%s10 + $0x18] sm:$0xff]
  %v2596 = vld [vmem:[%s12] sm:$0x1]
  %v2598 = vlaneseq
  %v2599 = vshrl.u32 %v2598, 7
  %v2600 = vsub.s32 0, %v2599
  %v2601 = vrot.slane %v2596, %v2600
  %vm2603 = vcmask 261120
  %v2605 = vsel %vm2603, %v2561, 0
  %2607 = vmatprep.subr.mxu0 0.0
  %2608 = vmatpush1.msra.mxu0 %v2592
  %2609 = vmatprep.subr.mxu0 0.0
  %2610 = vmatpush1.msra.mxu0 %v2593
  %2611 = vmatprep.subr.mxu0 0.0
  %2612 = vmatpush1.msra.mxu0 %v2594
  %2613 = vmatprep.subr.mxu0 0.0
  %2614 = vmatpush1.msra.mxu0 %v2595
  %2615 = vmatprep.subr.mxu0 0.0
  %2616 = vmatpush1.msra.mxu0 0.0
  %2617 = vmatprep.subr.mxu0 0.0
  %2618 = vmatpush1.msra.mxu0 0.0
  %2619 = vmatprep.subr.mxu0 0.0
  %2620 = vmatpush1.msra.mxu0 0.0
  %2621 = vmatprep.subr.mxu0 0.0
  %2622 = vmatpush1.msra.mxu0 0.0
  %2623 = vmatprep.subr.mxu0 0.0
  %2624 = vmatpush1.msra.mxu0 0.0
  %2625 = vmatprep.subr.mxu0 0.0
  %2626 = vmatpush1.msra.mxu0 0.0
  %2627 = vmatprep.subr.mxu0 0.0
  %2628 = vmatpush1.msra.mxu0 0.0
  %2629 = vmatprep.subr.mxu0 0.0
  %2630 = vmatpush1.msra.mxu0 0.0
  %2631 = vmatprep.subr.mxu0 0.0
  %2632 = vmatpush1.msra.mxu0 0.0
  %2633 = vmatprep.subr.mxu0 0.0
  %2634 = vmatpush1.msra.mxu0 0.0
  %2635 = vmatprep.subr.mxu0 0.0
  %2636 = vmatpush1.msra.mxu0 0.0
  %2637 = vmatprep.subr.mxu0 0.0
  %2638 = vmatpush1.msra.mxu0 0.0
  %2639 = vmatprep.subr.mxu0 0.0
  %2640 = vmatpush1.msra.mxu0 0.0
  %2641 = vmatprep.subr.mxu0 0.0
  %2642 = vmatpush1.msra.mxu0 0.0
  %2643 = vmatprep.subr.mxu0 0.0
  %2644 = vmatpush1.msra.mxu0 0.0
  %2645 = vmatprep.subr.mxu0 0.0
  %2646 = vmatpush1.msra.mxu0 0.0
  %2647 = vmatprep.subr.mxu0 0.0
  %2648 = vmatpush1.msra.mxu0 0.0
  %2649 = vmatprep.subr.mxu0 0.0
  %2650 = vmatpush1.msra.mxu0 0.0
  %2651 = vmatprep.subr.mxu0 0.0
  %2652 = vmatpush1.msra.mxu0 0.0
  %2653 = vmatprep.subr.mxu0 0.0
  %2654 = vmatpush1.msra.mxu0 0.0
  %2655 = vmatprep.subr.mxu0 0.0
  %2656 = vmatpush1.msra.mxu0 0.0
  %2657 = vmatprep.subr.mxu0 0.0
  %2658 = vmatpush1.msra.mxu0 0.0
  %2659 = vmatprep.subr.mxu0 0.0
  %2660 = vmatpush1.msra.mxu0 0.0
  %2661 = vmatprep.subr.mxu0 0.0
  %2662 = vmatpush1.msra.mxu0 0.0
  %2663 = vmatprep.subr.mxu0 0.0
  %2664 = vmatpush1.msra.mxu0 0.0
  %2665 = vmatprep.subr.mxu0 0.0
  %2666 = vmatpush1.msra.mxu0 0.0
  %2667 = vmatprep.subr.mxu0 0.0
  %2668 = vmatpush1.msra.mxu0 0.0
  %2669 = vmatprep.subr.mxu0 0.0
  %2670 = vmatpush1.msra.mxu0 0.0
  %2671 = vmatprep.mubr.f32.mxu0 0.0
  %2672 = vmatmul.mubr.f32.gmra.mrb[0].mxu0 %v2605
  %v2673 = vpop.f32.mrb[0].mxu0
  %v2674 = vadd.f32 %v2601, %v2673
  %v2675 = vpop.f32.mrb[0].mxu0
  %2676 = vdwg.mxu0
  %v2678 = vsel %vm2603, 0.0, 0
  %2680 = vmatprep.subr.mxu0 0.0
  %2681 = vmatpush1.msra.mxu0 %v2564
  %2682 = vmatprep.subr.mxu0 0.0
  %2683 = vmatpush1.msra.mxu0 %v2565
  %2684 = vmatprep.subr.mxu0 0.0
  %2685 = vmatpush1.msra.mxu0 %v2566
  %2686 = vmatprep.subr.mxu0 0.0
  %2687 = vmatpush1.msra.mxu0 %v2567
  %2688 = vmatprep.subr.mxu0 0.0
  %2689 = vmatpush1.msra.mxu0 0.0
  %2690 = vmatprep.subr.mxu0 0.0
  %2691 = vmatpush1.msra.mxu0 0.0
  %2692 = vmatprep.subr.mxu0 0.0
  %2693 = vmatpush1.msra.mxu0 0.0
  %2694 = vmatprep.subr.mxu0 0.0
  %2695 = vmatpush1.msra.mxu0 0.0
  %2696 = vmatprep.subr.mxu0 0.0
  %2697 = vmatpush1.msra.mxu0 0.0
  %2698 = vmatprep.subr.mxu0 0.0
  %2699 = vmatpush1.msra.mxu0 0.0
  %2700 = vmatprep.subr.mxu0 0.0
  %2701 = vmatpush1.msra.mxu0 0.0
  %2702 = vmatprep.subr.mxu0 0.0
  %2703 = vmatpush1.msra.mxu0 0.0
  %2704 = vmatprep.subr.mxu0 0.0
  %2705 = vmatpush1.msra.mxu0 0.0
  %2706 = vmatprep.subr.mxu0 0.0
  %2707 = vmatpush1.msra.mxu0 0.0
  %2708 = vmatprep.subr.mxu0 0.0
  %2709 = vmatpush1.msra.mxu0 0.0
  %2710 = vmatprep.subr.mxu0 0.0
  %2711 = vmatpush1.msra.mxu0 0.0
  %2712 = vmatprep.subr.mxu0 0.0
  %2713 = vmatpush1.msra.mxu0 0.0
  %2714 = vmatprep.subr.mxu0 0.0
  %2715 = vmatpush1.msra.mxu0 0.0
  %2716 = vmatprep.subr.mxu0 0.0
  %2717 = vmatpush1.msra.mxu0 0.0
  %2718 = vmatprep.subr.mxu0 0.0
  %2719 = vmatpush1.msra.mxu0 0.0
  %2720 = vmatprep.subr.mxu0 0.0
  %2721 = vmatpush1.msra.mxu0 0.0
  %2722 = vmatprep.subr.mxu0 0.0
  %2723 = vmatpush1.msra.mxu0 0.0
  %2724 = vmatprep.subr.mxu0 0.0
  %2725 = vmatpush1.msra.mxu0 0.0
  %2726 = vmatprep.subr.mxu0 0.0
  %2727 = vmatpush1.msra.mxu0 0.0
  %2728 = vmatprep.subr.mxu0 0.0
  %2729 = vmatpush1.msra.mxu0 0.0
  %2730 = vmatprep.subr.mxu0 0.0
  %2731 = vmatpush1.msra.mxu0 0.0
  %2732 = vmatprep.subr.mxu0 0.0
  %2733 = vmatpush1.msra.mxu0 0.0
  %2734 = vmatprep.subr.mxu0 0.0
  %2735 = vmatpush1.msra.mxu0 0.0
  %2736 = vmatprep.subr.mxu0 0.0
  %2737 = vmatpush1.msra.mxu0 0.0
  %2738 = vmatprep.subr.mxu0 0.0
  %2739 = vmatpush1.msra.mxu0 0.0
  %2740 = vmatprep.subr.mxu0 0.0
  %2741 = vmatpush1.msra.mxu0 0.0
  %2742 = vmatprep.subr.mxu0 0.0
  %2743 = vmatpush1.msra.mxu0 0.0
  %2744 = vmatprep.mubr.f32.mxu0 0.0
  %2745 = vmatmul.mubr.f32.gmra.mrb[0].mxu0 %v2678
  %v2746 = vpop.f32.mrb[0].mxu0
  %v2747 = vadd.f32 0.0, %v2746
  %v2748 = vpop.f32.mrb[0].mxu0
  %2749 = vdwg.mxu0
  %v2750 = vadd.f32 %v2674, %v2747
  %v2751 = vxor.u32 %v2750, 2147483648
  %v2752 = vmul.f32 %v2751, 1.442695
  %v2753 = vpow.pop %v2752
  %v2754 = vadd.f32 %v2753, 1.0
  %v2755 = vrcp.pop %v2754
  %v2756 = vmul.f32 1.0, %v2755
  %v2757 = vtanh.pop %v2750
  %v2758 = vmul.f32 %v2756, 0.0
  %2760 = vrot.lane.b32.xlu0 %v2757, 64
  %v2761 = vpop.permute.xlu0 %2760
  %v2763 = vmul.f32 %v2756, %v2761
  %2765 = vrot.lane.b32.xlu0 %v2763, 32
  %v2766 = vpop.permute.xlu0 %2765
  %v2768 = vadd.f32 %v2758, %v2766
  %v2769 = vtanh.pop %v2768
  %2771 = vrot.lane.b32.xlu0 %v2769, 64
  %v2772 = vpop.permute.xlu0 %2771
  %v2774 = vmul.f32 %v2756, %v2772
  %2775 = vmatprep.subr.mxu0 0.0
  %2776 = vmatpush1.msra.mxu0 %v2579
  %2777 = vmatprep.subr.mxu0 0.0
  %2778 = vmatpush1.msra.mxu0 %v2580
  %2779 = vmatprep.subr.mxu0 0.0
  %2780 = vmatpush1.msra.mxu0 %v2581
  %2781 = vmatprep.subr.mxu0 0.0
  %2782 = vmatpush1.msra.mxu0 %v2582
  %2783 = vmatprep.subr.mxu0 0.0
  %2784 = vmatpush1.msra.mxu0 0.0
  %2785 = vmatprep.subr.mxu0 0.0
  %2786 = vmatpush1.msra.mxu0 0.0
  %2787 = vmatprep.subr.mxu0 0.0
  %2788 = vmatpush1.msra.mxu0 0.0
  %2789 = vmatprep.subr.mxu0 0.0
  %2790 = vmatpush1.msra.mxu0 0.0
  %2791 = vmatprep.subr.mxu0 0.0
  %2792 = vmatpush1.msra.mxu0 0.0
  %2793 = vmatprep.subr.mxu0 0.0
  %2794 = vmatpush1.msra.mxu0 0.0
  %2795 = vmatprep.subr.mxu0 0.0
  %2796 = vmatpush1.msra.mxu0 0.0
  %2797 = vmatprep.subr.mxu0 0.0
  %2798 = vmatpush1.msra.mxu0 0.0
  %2799 = vmatprep.subr.mxu0 0.0
  %2800 = vmatpush1.msra.mxu0 0.0
  %2801 = vmatprep.subr.mxu0 0.0
  %2802 = vmatpush1.msra.mxu0 0.0
  %2803 = vmatprep.subr.mxu0 0.0
  %2804 = vmatpush1.msra.mxu0 0.0
  %2805 = vmatprep.subr.mxu0 0.0
  %2806 = vmatpush1.msra.mxu0 0.0
  %2807 = vmatprep.subr.mxu0 0.0
  %2808 = vmatpush1.msra.mxu0 0.0
  %2809 = vmatprep.subr.mxu0 0.0
  %2810 = vmatpush1.msra.mxu0 0.0
  %2811 = vmatprep.subr.mxu0 0.0
  %2812 = vmatpush1.msra.mxu0 0.0
  %2813 = vmatprep.subr.mxu0 0.0
  %2814 = vmatpush1.msra.mxu0 0.0
  %2815 = vmatprep.subr.mxu0 0.0
  %2816 = vmatpush1.msra.mxu0 0.0
  %2817 = vmatprep.subr.mxu0 0.0
  %2818 = vmatpush1.msra.mxu0 0.0
  %2819 = vmatprep.subr.mxu0 0.0
  %2820 = vmatpush1.msra.mxu0 0.0
  %2821 = vmatprep.subr.mxu0 0.0
  %2822 = vmatpush1.msra.mxu0 0.0
  %2823 = vmatprep.subr.mxu0 0.0
  %2824 = vmatpush1.msra.mxu0 0.0
  %2825 = vmatprep.subr.mxu0 0.0
  %2826 = vmatpush1.msra.mxu0 0.0
  %2827 = vmatprep.subr.mxu0 0.0
  %2828 = vmatpush1.msra.mxu0 0.0
  %2829 = vmatprep.subr.mxu0 0.0
  %2830 = vmatpush1.msra.mxu0 0.0
  %2831 = vmatprep.subr.mxu0 0.0
  %2832 = vmatpush1.msra.mxu0 0.0
  %2833 = vmatprep.subr.mxu0 0.0
  %2834 = vmatpush1.msra.mxu0 0.0
  %2835 = vmatprep.subr.mxu0 0.0
  %2836 = vmatpush1.msra.mxu0 0.0
  %2837 = vmatprep.subr.mxu0 0.0
  %2838 = vmatpush1.msra.mxu0 0.0
  %2839 = vmatprep.mubr.f32.mxu0 0.0
  %2840 = vmatmul.mubr.f32.gmra.mrb[0].mxu0 %v2678
  %v2841 = vpop.f32.mrb[0].mxu0
  %v2842 = vadd.f32 0.0, %v2841
  %v2843 = vpop.f32.mrb[0].mxu0
  %2844 = vdwg.mxu0
  %2846 = vrot.lane.b32.xlu0 %v2774, 32
  %v2847 = vpop.permute.xlu0 %2846
  %v2848 = vsel %vm2603, %v2847, 0
  %2850 = vmatprep.subr.mxu0 0.0
  %2851 = vmatpush1.msra.mxu0 %v2569
  %2852 = vmatprep.subr.mxu0 0.0
  %2853 = vmatpush1.msra.mxu0 %v2570
  %2854 = vmatprep.subr.mxu0 0.0
  %2855 = vmatpush1.msra.mxu0 %v2571
  %2856 = vmatprep.subr.mxu0 0.0
  %2857 = vmatpush1.msra.mxu0 %v2572
  %2858 = vmatprep.subr.mxu0 0.0
  %2859 = vmatpush1.msra.mxu0 0.0
  %2860 = vmatprep.subr.mxu0 0.0
  %2861 = vmatpush1.msra.mxu0 0.0
  %2862 = vmatprep.subr.mxu0 0.0
  %2863 = vmatpush1.msra.mxu0 0.0
  %2864 = vmatprep.subr.mxu0 0.0
  %2865 = vmatpush1.msra.mxu0 0.0
  %2866 = vmatprep.subr.mxu0 0.0
  %2867 = vmatpush1.msra.mxu0 0.0
  %2868 = vmatprep.subr.mxu0 0.0
  %2869 = vmatpush1.msra.mxu0 0.0
  %2870 = vmatprep.subr.mxu0 0.0
  %2871 = vmatpush1.msra.mxu0 0.0
  %2872 = vmatprep.subr.mxu0 0.0
  %2873 = vmatpush1.msra.mxu0 0.0
  %2874 = vmatprep.subr.mxu0 0.0
  %2875 = vmatpush1.msra.mxu0 0.0
  %2876 = vmatprep.subr.mxu0 0.0
  %2877 = vmatpush1.msra.mxu0 0.0
  %2878 = vmatprep.subr.mxu0 0.0
  %2879 = vmatpush1.msra.mxu0 0.0
  %2880 = vmatprep.subr.mxu0 0.0
  %2881 = vmatpush1.msra.mxu0 0.0
  %2882 = vmatprep.subr.mxu0 0.0
  %2883 = vmatpush1.msra.mxu0 0.0
  %2884 = vmatprep.subr.mxu0 0.0
  %2885 = vmatpush1.msra.mxu0 0.0
  %2886 = vmatprep.subr.mxu0 0.0
  %2887 = vmatpush1.msra.mxu0 0.0
  %2888 = vmatprep.subr.mxu0 0.0
  %2889 = vmatpush1.msra.mxu0 0.0
  %2890 = vmatprep.subr.mxu0 0.0
  %2891 = vmatpush1.msra.mxu0 0.0
  %2892 = vmatprep.subr.mxu0 0.0
  %2893 = vmatpush1.msra.mxu0 0.0
  %2894 = vmatprep.subr.mxu0 0.0
  %2895 = vmatpush1.msra.mxu0 0.0
  %2896 = vmatprep.subr.mxu0 0.0
  %2897 = vmatpush1.msra.mxu0 0.0
  %2898 = vmatprep.subr.mxu0 0.0
  %2899 = vmatpush1.msra.mxu0 0.0
  %2900 = vmatprep.subr.mxu0 0.0
  %2901 = vmatpush1.msra.mxu0 0.0
  %2902 = vmatprep.subr.mxu0 0.0
  %2903 = vmatpush1.msra.mxu0 0.0
  %2904 = vmatprep.subr.mxu0 0.0
  %2905 = vmatpush1.msra.mxu0 0.0
  %2906 = vmatprep.subr.mxu0 0.0
  %2907 = vmatpush1.msra.mxu0 0.0
  %2908 = vmatprep.subr.mxu0 0.0
  %2909 = vmatpush1.msra.mxu0 0.0
  %2910 = vmatprep.subr.mxu0 0.0
  %2911 = vmatpush1.msra.mxu0 0.0
  %2912 = vmatprep.subr.mxu0 0.0
  %2913 = vmatpush1.msra.mxu0 0.0
  %2914 = vmatprep.mubr.f32.mxu0 0.0
  %2915 = vmatmul.mubr.f32.gmra.mrb[0].mxu0 %v2848
  %v2916 = vpop.f32.mrb[0].mxu0
  %v2917 = vadd.f32 %v2842, %v2916
  %v2918 = vpop.f32.mrb[0].mxu0
  %2919 = vdwg.mxu0
  %v2921 = vlaneseq
  %v2922 = vshrl.u32 %v2921, 7
  %v2923 = vsub.s32 0, %v2922
  %v2924 = vrot.slane %v2589, %v2923
  %v2926 = vadd.f32 %v2917, %v2924
  %v2927 = vxor.u32 %v2926, 2147483648
  %v2928 = vmul.f32 %v2927, 1.442695
  %v2929 = vpow.pop %v2928
  %v2930 = vadd.f32 %v2929, 1.0
  %v2931 = vrcp.pop %v2930
  %v2932 = vmul.f32 1.0, %v2931
  %v2933 = vtanh.pop %v2926
  %v2934 = vmul.f32 %v2932, 0.0
  %2936 = vrot.lane.b32.xlu0 %v2933, 64
  %v2937 = vpop.permute.xlu0 %2936
  %v2939 = vmul.f32 %v2932, %v2937
  %2941 = vrot.lane.b32.xlu0 %v2939, 32
  %v2942 = vpop.permute.xlu0 %2941
  %v2944 = vadd.f32 %v2934, %v2942
  %v2945 = vtanh.pop %v2944
  %2947 = vrot.lane.b32.xlu0 %v2945, 64
  %v2948 = vpop.permute.xlu0 %2947
  %v2950 = vmul.f32 %v2932, %v2948
  %2951 = vmatprep.subr.mxu0 0.0
  %2952 = vmatpush1.msra.mxu0 %v2584
  %2953 = vmatprep.subr.mxu0 0.0
  %2954 = vmatpush1.msra.mxu0 %v2585
  %2955 = vmatprep.subr.mxu0 0.0
  %2956 = vmatpush1.msra.mxu0 %v2586
  %2957 = vmatprep.subr.mxu0 0.0
  %2958 = vmatpush1.msra.mxu0 %v2587
  %2959 = vmatprep.subr.mxu0 0.0
  %2960 = vmatpush1.msra.mxu0 0.0
  %2961 = vmatprep.subr.mxu0 0.0
  %2962 = vmatpush1.msra.mxu0 0.0
  %2963 = vmatprep.subr.mxu0 0.0
  %2964 = vmatpush1.msra.mxu0 0.0
  %2965 = vmatprep.subr.mxu0 0.0
  %2966 = vmatpush1.msra.mxu0 0.0
  %2967 = vmatprep.subr.mxu0 0.0
  %2968 = vmatpush1.msra.mxu0 0.0
  %2969 = vmatprep.subr.mxu0 0.0
  %2970 = vmatpush1.msra.mxu0 0.0
  %2971 = vmatprep.subr.mxu0 0.0
  %2972 = vmatpush1.msra.mxu0 0.0
  %2973 = vmatprep.subr.mxu0 0.0
  %2974 = vmatpush1.msra.mxu0 0.0
  %2975 = vmatprep.subr.mxu0 0.0
  %2976 = vmatpush1.msra.mxu0 0.0
  %2977 = vmatprep.subr.mxu0 0.0
  %2978 = vmatpush1.msra.mxu0 0.0
  %2979 = vmatprep.subr.mxu0 0.0
  %2980 = vmatpush1.msra.mxu0 0.0
  %2981 = vmatprep.subr.mxu0 0.0
  %2982 = vmatpush1.msra.mxu0 0.0
  %2983 = vmatprep.subr.mxu0 0.0
  %2984 = vmatpush1.msra.mxu0 0.0
  %2985 = vmatprep.subr.mxu0 0.0
  %2986 = vmatpush1.msra.mxu0 0.0
  %2987 = vmatprep.subr.mxu0 0.0
  %2988 = vmatpush1.msra.mxu0 0.0
  %2989 = vmatprep.subr.mxu0 0.0
  %2990 = vmatpush1.msra.mxu0 0.0
  %2991 = vmatprep.subr.mxu0 0.0
  %2992 = vmatpush1.msra.mxu0 0.0
  %2993 = vmatprep.subr.mxu0 0.0
  %2994 = vmatpush1.msra.mxu0 0.0
  %2995 = vmatprep.subr.mxu0 0.0
  %2996 = vmatpush1.msra.mxu0 0.0
  %2997 = vmatprep.subr.mxu0 0.0
  %2998 = vmatpush1.msra.mxu0 0.0
  %2999 = vmatprep.subr.mxu0 0.0
  %3000 = vmatpush1.msra.mxu0 0.0
  %3001 = vmatprep.subr.mxu0 0.0
  %3002 = vmatpush1.msra.mxu0 0.0
  %3003 = vmatprep.subr.mxu0 0.0
  %3004 = vmatpush1.msra.mxu0 0.0
  %3005 = vmatprep.subr.mxu0 0.0
  %3006 = vmatpush1.msra.mxu0 0.0
  %3007 = vmatprep.subr.mxu0 0.0
  %3008 = vmatpush1.msra.mxu0 0.0
  %3009 = vmatprep.subr.mxu0 0.0
  %3010 = vmatpush1.msra.mxu0 0.0
  %3011 = vmatprep.subr.mxu0 0.0
  %3012 = vmatpush1.msra.mxu0 0.0
  %3013 = vmatprep.subr.mxu0 0.0
  %3014 = vmatpush1.msra.mxu0 0.0
  %3015 = vmatprep.mubr.f32.mxu0 0.0
  %3016 = vmatmul.mubr.f32.gmra.mrb[0].mxu0 %v2678
  %v3017 = vpop.f32.mrb[0].mxu0
  %v3018 = vadd.f32 0.0, %v3017
  %v3019 = vpop.f32.mrb[0].mxu0
  %3020 = vdwg.mxu0
  %3022 = vrot.lane.b32.xlu0 %v2950, 32
  %v3023 = vpop.permute.xlu0 %3022
  %v3024 = vsel %vm2603, %v3023, 0
  %3026 = vmatprep.subr.mxu0 0.0
  %3027 = vmatpush1.msra.mxu0 %v2574
  %3028 = vmatprep.subr.mxu0 0.0
  %3029 = vmatpush1.msra.mxu0 %v2575
  %3030 = vmatprep.subr.mxu0 0.0
  %3031 = vmatpush1.msra.mxu0 %v2576
  %3032 = vmatprep.subr.mxu0 0.0
  %3033 = vmatpush1.msra.mxu0 %v2577
  %3034 = vmatprep.subr.mxu0 0.0
  %3035 = vmatpush1.msra.mxu0 0.0
  %3036 = vmatprep.subr.mxu0 0.0
  %3037 = vmatpush1.msra.mxu0 0.0
  %3038 = vmatprep.subr.mxu0 0.0
  %3039 = vmatpush1.msra.mxu0 0.0
  %3040 = vmatprep.subr.mxu0 0.0
  %3041 = vmatpush1.msra.mxu0 0.0
  %3042 = vmatprep.subr.mxu0 0.0
  %3043 = vmatpush1.msra.mxu0 0.0
  %3044 = vmatprep.subr.mxu0 0.0
  %3045 = vmatpush1.msra.mxu0 0.0
  %3046 = vmatprep.subr.mxu0 0.0
  %3047 = vmatpush1.msra.mxu0 0.0
  %3048 = vmatprep.subr.mxu0 0.0
  %3049 = vmatpush1.msra.mxu0 0.0
  %3050 = vmatprep.subr.mxu0 0.0
  %3051 = vmatpush1.msra.mxu0 0.0
  %3052 = vmatprep.subr.mxu0 0.0
  %3053 = vmatpush1.msra.mxu0 0.0
  %3054 = vmatprep.subr.mxu0 0.0
  %3055 = vmatpush1.msra.mxu0 0.0
  %3056 = vmatprep.subr.mxu0 0.0
  %3057 = vmatpush1.msra.mxu0 0.0
  %3058 = vmatprep.subr.mxu0 0.0
  %3059 = vmatpush1.msra.mxu0 0.0
  %3060 = vmatprep.subr.mxu0 0.0
  %3061 = vmatpush1.msra.mxu0 0.0
  %3062 = vmatprep.subr.mxu0 0.0
  %3063 = vmatpush1.msra.mxu0 0.0
  %3064 = vmatprep.subr.mxu0 0.0
  %3065 = vmatpush1.msra.mxu0 0.0
  %3066 = vmatprep.subr.mxu0 0.0
  %3067 = vmatpush1.msra.mxu0 0.0
  %3068 = vmatprep.subr.mxu0 0.0
  %3069 = vmatpush1.msra.mxu0 0.0
  %3070 = vmatprep.subr.mxu0 0.0
  %3071 = vmatpush1.msra.mxu0 0.0
  %3072 = vmatprep.subr.mxu0 0.0
  %3073 = vmatpush1.msra.mxu0 0.0
  %3074 = vmatprep.subr.mxu0 0.0
  %3075 = vmatpush1.msra.mxu0 0.0
  %3076 = vmatprep.subr.mxu0 0.0
  %3077 = vmatpush1.msra.mxu0 0.0
  %3078 = vmatprep.subr.mxu0 0.0
  %3079 = vmatpush1.msra.mxu0 0.0
  %3080 = vmatprep.subr.mxu0 0.0
  %3081 = vmatpush1.msra.mxu0 0.0
  %3082 = vmatprep.subr.mxu0 0.0
  %3083 = vmatpush1.msra.mxu0 0.0
  %3084 = vmatprep.subr.mxu0 0.0
  %3085 = vmatpush1.msra.mxu0 0.0
  %3086 = vmatprep.subr.mxu0 0.0
  %3087 = vmatpush1.msra.mxu0 0.0
  %3088 = vmatprep.subr.mxu0 0.0
  %3089 = vmatpush1.msra.mxu0 0.0
  %3090 = vmatprep.mubr.f32.mxu0 0.0
  %3091 = vmatmul.mubr.f32.gmra.mrb[0].mxu0 %v3024
  %v3092 = vpop.f32.mrb[0].mxu0
  %v3093 = vadd.f32 %v3018, %v3092
  %v3094 = vpop.f32.mrb[0].mxu0
  %3095 = vdwg.mxu0
  %v3097 = vlaneseq
  %v3098 = vshrl.u32 %v3097, 7
  %v3099 = vsub.s32 0, %v3098
  %v3100 = vrot.slane %v2591, %v3099
  %v3102 = vadd.f32 %v3093, %v3100
  %v3103 = vxor.u32 %v3102, 2147483648
  %v3104 = vmul.f32 %v3103, 1.442695
  %v3105 = vpow.pop %v3104
  %v3106 = vadd.f32 %v3105, 1.0
  %v3107 = vrcp.pop %v3106
  %v3108 = vmul.f32 1.0, %v3107
  %v3109 = vtanh.pop %v3102
  %v3110 = vmul.f32 %v3108, 0.0
  %3112 = vrot.lane.b32.xlu0 %v3109, 64
  %v3113 = vpop.permute.xlu0 %3112
  %v3115 = vmul.f32 %v3108, %v3113
  %3117 = vrot.lane.b32.xlu0 %v3115, 32
  %v3118 = vpop.permute.xlu0 %3117
  %v3120 = vadd.f32 %v3110, %v3118
  %v3121 = vtanh.pop %v3120
  %3123 = vrot.lane.b32.xlu0 %v3121, 64
  %v3124 = vpop.permute.xlu0 %3123
  %v3126 = vmul.f32 %v3108, %v3124
  %3127 = vmatprep.subr.mxu0 0.0
  %3128 = vmatpush1.msra.mxu0 %v2564
  %3129 = vmatprep.subr.mxu0 0.0
  %3130 = vmatpush1.msra.mxu0 %v2565
  %3131 = vmatprep.subr.mxu0 0.0
  %3132 = vmatpush1.msra.mxu0 %v2566
  %3133 = vmatprep.subr.mxu0 0.0
  %3134 = vmatpush1.msra.mxu0 %v2567
  %3135 = vmatprep.subr.mxu0 0.0
  %3136 = vmatpush1.msra.mxu0 0.0
  %3137 = vmatprep.subr.mxu0 0.0
  %3138 = vmatpush1.msra.mxu0 0.0
  %3139 = vmatprep.subr.mxu0 0.0
  %3140 = vmatpush1.msra.mxu0 0.0
  %3141 = vmatprep.subr.mxu0 0.0
  %3142 = vmatpush1.msra.mxu0 0.0
  %3143 = vmatprep.subr.mxu0 0.0
  %3144 = vmatpush1.msra.mxu0 0.0
  %3145 = vmatprep.subr.mxu0 0.0
  %3146 = vmatpush1.msra.mxu0 0.0
  %3147 = vmatprep.subr.mxu0 0.0
  %3148 = vmatpush1.msra.mxu0 0.0
  %3149 = vmatprep.subr.mxu0 0.0
  %3150 = vmatpush1.msra.mxu0 0.0
  %3151 = vmatprep.subr.mxu0 0.0
  %3152 = vmatpush1.msra.mxu0 0.0
  %3153 = vmatprep.subr.mxu0 0.0
  %3154 = vmatpush1.msra.mxu0 0.0
  %3155 = vmatprep.subr.mxu0 0.0
  %3156 = vmatpush1.msra.mxu0 0.0
  %3157 = vmatprep.subr.mxu0 0.0
  %3158 = vmatpush1.msra.mxu0 0.0
  %3159 = vmatprep.subr.mxu0 0.0
  %3160 = vmatpush1.msra.mxu0 0.0
  %3161 = vmatprep.subr.mxu0 0.0
  %3162 = vmatpush1.msra.mxu0 0.0
  %3163 = vmatprep.subr.mxu0 0.0
  %3164 = vmatpush1.msra.mxu0 0.0
  %3165 = vmatprep.subr.mxu0 0.0
  %3166 = vmatpush1.msra.mxu0 0.0
  %3167 = vmatprep.subr.mxu0 0.0
  %3168 = vmatpush1.msra.mxu0 0.0
  %3169 = vmatprep.subr.mxu0 0.0
  %3170 = vmatpush1.msra.mxu0 0.0
  %3171 = vmatprep.subr.mxu0 0.0
  %3172 = vmatpush1.msra.mxu0 0.0
  %3173 = vmatprep.subr.mxu0 0.0
  %3174 = vmatpush1.msra.mxu0 0.0
  %3175 = vmatprep.subr.mxu0 0.0
  %3176 = vmatpush1.msra.mxu0 0.0
  %3177 = vmatprep.subr.mxu0 0.0
  %3178 = vmatpush1.msra.mxu0 0.0
  %3179 = vmatprep.subr.mxu0 0.0
  %3180 = vmatpush1.msra.mxu0 0.0
  %3181 = vmatprep.subr.mxu0 0.0
  %3182 = vmatpush1.msra.mxu0 0.0
  %3183 = vmatprep.subr.mxu0 0.0
  %3184 = vmatpush1.msra.mxu0 0.0
  %3185 = vmatprep.subr.mxu0 0.0
  %3186 = vmatpush1.msra.mxu0 0.0
  %3187 = vmatprep.subr.mxu0 0.0
  %3188 = vmatpush1.msra.mxu0 0.0
  %3189 = vmatprep.subr.mxu0 0.0
  %3190 = vmatpush1.msra.mxu0 0.0
  %3191 = vmatprep.mubr.f32.mxu0 0.0
  %3192 = vmatmul.mubr.f32.gmra.mrb[0].mxu0 %v2848
  %v3193 = vpop.f32.mrb[0].mxu0
  %v3194 = vadd.f32 0.0, %v3193
  %v3195 = vpop.f32.mrb[0].mxu0
  %3196 = vdwg.mxu0
  %v3198 = vrot.slane %v3194, 6
  %v3200 = vadd.f32 %v2674, %v3198
  %v3201 = vxor.u32 %v3200, 2147483648
  %v3202 = vmul.f32 %v3201, 1.442695
  %v3203 = vpow.pop %v3202
  %v3204 = vadd.f32 %v3203, 1.0
  %v3205 = vrcp.pop %v3204
  %v3206 = vmul.f32 1.0, %v3205
  %v3207 = vtanh.pop %v3200
  %v3209 = vrot.slane %v2768, 6
  %v3211 = vmul.f32 %v3206, %v3209
  %3213 = vrot.lane.b32.xlu0 %v3207, 64
  %v3214 = vpop.permute.xlu0 %3213
  %v3216 = vmul.f32 %v3206, %v3214
  %3218 = vrot.lane.b32.xlu0 %v3216, 32
  %v3219 = vpop.permute.xlu0 %3218
  %v3221 = vadd.f32 %v3211, %v3219
  %v3222 = vtanh.pop %v3221
  %3224 = vrot.lane.b32.xlu0 %v3222, 64
  %v3225 = vpop.permute.xlu0 %3224
  %v3227 = vmul.f32 %v3206, %v3225
  %3228 = vmatprep.subr.mxu0 0.0
  %3229 = vmatpush1.msra.mxu0 %v2579
  %3230 = vmatprep.subr.mxu0 0.0
  %3231 = vmatpush1.msra.mxu0 %v2580
  %3232 = vmatprep.subr.mxu0 0.0
  %3233 = vmatpush1.msra.mxu0 %v2581
  %3234 = vmatprep.subr.mxu0 0.0
  %3235 = vmatpush1.msra.mxu0 %v2582
  %3236 = vmatprep.subr.mxu0 0.0
  %3237 = vmatpush1.msra.mxu0 0.0
  %3238 = vmatprep.subr.mxu0 0.0
  %3239 = vmatpush1.msra.mxu0 0.0
  %3240 = vmatprep.subr.mxu0 0.0
  %3241 = vmatpush1.msra.mxu0 0.0
  %3242 = vmatprep.subr.mxu0 0.0
  %3243 = vmatpush1.msra.mxu0 0.0
  %3244 = vmatprep.subr.mxu0 0.0
  %3245 = vmatpush1.msra.mxu0 0.0
  %3246 = vmatprep.subr.mxu0 0.0
  %3247 = vmatpush1.msra.mxu0 0.0
  %3248 = vmatprep.subr.mxu0 0.0
  %3249 = vmatpush1.msra.mxu0 0.0
  %3250 = vmatprep.subr.mxu0 0.0
  %3251 = vmatpush1.msra.mxu0 0.0
  %3252 = vmatprep.subr.mxu0 0.0
  %3253 = vmatpush1.msra.mxu0 0.0
  %3254 = vmatprep.subr.mxu0 0.0
  %3255 = vmatpush1.msra.mxu0 0.0
  %3256 = vmatprep.subr.mxu0 0.0
  %3257 = vmatpush1.msra.mxu0 0.0
  %3258 = vmatprep.subr.mxu0 0.0
  %3259 = vmatpush1.msra.mxu0 0.0
  %3260 = vmatprep.subr.mxu0 0.0
  %3261 = vmatpush1.msra.mxu0 0.0
  %3262 = vmatprep.subr.mxu0 0.0
  %3263 = vmatpush1.msra.mxu0 0.0
  %3264 = vmatprep.subr.mxu0 0.0
  %3265 = vmatpush1.msra.mxu0 0.0
  %3266 = vmatprep.subr.mxu0 0.0
  %3267 = vmatpush1.msra.mxu0 0.0
  %3268 = vmatprep.subr.mxu0 0.0
  %3269 = vmatpush1.msra.mxu0 0.0
  %3270 = vmatprep.subr.mxu0 0.0
  %3271 = vmatpush1.msra.mxu0 0.0
  %3272 = vmatprep.subr.mxu0 0.0
  %3273 = vmatpush1.msra.mxu0 0.0
  %3274 = vmatprep.subr.mxu0 0.0
  %3275 = vmatpush1.msra.mxu0 0.0
  %3276 = vmatprep.subr.mxu0 0.0
  %3277 = vmatpush1.msra.mxu0 0.0
  %3278 = vmatprep.subr.mxu0 0.0
  %3279 = vmatpush1.msra.mxu0 0.0
  %3280 = vmatprep.subr.mxu0 0.0
  %3281 = vmatpush1.msra.mxu0 0.0
  %3282 = vmatprep.subr.mxu0 0.0
  %3283 = vmatpush1.msra.mxu0 0.0
  %3284 = vmatprep.subr.mxu0 0.0
  %3285 = vmatpush1.msra.mxu0 0.0
  %3286 = vmatprep.subr.mxu0 0.0
  %3287 = vmatpush1.msra.mxu0 0.0
  %3288 = vmatprep.subr.mxu0 0.0
  %3289 = vmatpush1.msra.mxu0 0.0
  %3290 = vmatprep.subr.mxu0 0.0
  %3291 = vmatpush1.msra.mxu0 0.0
  %3292 = vmatprep.mubr.f32.mxu0 0.0
  %3293 = vmatmul.mubr.f32.gmra.mrb[0].mxu0 %v3024
  %v3294 = vpop.f32.mrb[0].mxu0
  %v3295 = vadd.f32 0.0, %v3294
  %v3296 = vpop.f32.mrb[0].mxu0
  %3297 = vdwg.mxu0
  %v3299 = vrot.slane %v3227, 2
  %3300 = vrot.lane.b32.xlu0 %v3299, 32
  %v3301 = vpop.permute.xlu0 %3300
  %v3302 = vsel %vm2603, %v3301, 0
  %3304 = vmatprep.subr.mxu0 0.0
  %3305 = vmatpush1.msra.mxu0 %v2569
  %3306 = vmatprep.subr.mxu0 0.0
  %3307 = vmatpush1.msra.mxu0 %v2570
  %3308 = vmatprep.subr.mxu0 0.0
  %3309 = vmatpush1.msra.mxu0 %v2571
  %3310 = vmatprep.subr.mxu0 0.0
  %3311 = vmatpush1.msra.mxu0 %v2572
  %3312 = vmatprep.subr.mxu0 0.0
  %3313 = vmatpush1.msra.mxu0 0.0
  %3314 = vmatprep.subr.mxu0 0.0
  %3315 = vmatpush1.msra.mxu0 0.0
  %3316 = vmatprep.subr.mxu0 0.0
  %3317 = vmatpush1.msra.mxu0 0.0
  %3318 = vmatprep.subr.mxu0 0.0
  %3319 = vmatpush1.msra.mxu0 0.0
  %3320 = vmatprep.subr.mxu0 0.0
  %3321 = vmatpush1.msra.mxu0 0.0
  %3322 = vmatprep.subr.mxu0 0.0
  %3323 = vmatpush1.msra.mxu0 0.0
  %3324 = vmatprep.subr.mxu0 0.0
  %3325 = vmatpush1.msra.mxu0 0.0
  %3326 = vmatprep.subr.mxu0 0.0
  %3327 = vmatpush1.msra.mxu0 0.0
  %3328 = vmatprep.subr.mxu0 0.0
  %3329 = vmatpush1.msra.mxu0 0.0
  %3330 = vmatprep.subr.mxu0 0.0
  %3331 = vmatpush1.msra.mxu0 0.0
  %3332 = vmatprep.subr.mxu0 0.0
  %3333 = vmatpush1.msra.mxu0 0.0
  %3334 = vmatprep.subr.mxu0 0.0
  %3335 = vmatpush1.msra.mxu0 0.0
  %3336 = vmatprep.subr.mxu0 0.0
  %3337 = vmatpush1.msra.mxu0 0.0
  %3338 = vmatprep.subr.mxu0 0.0
  %3339 = vmatpush1.msra.mxu0 0.0
  %3340 = vmatprep.subr.mxu0 0.0
  %3341 = vmatpush1.msra.mxu0 0.0
  %3342 = vmatprep.subr.mxu0 0.0
  %3343 = vmatpush1.msra.mxu0 0.0
  %3344 = vmatprep.subr.mxu0 0.0
  %3345 = vmatpush1.msra.mxu0 0.0
  %3346 = vmatprep.subr.mxu0 0.0
  %3347 = vmatpush1.msra.mxu0 0.0
  %3348 = vmatprep.subr.mxu0 0.0
  %3349 = vmatpush1.msra.mxu0 0.0
  %3350 = vmatprep.subr.mxu0 0.0
  %3351 = vmatpush1.msra.mxu0 0.0
  %3352 = vmatprep.subr.mxu0 0.0
  %3353 = vmatpush1.msra.mxu0 0.0
  %3354 = vmatprep.subr.mxu0 0.0
  %3355 = vmatpush1.msra.mxu0 0.0
  %3356 = vmatprep.subr.mxu0 0.0
  %3357 = vmatpush1.msra.mxu0 0.0
  %3358 = vmatprep.subr.mxu0 0.0
  %3359 = vmatpush1.msra.mxu0 0.0
  %3360 = vmatprep.subr.mxu0 0.0
  %3361 = vmatpush1.msra.mxu0 0.0
  %3362 = vmatprep.subr.mxu0 0.0
  %3363 = vmatpush1.msra.mxu0 0.0
  %3364 = vmatprep.subr.mxu0 0.0
  %3365 = vmatpush1.msra.mxu0 0.0
  %3366 = vmatprep.subr.mxu0 0.0
  %3367 = vmatpush1.msra.mxu0 0.0
  %3368 = vmatprep.mubr.f32.mxu0 0.0
  %3369 = vmatmul.mubr.f32.gmra.mrb[0].mxu0 %v3302
  %v3370 = vpop.f32.mrb[0].mxu0
  %v3371 = vadd.f32 %v3295, %v3370
  %v3372 = vpop.f32.mrb[0].mxu0
  %3373 = vdwg.mxu0
  %v3374 = vadd.f32 %v3371, %v2924
  %v3375 = vxor.u32 %v3374, 2147483648
  %v3376 = vmul.f32 %v3375, 1.442695
  %v3377 = vpow.pop %v3376
  %v3378 = vadd.f32 %v3377, 1.0
  %v3379 = vrcp.pop %v3378
  %v3380 = vmul.f32 1.0, %v3379
  %v3381 = vtanh.pop %v3374
  %v3382 = vmul.f32 %v3380, %v2944
  %3384 = vrot.lane.b32.xlu0 %v3381, 64
  %v3385 = vpop.permute.xlu0 %3384
  %v3387 = vmul.f32 %v3380, %v3385
  %3389 = vrot.lane.b32.xlu0 %v3387, 32
  %v3390 = vpop.permute.xlu0 %3389
  %v3392 = vadd.f32 %v3382, %v3390
  %v3393 = vtanh.pop %v3392
  %3395 = vrot.lane.b32.xlu0 %v3393, 64
  %v3396 = vpop.permute.xlu0 %3395
  %v3398 = vmul.f32 %v3380, %v3396
  %3400 = vrot.lane.b32.xlu0 %v3126, 32
  %v3401 = vpop.permute.xlu0 %3400
  %v3402 = vsel %vm2603, %v3401, 0
  %3404 = vmatprep.subr.mxu0 0.0
  %3405 = vmatpush1.msra.mxu0 %v2584
  %3406 = vmatprep.subr.mxu0 0.0
  %3407 = vmatpush1.msra.mxu0 %v2585
  %3408 = vmatprep.subr.mxu0 0.0
  %3409 = vmatpush1.msra.mxu0 %v2586
  %3410 = vmatprep.subr.mxu0 0.0
  %3411 = vmatpush1.msra.mxu0 %v2587
  %3412 = vmatprep.subr.mxu0 0.0
  %3413 = vmatpush1.msra.mxu0 0.0
  %3414 = vmatprep.subr.mxu0 0.0
  %3415 = vmatpush1.msra.mxu0 0.0
  %3416 = vmatprep.subr.mxu0 0.0
  %3417 = vmatpush1.msra.mxu0 0.0
  %3418 = vmatprep.subr.mxu0 0.0
  %3419 = vmatpush1.msra.mxu0 0.0
  %3420 = vmatprep.subr.mxu0 0.0
  %3421 = vmatpush1.msra.mxu0 0.0
  %3422 = vmatprep.subr.mxu0 0.0
  %3423 = vmatpush1.msra.mxu0 0.0
  %3424 = vmatprep.subr.mxu0 0.0
  %3425 = vmatpush1.msra.mxu0 0.0
  %3426 = vmatprep.subr.mxu0 0.0
  %3427 = vmatpush1.msra.mxu0 0.0
  %3428 = vmatprep.subr.mxu0 0.0
  %3429 = vmatpush1.msra.mxu0 0.0
  %3430 = vmatprep.subr.mxu0 0.0
  %3431 = vmatpush1.msra.mxu0 0.0
  %3432 = vmatprep.subr.mxu0 0.0
  %3433 = vmatpush1.msra.mxu0 0.0
  %3434 = vmatprep.subr.mxu0 0.0
  %3435 = vmatpush1.msra.mxu0 0.0
  %3436 = vmatprep.subr.mxu0 0.0
  %3437 = vmatpush1.msra.mxu0 0.0
  %3438 = vmatprep.subr.mxu0 0.0
  %3439 = vmatpush1.msra.mxu0 0.0
  %3440 = vmatprep.subr.mxu0 0.0
  %3441 = vmatpush1.msra.mxu0 0.0
  %3442 = vmatprep.subr.mxu0 0.0
  %3443 = vmatpush1.msra.mxu0 0.0
  %3444 = vmatprep.subr.mxu0 0.0
  %3445 = vmatpush1.msra.mxu0 0.0
  %3446 = vmatprep.subr.mxu0 0.0
  %3447 = vmatpush1.msra.mxu0 0.0
  %3448 = vmatprep.subr.mxu0 0.0
  %3449 = vmatpush1.msra.mxu0 0.0
  %3450 = vmatprep.subr.mxu0 0.0
  %3451 = vmatpush1.msra.mxu0 0.0
  %3452 = vmatprep.subr.mxu0 0.0
  %3453 = vmatpush1.msra.mxu0 0.0
  %3454 = vmatprep.subr.mxu0 0.0
  %3455 = vmatpush1.msra.mxu0 0.0
  %3456 = vmatprep.subr.mxu0 0.0
  %3457 = vmatpush1.msra.mxu0 0.0
  %3458 = vmatprep.subr.mxu0 0.0
  %3459 = vmatpush1.msra.mxu0 0.0
  %3460 = vmatprep.subr.mxu0 0.0
  %3461 = vmatpush1.msra.mxu0 0.0
  %3462 = vmatprep.subr.mxu0 0.0
  %3463 = vmatpush1.msra.mxu0 0.0
  %3464 = vmatprep.subr.mxu0 0.0
  %3465 = vmatpush1.msra.mxu0 0.0
  %3466 = vmatprep.subr.mxu0 0.0
  %3467 = vmatpush1.msra.mxu0 0.0
  %3468 = vmatprep.mubr.f32.mxu0 0.0
  %3469 = vmatmul.mubr.f32.gmra.mrb[0].mxu0 %v3402
  %v3470 = vpop.f32.mrb[0].mxu0
  %v3471 = vadd.f32 0.0, %v3470
  %v3472 = vpop.f32.mrb[0].mxu0
  %3473 = vdwg.mxu0
  %3475 = vrot.lane.b32.xlu0 %v3398, 32
  %v3476 = vpop.permute.xlu0 %3475
  %v3477 = vsel %vm2603, %v3476, 0
  %3479 = vmatprep.subr.mxu0 0.0
  %3480 = vmatpush1.msra.mxu0 %v2574
  %3481 = vmatprep.subr.mxu0 0.0
  %3482 = vmatpush1.msra.mxu0 %v2575
  %3483 = vmatprep.subr.mxu0 0.0
  %3484 = vmatpush1.msra.mxu0 %v2576
  %3485 = vmatprep.subr.mxu0 0.0
  %3486 = vmatpush1.msra.mxu0 %v2577
  %3487 = vmatprep.subr.mxu0 0.0
  %3488 = vmatpush1.msra.mxu0 0.0
  %3489 = vmatprep.subr.mxu0 0.0
  %3490 = vmatpush1.msra.mxu0 0.0
  %3491 = vmatprep.subr.mxu0 0.0
  %3492 = vmatpush1.msra.mxu0 0.0
  %3493 = vmatprep.subr.mxu0 0.0
  %3494 = vmatpush1.msra.mxu0 0.0
  %3495 = vmatprep.subr.mxu0 0.0
  %3496 = vmatpush1.msra.mxu0 0.0
  %3497 = vmatprep.subr.mxu0 0.0
  %3498 = vmatpush1.msra.mxu0 0.0
  %3499 = vmatprep.subr.mxu0 0.0
  %3500 = vmatpush1.msra.mxu0 0.0
  %3501 = vmatprep.subr.mxu0 0.0
  %3502 = vmatpush1.msra.mxu0 0.0
  %3503 = vmatprep.subr.mxu0 0.0
  %3504 = vmatpush1.msra.mxu0 0.0
  %3505 = vmatprep.subr.mxu0 0.0
  %3506 = vmatpush1.msra.mxu0 0.0
  %3507 = vmatprep.subr.mxu0 0.0
  %3508 = vmatpush1.msra.mxu0 0.0
  %3509 = vmatprep.subr.mxu0 0.0
  %3510 = vmatpush1.msra.mxu0 0.0
  %3511 = vmatprep.subr.mxu0 0.0
  %3512 = vmatpush1.msra.mxu0 0.0
  %3513 = vmatprep.subr.mxu0 0.0
  %3514 = vmatpush1.msra.mxu0 0.0
  %3515 = vmatprep.subr.mxu0 0.0
  %3516 = vmatpush1.msra.mxu0 0.0
  %3517 = vmatprep.subr.mxu0 0.0
  %3518 = vmatpush1.msra.mxu0 0.0
  %3519 = vmatprep.subr.mxu0 0.0
  %3520 = vmatpush1.msra.mxu0 0.0
  %3521 = vmatprep.subr.mxu0 0.0
  %3522 = vmatpush1.msra.mxu0 0.0
  %3523 = vmatprep.subr.mxu0 0.0
  %3524 = vmatpush1.msra.mxu0 0.0
  %3525 = vmatprep.subr.mxu0 0.0
  %3526 = vmatpush1.msra.mxu0 0.0
  %3527 = vmatprep.subr.mxu0 0.0
  %3528 = vmatpush1.msra.mxu0 0.0
  %3529 = vmatprep.subr.mxu0 0.0
  %3530 = vmatpush1.msra.mxu0 0.0
  %3531 = vmatprep.subr.mxu0 0.0
  %3532 = vmatpush1.msra.mxu0 0.0
  %3533 = vmatprep.subr.mxu0 0.0
  %3534 = vmatpush1.msra.mxu0 0.0
  %3535 = vmatprep.subr.mxu0 0.0
  %3536 = vmatpush1.msra.mxu0 0.0
  %3537 = vmatprep.subr.mxu0 0.0
  %3538 = vmatpush1.msra.mxu0 0.0
  %3539 = vmatprep.subr.mxu0 0.0
  %3540 = vmatpush1.msra.mxu0 0.0
  %3541 = vmatprep.subr.mxu0 0.0
  %3542 = vmatpush1.msra.mxu0 0.0
  %3543 = vmatprep.mubr.f32.mxu0 0.0
  %3544 = vmatmul.mubr.f32.gmra.mrb[0].mxu0 %v3477
  %v3545 = vpop.f32.mrb[0].mxu0
  %v3546 = vadd.f32 %v3471, %v3545
  %v3547 = vpop.f32.mrb[0].mxu0
  %3548 = vdwg.mxu0
  %v3549 = vadd.f32 %v3546, %v3100
  %v3550 = vxor.u32 %v3549, 2147483648
  %v3551 = vmul.f32 %v3550, 1.442695
  %v3552 = vpow.pop %v3551
  %v3553 = vadd.f32 %v3552, 1.0
  %v3554 = vrcp.pop %v3553
  %v3555 = vmul.f32 1.0, %v3554
  %v3556 = vtanh.pop %v3549
  %v3557 = vmul.f32 %v3555, %v3120
  %3559 = vrot.lane.b32.xlu0 %v3556, 64
  %v3560 = vpop.permute.xlu0 %3559
  %v3562 = vmul.f32 %v3555, %v3560
  %3564 = vrot.lane.b32.xlu0 %v3562, 32
  %v3565 = vpop.permute.xlu0 %3564
  %v3567 = vadd.f32 %v3557, %v3565
  %v3568 = vtanh.pop %v3567
  %3570 = vrot.lane.b32.xlu0 %v3568, 64
  %v3571 = vpop.permute.xlu0 %3570
  %v3573 = vmul.f32 %v3555, %v3571
  %3574 = vmatprep.subr.mxu0 0.0
  %3575 = vmatpush1.msra.mxu0 %v2564
  %3576 = vmatprep.subr.mxu0 0.0
  %3577 = vmatpush1.msra.mxu0 %v2565
  %3578 = vmatprep.subr.mxu0 0.0
  %3579 = vmatpush1.msra.mxu0 %v2566
  %3580 = vmatprep.subr.mxu0 0.0
  %3581 = vmatpush1.msra.mxu0 %v2567
  %3582 = vmatprep.subr.mxu0 0.0
  %3583 = vmatpush1.msra.mxu0 0.0
  %3584 = vmatprep.subr.mxu0 0.0
  %3585 = vmatpush1.msra.mxu0 0.0
  %3586 = vmatprep.subr.mxu0 0.0
  %3587 = vmatpush1.msra.mxu0 0.0
  %3588 = vmatprep.subr.mxu0 0.0
  %3589 = vmatpush1.msra.mxu0 0.0
  %3590 = vmatprep.subr.mxu0 0.0
  %3591 = vmatpush1.msra.mxu0 0.0
  %3592 = vmatprep.subr.mxu0 0.0
  %3593 = vmatpush1.msra.mxu0 0.0
  %3594 = vmatprep.subr.mxu0 0.0
  %3595 = vmatpush1.msra.mxu0 0.0
  %3596 = vmatprep.subr.mxu0 0.0
  %3597 = vmatpush1.msra.mxu0 0.0
  %3598 = vmatprep.subr.mxu0 0.0
  %3599 = vmatpush1.msra.mxu0 0.0
  %3600 = vmatprep.subr.mxu0 0.0
  %3601 = vmatpush1.msra.mxu0 0.0
  %3602 = vmatprep.subr.mxu0 0.0
  %3603 = vmatpush1.msra.mxu0 0.0
  %3604 = vmatprep.subr.mxu0 0.0
  %3605 = vmatpush1.msra.mxu0 0.0
  %3606 = vmatprep.subr.mxu0 0.0
  %3607 = vmatpush1.msra.mxu0 0.0
  %3608 = vmatprep.subr.mxu0 0.0
  %3609 = vmatpush1.msra.mxu0 0.0
  %3610 = vmatprep.subr.mxu0 0.0
  %3611 = vmatpush1.msra.mxu0 0.0
  %3612 = vmatprep.subr.mxu0 0.0
  %3613 = vmatpush1.msra.mxu0 0.0
  %3614 = vmatprep.subr.mxu0 0.0
  %3615 = vmatpush1.msra.mxu0 0.0
  %3616 = vmatprep.subr.mxu0 0.0
  %3617 = vmatpush1.msra.mxu0 0.0
  %3618 = vmatprep.subr.mxu0 0.0
  %3619 = vmatpush1.msra.mxu0 0.0
  %3620 = vmatprep.subr.mxu0 0.0
  %3621 = vmatpush1.msra.mxu0 0.0
  %3622 = vmatprep.subr.mxu0 0.0
  %3623 = vmatpush1.msra.mxu0 0.0
  %3624 = vmatprep.subr.mxu0 0.0
  %3625 = vmatpush1.msra.mxu0 0.0
  %3626 = vmatprep.subr.mxu0 0.0
  %3627 = vmatpush1.msra.mxu0 0.0
  %3628 = vmatprep.subr.mxu0 0.0
  %3629 = vmatpush1.msra.mxu0 0.0
  %3630 = vmatprep.subr.mxu0 0.0
  %3631 = vmatpush1.msra.mxu0 0.0
  %3632 = vmatprep.subr.mxu0 0.0
  %3633 = vmatpush1.msra.mxu0 0.0
  %3634 = vmatprep.subr.mxu0 0.0
  %3635 = vmatpush1.msra.mxu0 0.0
  %3636 = vmatprep.subr.mxu0 0.0
  %3637 = vmatpush1.msra.mxu0 0.0
  %3638 = vmatprep.mubr.f32.mxu0 0.0
  %3639 = vmatmul.mubr.f32.gmra.mrb[0].mxu0 %v3302
  %v3640 = vpop.f32.mrb[0].mxu0
  %v3641 = vadd.f32 0.0, %v3640
  %v3642 = vpop.f32.mrb[0].mxu0
  %3643 = vdwg.mxu0
  %v3645 = vrot.slane %v3641, 4
  %v3647 = vadd.f32 %v2674, %v3645
  %v3648 = vxor.u32 %v3647, 2147483648
  %v3649 = vmul.f32 %v3648, 1.442695
  %v3650 = vpow.pop %v3649
  %v3651 = vadd.f32 %v3650, 1.0
  %v3652 = vrcp.pop %v3651
  %v3653 = vmul.f32 1.0, %v3652
  %v3654 = vtanh.pop %v3647
  %v3656 = vrot.slane %v3221, 6
  %v3658 = vmul.f32 %v3653, %v3656
  %3660 = vrot.lane.b32.xlu0 %v3654, 64
  %v3661 = vpop.permute.xlu0 %3660
  %v3663 = vmul.f32 %v3653, %v3661
  %3665 = vrot.lane.b32.xlu0 %v3663, 32
  %v3666 = vpop.permute.xlu0 %3665
  %v3668 = vadd.f32 %v3658, %v3666
  %v3669 = vtanh.pop %v3668
  %3671 = vrot.lane.b32.xlu0 %v3669, 64
  %v3672 = vpop.permute.xlu0 %3671
  %v3674 = vmul.f32 %v3653, %v3672
  %3675 = vmatprep.subr.mxu0 0.0
  %3676 = vmatpush1.msra.mxu0 %v2579
  %3677 = vmatprep.subr.mxu0 0.0
  %3678 = vmatpush1.msra.mxu0 %v2580
  %3679 = vmatprep.subr.mxu0 0.0
  %3680 = vmatpush1.msra.mxu0 %v2581
  %3681 = vmatprep.subr.mxu0 0.0
  %3682 = vmatpush1.msra.mxu0 %v2582
  %3683 = vmatprep.subr.mxu0 0.0
  %3684 = vmatpush1.msra.mxu0 0.0
  %3685 = vmatprep.subr.mxu0 0.0
  %3686 = vmatpush1.msra.mxu0 0.0
  %3687 = vmatprep.subr.mxu0 0.0
  %3688 = vmatpush1.msra.mxu0 0.0
  %3689 = vmatprep.subr.mxu0 0.0
  %3690 = vmatpush1.msra.mxu0 0.0
  %3691 = vmatprep.subr.mxu0 0.0
  %3692 = vmatpush1.msra.mxu0 0.0
  %3693 = vmatprep.subr.mxu0 0.0
  %3694 = vmatpush1.msra.mxu0 0.0
  %3695 = vmatprep.subr.mxu0 0.0
  %3696 = vmatpush1.msra.mxu0 0.0
  %3697 = vmatprep.subr.mxu0 0.0
  %3698 = vmatpush1.msra.mxu0 0.0
  %3699 = vmatprep.subr.mxu0 0.0
  %3700 = vmatpush1.msra.mxu0 0.0
  %3701 = vmatprep.subr.mxu0 0.0
  %3702 = vmatpush1.msra.mxu0 0.0
  %3703 = vmatprep.subr.mxu0 0.0
  %3704 = vmatpush1.msra.mxu0 0.0
  %3705 = vmatprep.subr.mxu0 0.0
  %3706 = vmatpush1.msra.mxu0 0.0
  %3707 = vmatprep.subr.mxu0 0.0
  %3708 = vmatpush1.msra.mxu0 0.0
  %3709 = vmatprep.subr.mxu0 0.0
  %3710 = vmatpush1.msra.mxu0 0.0
  %3711 = vmatprep.subr.mxu0 0.0
  %3712 = vmatpush1.msra.mxu0 0.0
  %3713 = vmatprep.subr.mxu0 0.0
  %3714 = vmatpush1.msra.mxu0 0.0
  %3715 = vmatprep.subr.mxu0 0.0
  %3716 = vmatpush1.msra.mxu0 0.0
  %3717 = vmatprep.subr.mxu0 0.0
  %3718 = vmatpush1.msra.mxu0 0.0
  %3719 = vmatprep.subr.mxu0 0.0
  %3720 = vmatpush1.msra.mxu0 0.0
  %3721 = vmatprep.subr.mxu0 0.0
  %3722 = vmatpush1.msra.mxu0 0.0
  %3723 = vmatprep.subr.mxu0 0.0
  %3724 = vmatpush1.msra.mxu0 0.0
  %3725 = vmatprep.subr.mxu0 0.0
  %3726 = vmatpush1.msra.mxu0 0.0
  %3727 = vmatprep.subr.mxu0 0.0
  %3728 = vmatpush1.msra.mxu0 0.0
  %3729 = vmatprep.subr.mxu0 0.0
  %3730 = vmatpush1.msra.mxu0 0.0
  %3731 = vmatprep.subr.mxu0 0.0
  %3732 = vmatpush1.msra.mxu0 0.0
  %3733 = vmatprep.subr.mxu0 0.0
  %3734 = vmatpush1.msra.mxu0 0.0
  %3735 = vmatprep.subr.mxu0 0.0
  %3736 = vmatpush1.msra.mxu0 0.0
  %3737 = vmatprep.subr.mxu0 0.0
  %3738 = vmatpush1.msra.mxu0 0.0
  %3739 = vmatprep.mubr.f32.mxu0 0.0
  %3740 = vmatmul.mubr.f32.gmra.mrb[0].mxu0 %v3477
  %v3741 = vpop.f32.mrb[0].mxu0
  %v3742 = vadd.f32 0.0, %v3741
  %v3743 = vpop.f32.mrb[0].mxu0
  %3744 = vdwg.mxu0
  %v3746 = vrot.slane %v3674, 4
  %3747 = vrot.lane.b32.xlu0 %v3746, 32
  %v3748 = vpop.permute.xlu0 %3747
  %v3749 = vsel %vm2603, %v3748, 0
  %3751 = vmatprep.subr.mxu0 0.0
  %3752 = vmatpush1.msra.mxu0 %v2569
  %3753 = vmatprep.subr.mxu0 0.0
  %3754 = vmatpush1.msra.mxu0 %v2570
  %3755 = vmatprep.subr.mxu0 0.0
  %3756 = vmatpush1.msra.mxu0 %v2571
  %3757 = vmatprep.subr.mxu0 0.0
  %3758 = vmatpush1.msra.mxu0 %v2572
  %3759 = vmatprep.subr.mxu0 0.0
  %3760 = vmatpush1.msra.mxu0 0.0
  %3761 = vmatprep.subr.mxu0 0.0
  %3762 = vmatpush1.msra.mxu0 0.0
  %3763 = vmatprep.subr.mxu0 0.0
  %3764 = vmatpush1.msra.mxu0 0.0
  %3765 = vmatprep.subr.mxu0 0.0
  %3766 = vmatpush1.msra.mxu0 0.0
  %3767 = vmatprep.subr.mxu0 0.0
  %3768 = vmatpush1.msra.mxu0 0.0
  %3769 = vmatprep.subr.mxu0 0.0
  %3770 = vmatpush1.msra.mxu0 0.0
  %3771 = vmatprep.subr.mxu0 0.0
  %3772 = vmatpush1.msra.mxu0 0.0
  %3773 = vmatprep.subr.mxu0 0.0
  %3774 = vmatpush1.msra.mxu0 0.0
  %3775 = vmatprep.subr.mxu0 0.0
  %3776 = vmatpush1.msra.mxu0 0.0
  %3777 = vmatprep.subr.mxu0 0.0
  %3778 = vmatpush1.msra.mxu0 0.0
  %3779 = vmatprep.subr.mxu0 0.0
  %3780 = vmatpush1.msra.mxu0 0.0
  %3781 = vmatprep.subr.mxu0 0.0
  %3782 = vmatpush1.msra.mxu0 0.0
  %3783 = vmatprep.subr.mxu0 0.0
  %3784 = vmatpush1.msra.mxu0 0.0
  %3785 = vmatprep.subr.mxu0 0.0
  %3786 = vmatpush1.msra.mxu0 0.0
  %3787 = vmatprep.subr.mxu0 0.0
  %3788 = vmatpush1.msra.mxu0 0.0
  %3789 = vmatprep.subr.mxu0 0.0
  %3790 = vmatpush1.msra.mxu0 0.0
  %3791 = vmatprep.subr.mxu0 0.0
  %3792 = vmatpush1.msra.mxu0 0.0
  %3793 = vmatprep.subr.mxu0 0.0
  %3794 = vmatpush1.msra.mxu0 0.0
  %3795 = vmatprep.subr.mxu0 0.0
  %3796 = vmatpush1.msra.mxu0 0.0
  %3797 = vmatprep.subr.mxu0 0.0
  %3798 = vmatpush1.msra.mxu0 0.0
  %3799 = vmatprep.subr.mxu0 0.0
  %3800 = vmatpush1.msra.mxu0 0.0
  %3801 = vmatprep.subr.mxu0 0.0
  %3802 = vmatpush1.msra.mxu0 0.0
  %3803 = vmatprep.subr.mxu0 0.0
  %3804 = vmatpush1.msra.mxu0 0.0
  %3805 = vmatprep.subr.mxu0 0.0
  %3806 = vmatpush1.msra.mxu0 0.0
  %3807 = vmatprep.subr.mxu0 0.0
  %3808 = vmatpush1.msra.mxu0 0.0
  %3809 = vmatprep.subr.mxu0 0.0
  %3810 = vmatpush1.msra.mxu0 0.0
  %3811 = vmatprep.subr.mxu0 0.0
  %3812 = vmatpush1.msra.mxu0 0.0
  %3813 = vmatprep.subr.mxu0 0.0
  %3814 = vmatpush1.msra.mxu0 0.0
  %3815 = vmatprep.mubr.f32.mxu0 0.0
  %3816 = vmatmul.mubr.f32.gmra.mrb[0].mxu0 %v3749
  %v3817 = vpop.f32.mrb[0].mxu0
  %v3818 = vadd.f32 %v3742, %v3817
  %v3819 = vpop.f32.mrb[0].mxu0
  %3820 = vdwg.mxu0
  %v3821 = vadd.f32 %v3818, %v2924
  %v3822 = vxor.u32 %v3821, 2147483648
  %v3823 = vmul.f32 %v3822, 1.442695
  %v3824 = vpow.pop %v3823
  %v3825 = vadd.f32 %v3824, 1.0
  %v3826 = vrcp.pop %v3825
  %v3827 = vmul.f32 1.0, %v3826
  %v3828 = vtanh.pop %v3821
  %v3829 = vmul.f32 %v3827, %v3392
  %3831 = vrot.lane.b32.xlu0 %v3828, 64
  %v3832 = vpop.permute.xlu0 %3831
  %v3834 = vmul.f32 %v3827, %v3832
  %3836 = vrot.lane.b32.xlu0 %v3834, 32
  %v3837 = vpop.permute.xlu0 %3836
  %v3839 = vadd.f32 %v3829, %v3837
  %v3840 = vtanh.pop %v3839
  %3842 = vrot.lane.b32.xlu0 %v3840, 64
  %v3843 = vpop.permute.xlu0 %3842
  %v3845 = vmul.f32 %v3827, %v3843
  %3847 = vrot.lane.b32.xlu0 %v3573, 32
  %v3848 = vpop.permute.xlu0 %3847
  %v3849 = vsel %vm2603, %v3848, 0
  %3851 = vmatprep.subr.mxu0 0.0
  %3852 = vmatpush1.msra.mxu0 %v2584
  %3853 = vmatprep.subr.mxu0 0.0
  %3854 = vmatpush1.msra.mxu0 %v2585
  %3855 = vmatprep.subr.mxu0 0.0
  %3856 = vmatpush1.msra.mxu0 %v2586
  %3857 = vmatprep.subr.mxu0 0.0
  %3858 = vmatpush1.msra.mxu0 %v2587
  %3859 = vmatprep.subr.mxu0 0.0
  %3860 = vmatpush1.msra.mxu0 0.0
  %3861 = vmatprep.subr.mxu0 0.0
  %3862 = vmatpush1.msra.mxu0 0.0
  %3863 = vmatprep.subr.mxu0 0.0
  %3864 = vmatpush1.msra.mxu0 0.0
  %3865 = vmatprep.subr.mxu0 0.0
  %3866 = vmatpush1.msra.mxu0 0.0
  %3867 = vmatprep.subr.mxu0 0.0
  %3868 = vmatpush1.msra.mxu0 0.0
  %3869 = vmatprep.subr.mxu0 0.0
  %3870 = vmatpush1.msra.mxu0 0.0
  %3871 = vmatprep.subr.mxu0 0.0
  %3872 = vmatpush1.msra.mxu0 0.0
  %3873 = vmatprep.subr.mxu0 0.0
  %3874 = vmatpush1.msra.mxu0 0.0
  %3875 = vmatprep.subr.mxu0 0.0
  %3876 = vmatpush1.msra.mxu0 0.0
  %3877 = vmatprep.subr.mxu0 0.0
  %3878 = vmatpush1.msra.mxu0 0.0
  %3879 = vmatprep.subr.mxu0 0.0
  %3880 = vmatpush1.msra.mxu0 0.0
  %3881 = vmatprep.subr.mxu0 0.0
  %3882 = vmatpush1.msra.mxu0 0.0
  %3883 = vmatprep.subr.mxu0 0.0
  %3884 = vmatpush1.msra.mxu0 0.0
  %3885 = vmatprep.subr.mxu0 0.0
  %3886 = vmatpush1.msra.mxu0 0.0
  %3887 = vmatprep.subr.mxu0 0.0
  %3888 = vmatpush1.msra.mxu0 0.0
  %3889 = vmatprep.subr.mxu0 0.0
  %3890 = vmatpush1.msra.mxu0 0.0
  %3891 = vmatprep.subr.mxu0 0.0
  %3892 = vmatpush1.msra.mxu0 0.0
  %3893 = vmatprep.subr.mxu0 0.0
  %3894 = vmatpush1.msra.mxu0 0.0
  %3895 = vmatprep.subr.mxu0 0.0
  %3896 = vmatpush1.msra.mxu0 0.0
  %3897 = vmatprep.subr.mxu0 0.0
  %3898 = vmatpush1.msra.mxu0 0.0
  %3899 = vmatprep.subr.mxu0 0.0
  %3900 = vmatpush1.msra.mxu0 0.0
  %3901 = vmatprep.subr.mxu0 0.0
  %3902 = vmatpush1.msra.mxu0 0.0
  %3903 = vmatprep.subr.mxu0 0.0
  %3904 = vmatpush1.msra.mxu0 0.0
  %3905 = vmatprep.subr.mxu0 0.0
  %3906 = vmatpush1.msra.mxu0 0.0
  %3907 = vmatprep.subr.mxu0 0.0
  %3908 = vmatpush1.msra.mxu0 0.0
  %3909 = vmatprep.subr.mxu0 0.0
  %3910 = vmatpush1.msra.mxu0 0.0
  %3911 = vmatprep.subr.mxu0 0.0
  %3912 = vmatpush1.msra.mxu0 0.0
  %3913 = vmatprep.subr.mxu0 0.0
  %3914 = vmatpush1.msra.mxu0 0.0
  %3915 = vmatprep.mubr.f32.mxu0 0.0
  %3916 = vmatmul.mubr.f32.gmra.mrb[0].mxu0 %v3849
  %v3917 = vpop.f32.mrb[0].mxu0
  %v3918 = vadd.f32 0.0, %v3917
  %v3919 = vpop.f32.mrb[0].mxu0
  %3920 = vdwg.mxu0
  %3922 = vrot.lane.b32.xlu0 %v3845, 32
  %v3923 = vpop.permute.xlu0 %3922
  %v3924 = vsel %vm2603, %v3923, 0
  %3926 = vmatprep.subr.mxu0 0.0
  %3927 = vmatpush1.msra.mxu0 %v2574
  %3928 = vmatprep.subr.mxu0 0.0
  %3929 = vmatpush1.msra.mxu0 %v2575
  %3930 = vmatprep.subr.mxu0 0.0
  %3931 = vmatpush1.msra.mxu0 %v2576
  %3932 = vmatprep.subr.mxu0 0.0
  %3933 = vmatpush1.msra.mxu0 %v2577
  %3934 = vmatprep.subr.mxu0 0.0
  %3935 = vmatpush1.msra.mxu0 0.0
  %3936 = vmatprep.subr.mxu0 0.0
  %3937 = vmatpush1.msra.mxu0 0.0
  %3938 = vmatprep.subr.mxu0 0.0
  %3939 = vmatpush1.msra.mxu0 0.0
  %3940 = vmatprep.subr.mxu0 0.0
  %3941 = vmatpush1.msra.mxu0 0.0
  %3942 = vmatprep.subr.mxu0 0.0
  %3943 = vmatpush1.msra.mxu0 0.0
  %3944 = vmatprep.subr.mxu0 0.0
  %3945 = vmatpush1.msra.mxu0 0.0
  %3946 = vmatprep.subr.mxu0 0.0
  %3947 = vmatpush1.msra.mxu0 0.0
  %3948 = vmatprep.subr.mxu0 0.0
  %3949 = vmatpush1.msra.mxu0 0.0
  %3950 = vmatprep.subr.mxu0 0.0
  %3951 = vmatpush1.msra.mxu0 0.0
  %3952 = vmatprep.subr.mxu0 0.0
  %3953 = vmatpush1.msra.mxu0 0.0
  %3954 = vmatprep.subr.mxu0 0.0
  %3955 = vmatpush1.msra.mxu0 0.0
  %3956 = vmatprep.subr.mxu0 0.0
  %3957 = vmatpush1.msra.mxu0 0.0
  %3958 = vmatprep.subr.mxu0 0.0
  %3959 = vmatpush1.msra.mxu0 0.0
  %3960 = vmatprep.subr.mxu0 0.0
  %3961 = vmatpush1.msra.mxu0 0.0
  %3962 = vmatprep.subr.mxu0 0.0
  %3963 = vmatpush1.msra.mxu0 0.0
  %3964 = vmatprep.subr.mxu0 0.0
  %3965 = vmatpush1.msra.mxu0 0.0
  %3966 = vmatprep.subr.mxu0 0.0
  %3967 = vmatpush1.msra.mxu0 0.0
  %3968 = vmatprep.subr.mxu0 0.0
  %3969 = vmatpush1.msra.mxu0 0.0
  %3970 = vmatprep.subr.mxu0 0.0
  %3971 = vmatpush1.msra.mxu0 0.0
  %3972 = vmatprep.subr.mxu0 0.0
  %3973 = vmatpush1.msra.mxu0 0.0
  %3974 = vmatprep.subr.mxu0 0.0
  %3975 = vmatpush1.msra.mxu0 0.0
  %3976 = vmatprep.subr.mxu0 0.0
  %3977 = vmatpush1.msra.mxu0 0.0
  %3978 = vmatprep.subr.mxu0 0.0
  %3979 = vmatpush1.msra.mxu0 0.0
  %3980 = vmatprep.subr.mxu0 0.0
  %3981 = vmatpush1.msra.mxu0 0.0
  %3982 = vmatprep.subr.mxu0 0.0
  %3983 = vmatpush1.msra.mxu0 0.0
  %3984 = vmatprep.subr.mxu0 0.0
  %3985 = vmatpush1.msra.mxu0 0.0
  %3986 = vmatprep.subr.mxu0 0.0
  %3987 = vmatpush1.msra.mxu0 0.0
  %3988 = vmatprep.subr.mxu0 0.0
  %3989 = vmatpush1.msra.mxu0 0.0
  %3990 = vmatprep.mubr.f32.mxu0 0.0
  %3991 = vmatmul.mubr.f32.gmra.mrb[0].mxu0 %v3924
  %v3992 = vpop.f32.mrb[0].mxu0
  %v3993 = vadd.f32 %v3918, %v3992
  %v3994 = vpop.f32.mrb[0].mxu0
  %3995 = vdwg.mxu0
  %v3996 = vadd.f32 %v3993, %v3100
  %v3997 = vxor.u32 %v3996, 2147483648
  %v3998 = vmul.f32 %v3997, 1.442695
  %v3999 = vpow.pop %v3998
  %v4000 = vadd.f32 %v3999, 1.0
  %v4001 = vrcp.pop %v4000
  %v4002 = vmul.f32 1.0, %v4001
  %v4003 = vtanh.pop %v3996
  %v4004 = vmul.f32 %v4002, %v3567
  %4006 = vrot.lane.b32.xlu0 %v4003, 64
  %v4007 = vpop.permute.xlu0 %4006
  %v4009 = vmul.f32 %v4002, %v4007
  %4011 = vrot.lane.b32.xlu0 %v4009, 32
  %v4012 = vpop.permute.xlu0 %4011
  %v4014 = vadd.f32 %v4004, %v4012
  %v4015 = vtanh.pop %v4014
  %4017 = vrot.lane.b32.xlu0 %v4015, 64
  %v4018 = vpop.permute.xlu0 %4017
  %v4020 = vmul.f32 %v4002, %v4018
  %4021 = vmatprep.subr.mxu0 0.0
  %4022 = vmatpush1.msra.mxu0 %v2564
  %4023 = vmatprep.subr.mxu0 0.0
  %4024 = vmatpush1.msra.mxu0 %v2565
  %4025 = vmatprep.subr.mxu0 0.0
  %4026 = vmatpush1.msra.mxu0 %v2566
  %4027 = vmatprep.subr.mxu0 0.0
  %4028 = vmatpush1.msra.mxu0 %v2567
  %4029 = vmatprep.subr.mxu0 0.0
  %4030 = vmatpush1.msra.mxu0 0.0
  %4031 = vmatprep.subr.mxu0 0.0
  %4032 = vmatpush1.msra.mxu0 0.0
  %4033 = vmatprep.subr.mxu0 0.0
  %4034 = vmatpush1.msra.mxu0 0.0
  %4035 = vmatprep.subr.mxu0 0.0
  %4036 = vmatpush1.msra.mxu0 0.0
  %4037 = vmatprep.subr.mxu0 0.0
  %4038 = vmatpush1.msra.mxu0 0.0
  %4039 = vmatprep.subr.mxu0 0.0
  %4040 = vmatpush1.msra.mxu0 0.0
  %4041 = vmatprep.subr.mxu0 0.0
  %4042 = vmatpush1.msra.mxu0 0.0
  %4043 = vmatprep.subr.mxu0 0.0
  %4044 = vmatpush1.msra.mxu0 0.0
  %4045 = vmatprep.subr.mxu0 0.0
  %4046 = vmatpush1.msra.mxu0 0.0
  %4047 = vmatprep.subr.mxu0 0.0
  %4048 = vmatpush1.msra.mxu0 0.0
  %4049 = vmatprep.subr.mxu0 0.0
  %4050 = vmatpush1.msra.mxu0 0.0
  %4051 = vmatprep.subr.mxu0 0.0
  %4052 = vmatpush1.msra.mxu0 0.0
  %4053 = vmatprep.subr.mxu0 0.0
  %4054 = vmatpush1.msra.mxu0 0.0
  %4055 = vmatprep.subr.mxu0 0.0
  %4056 = vmatpush1.msra.mxu0 0.0
  %4057 = vmatprep.subr.mxu0 0.0
  %4058 = vmatpush1.msra.mxu0 0.0
  %4059 = vmatprep.subr.mxu0 0.0
  %4060 = vmatpush1.msra.mxu0 0.0
  %4061 = vmatprep.subr.mxu0 0.0
  %4062 = vmatpush1.msra.mxu0 0.0
  %4063 = vmatprep.subr.mxu0 0.0
  %4064 = vmatpush1.msra.mxu0 0.0
  %4065 = vmatprep.subr.mxu0 0.0
  %4066 = vmatpush1.msra.mxu0 0.0
  %4067 = vmatprep.subr.mxu0 0.0
  %4068 = vmatpush1.msra.mxu0 0.0
  %4069 = vmatprep.subr.mxu0 0.0
  %4070 = vmatpush1.msra.mxu0 0.0
  %4071 = vmatprep.subr.mxu0 0.0
  %4072 = vmatpush1.msra.mxu0 0.0
  %4073 = vmatprep.subr.mxu0 0.0
  %4074 = vmatpush1.msra.mxu0 0.0
  %4075 = vmatprep.subr.mxu0 0.0
  %4076 = vmatpush1.msra.mxu0 0.0
  %4077 = vmatprep.subr.mxu0 0.0
  %4078 = vmatpush1.msra.mxu0 0.0
  %4079 = vmatprep.subr.mxu0 0.0
  %4080 = vmatpush1.msra.mxu0 0.0
  %4081 = vmatprep.subr.mxu0 0.0
  %4082 = vmatpush1.msra.mxu0 0.0
  %4083 = vmatprep.subr.mxu0 0.0
  %4084 = vmatpush1.msra.mxu0 0.0
  %4085 = vmatprep.mubr.f32.mxu0 0.0
  %4086 = vmatmul.mubr.f32.gmra.mrb[0].mxu0 %v3749
  %v4087 = vpop.f32.mrb[0].mxu0
  %v4088 = vadd.f32 0.0, %v4087
  %v4089 = vpop.f32.mrb[0].mxu0
  %4090 = vdwg.mxu0
  %v4092 = vrot.slane %v4088, 2
  %v4094 = vadd.f32 %v2674, %v4092
  %v4095 = vxor.u32 %v4094, 2147483648
  %v4096 = vmul.f32 %v4095, 1.442695
  %v4097 = vpow.pop %v4096
  %v4098 = vadd.f32 %v4097, 1.0
  %v4099 = vrcp.pop %v4098
  %v4100 = vmul.f32 1.0, %v4099
  %v4101 = vtanh.pop %v4094
  %v4103 = vrot.slane %v3668, 6
  %v4105 = vmul.f32 %v4100, %v4103
  %4107 = vrot.lane.b32.xlu0 %v4101, 64
  %v4108 = vpop.permute.xlu0 %4107
  %v4110 = vmul.f32 %v4100, %v4108
  %4112 = vrot.lane.b32.xlu0 %v4110, 32
  %v4113 = vpop.permute.xlu0 %4112
  %v4115 = vadd.f32 %v4105, %v4113
  %v4116 = vtanh.pop %v4115
  %4118 = vrot.lane.b32.xlu0 %v4116, 64
  %v4119 = vpop.permute.xlu0 %4118
  %v4121 = vmul.f32 %v4100, %v4119
  %4122 = vmatprep.subr.mxu0 0.0
  %4123 = vmatpush1.msra.mxu0 %v2579
  %4124 = vmatprep.subr.mxu0 0.0
  %4125 = vmatpush1.msra.mxu0 %v2580
  %4126 = vmatprep.subr.mxu0 0.0
  %4127 = vmatpush1.msra.mxu0 %v2581
  %4128 = vmatprep.subr.mxu0 0.0
  %4129 = vmatpush1.msra.mxu0 %v2582
  %4130 = vmatprep.subr.mxu0 0.0
  %4131 = vmatpush1.msra.mxu0 0.0
  %4132 = vmatprep.subr.mxu0 0.0
  %4133 = vmatpush1.msra.mxu0 0.0
  %4134 = vmatprep.subr.mxu0 0.0
  %4135 = vmatpush1.msra.mxu0 0.0
  %4136 = vmatprep.subr.mxu0 0.0
  %4137 = vmatpush1.msra.mxu0 0.0
  %4138 = vmatprep.subr.mxu0 0.0
  %4139 = vmatpush1.msra.mxu0 0.0
  %4140 = vmatprep.subr.mxu0 0.0
  %4141 = vmatpush1.msra.mxu0 0.0
  %4142 = vmatprep.subr.mxu0 0.0
  %4143 = vmatpush1.msra.mxu0 0.0
  %4144 = vmatprep.subr.mxu0 0.0
  %4145 = vmatpush1.msra.mxu0 0.0
  %4146 = vmatprep.subr.mxu0 0.0
  %4147 = vmatpush1.msra.mxu0 0.0
  %4148 = vmatprep.subr.mxu0 0.0
  %4149 = vmatpush1.msra.mxu0 0.0
  %4150 = vmatprep.subr.mxu0 0.0
  %4151 = vmatpush1.msra.mxu0 0.0
  %4152 = vmatprep.subr.mxu0 0.0
  %4153 = vmatpush1.msra.mxu0 0.0
  %4154 = vmatprep.subr.mxu0 0.0
  %4155 = vmatpush1.msra.mxu0 0.0
  %4156 = vmatprep.subr.mxu0 0.0
  %4157 = vmatpush1.msra.mxu0 0.0
  %4158 = vmatprep.subr.mxu0 0.0
  %4159 = vmatpush1.msra.mxu0 0.0
  %4160 = vmatprep.subr.mxu0 0.0
  %4161 = vmatpush1.msra.mxu0 0.0
  %4162 = vmatprep.subr.mxu0 0.0
  %4163 = vmatpush1.msra.mxu0 0.0
  %4164 = vmatprep.subr.mxu0 0.0
  %4165 = vmatpush1.msra.mxu0 0.0
  %4166 = vmatprep.subr.mxu0 0.0
  %4167 = vmatpush1.msra.mxu0 0.0
  %4168 = vmatprep.subr.mxu0 0.0
  %4169 = vmatpush1.msra.mxu0 0.0
  %4170 = vmatprep.subr.mxu0 0.0
  %4171 = vmatpush1.msra.mxu0 0.0
  %4172 = vmatprep.subr.mxu0 0.0
  %4173 = vmatpush1.msra.mxu0 0.0
  %4174 = vmatprep.subr.mxu0 0.0
  %4175 = vmatpush1.msra.mxu0 0.0
  %4176 = vmatprep.subr.mxu0 0.0
  %4177 = vmatpush1.msra.mxu0 0.0
  %4178 = vmatprep.subr.mxu0 0.0
  %4179 = vmatpush1.msra.mxu0 0.0
  %4180 = vmatprep.subr.mxu0 0.0
  %4181 = vmatpush1.msra.mxu0 0.0
  %4182 = vmatprep.subr.mxu0 0.0
  %4183 = vmatpush1.msra.mxu0 0.0
  %4184 = vmatprep.subr.mxu0 0.0
  %4185 = vmatpush1.msra.mxu0 0.0
  %4186 = vmatprep.mubr.f32.mxu0 0.0
  %4187 = vmatmul.mubr.f32.gmra.mrb[0].mxu0 %v3924
  %v4188 = vpop.f32.mrb[0].mxu0
  %v4189 = vadd.f32 0.0, %v4188
  %v4190 = vpop.f32.mrb[0].mxu0
  %4191 = vdwg.mxu0
  %v4193 = vrot.slane %v4121, 6
  %4194 = vrot.lane.b32.xlu0 %v4193, 32
  %v4195 = vpop.permute.xlu0 %4194
  %v4196 = vsel %vm2603, %v4195, 0
  %4198 = vmatprep.subr.mxu0 0.0
  %4199 = vmatpush1.msra.mxu0 %v2569
  %4200 = vmatprep.subr.mxu0 0.0
  %4201 = vmatpush1.msra.mxu0 %v2570
  %4202 = vmatprep.subr.mxu0 0.0
  %4203 = vmatpush1.msra.mxu0 %v2571
  %4204 = vmatprep.subr.mxu0 0.0
  %4205 = vmatpush1.msra.mxu0 %v2572
  %4206 = vmatprep.subr.mxu0 0.0
  %4207 = vmatpush1.msra.mxu0 0.0
  %4208 = vmatprep.subr.mxu0 0.0
  %4209 = vmatpush1.msra.mxu0 0.0
  %4210 = vmatprep.subr.mxu0 0.0
  %4211 = vmatpush1.msra.mxu0 0.0
  %4212 = vmatprep.subr.mxu0 0.0
  %4213 = vmatpush1.msra.mxu0 0.0
  %4214 = vmatprep.subr.mxu0 0.0
  %4215 = vmatpush1.msra.mxu0 0.0
  %4216 = vmatprep.subr.mxu0 0.0
  %4217 = vmatpush1.msra.mxu0 0.0
  %4218 = vmatprep.subr.mxu0 0.0
  %4219 = vmatpush1.msra.mxu0 0.0
  %4220 = vmatprep.subr.mxu0 0.0
  %4221 = vmatpush1.msra.mxu0 0.0
  %4222 = vmatprep.subr.mxu0 0.0
  %4223 = vmatpush1.msra.mxu0 0.0
  %4224 = vmatprep.subr.mxu0 0.0
  %4225 = vmatpush1.msra.mxu0 0.0
  %4226 = vmatprep.subr.mxu0 0.0
  %4227 = vmatpush1.msra.mxu0 0.0
  %4228 = vmatprep.subr.mxu0 0.0
  %4229 = vmatpush1.msra.mxu0 0.0
  %4230 = vmatprep.subr.mxu0 0.0
  %4231 = vmatpush1.msra.mxu0 0.0
  %4232 = vmatprep.subr.mxu0 0.0
  %4233 = vmatpush1.msra.mxu0 0.0
  %4234 = vmatprep.subr.mxu0 0.0
  %4235 = vmatpush1.msra.mxu0 0.0
  %4236 = vmatprep.subr.mxu0 0.0
  %4237 = vmatpush1.msra.mxu0 0.0
  %4238 = vmatprep.subr.mxu0 0.0
  %4239 = vmatpush1.msra.mxu0 0.0
  %4240 = vmatprep.subr.mxu0 0.0
  %4241 = vmatpush1.msra.mxu0 0.0
  %4242 = vmatprep.subr.mxu0 0.0
  %4243 = vmatpush1.msra.mxu0 0.0
  %4244 = vmatprep.subr.mxu0 0.0
  %4245 = vmatpush1.msra.mxu0 0.0
  %4246 = vmatprep.subr.mxu0 0.0
  %4247 = vmatpush1.msra.mxu0 0.0
  %4248 = vmatprep.subr.mxu0 0.0
  %4249 = vmatpush1.msra.mxu0 0.0
  %4250 = vmatprep.subr.mxu0 0.0
  %4251 = vmatpush1.msra.mxu0 0.0
  %4252 = vmatprep.subr.mxu0 0.0
  %4253 = vmatpush1.msra.mxu0 0.0
  %4254 = vmatprep.subr.mxu0 0.0
  %4255 = vmatpush1.msra.mxu0 0.0
  %4256 = vmatprep.subr.mxu0 0.0
  %4257 = vmatpush1.msra.mxu0 0.0
  %4258 = vmatprep.subr.mxu0 0.0
  %4259 = vmatpush1.msra.mxu0 0.0
  %4260 = vmatprep.subr.mxu0 0.0
  %4261 = vmatpush1.msra.mxu0 0.0
  %4262 = vmatprep.mubr.f32.mxu0 0.0
  %4263 = vmatmul.mubr.f32.gmra.mrb[0].mxu0 %v4196
  %v4264 = vpop.f32.mrb[0].mxu0
  %v4265 = vadd.f32 %v4189, %v4264
  %v4266 = vpop.f32.mrb[0].mxu0
  %4267 = vdwg.mxu0
  %v4268 = vadd.f32 %v4265, %v2924
  %v4269 = vxor.u32 %v4268, 2147483648
  %v4270 = vmul.f32 %v4269, 1.442695
  %v4271 = vpow.pop %v4270
  %v4272 = vadd.f32 %v4271, 1.0
  %v4273 = vrcp.pop %v4272
  %v4274 = vmul.f32 1.0, %v4273
  %v4275 = vtanh.pop %v4268
  %v4276 = vmul.f32 %v4274, %v3839
  %4278 = vrot.lane.b32.xlu0 %v4275, 64
  %v4279 = vpop.permute.xlu0 %4278
  %v4281 = vmul.f32 %v4274, %v4279
  %4283 = vrot.lane.b32.xlu0 %v4281, 32
  %v4284 = vpop.permute.xlu0 %4283
  %v4286 = vadd.f32 %v4276, %v4284
  %v4287 = vtanh.pop %v4286
  %4289 = vrot.lane.b32.xlu0 %v4287, 64
  %v4290 = vpop.permute.xlu0 %4289
  %v4292 = vmul.f32 %v4274, %v4290
  %4294 = vrot.lane.b32.xlu0 %v4020, 32
  %v4295 = vpop.permute.xlu0 %4294
  %v4296 = vsel %vm2603, %v4295, 0
  %4298 = vmatprep.subr.mxu0 0.0
  %4299 = vmatpush1.msra.mxu0 %v2584
  %4300 = vmatprep.subr.mxu0 0.0
  %4301 = vmatpush1.msra.mxu0 %v2585
  %4302 = vmatprep.subr.mxu0 0.0
  %4303 = vmatpush1.msra.mxu0 %v2586
  %4304 = vmatprep.subr.mxu0 0.0
  %4305 = vmatpush1.msra.mxu0 %v2587
  %4306 = vmatprep.subr.mxu0 0.0
  %4307 = vmatpush1.msra.mxu0 0.0
  %4308 = vmatprep.subr.mxu0 0.0
  %4309 = vmatpush1.msra.mxu0 0.0
  %4310 = vmatprep.subr.mxu0 0.0
  %4311 = vmatpush1.msra.mxu0 0.0
  %4312 = vmatprep.subr.mxu0 0.0
  %4313 = vmatpush1.msra.mxu0 0.0
  %4314 = vmatprep.subr.mxu0 0.0
  %4315 = vmatpush1.msra.mxu0 0.0
  %4316 = vmatprep.subr.mxu0 0.0
  %4317 = vmatpush1.msra.mxu0 0.0
  %4318 = vmatprep.subr.mxu0 0.0
  %4319 = vmatpush1.msra.mxu0 0.0
  %4320 = vmatprep.subr.mxu0 0.0
  %4321 = vmatpush1.msra.mxu0 0.0
  %4322 = vmatprep.subr.mxu0 0.0
  %4323 = vmatpush1.msra.mxu0 0.0
  %4324 = vmatprep.subr.mxu0 0.0
  %4325 = vmatpush1.msra.mxu0 0.0
  %4326 = vmatprep.subr.mxu0 0.0
  %4327 = vmatpush1.msra.mxu0 0.0
  %4328 = vmatprep.subr.mxu0 0.0
  %4329 = vmatpush1.msra.mxu0 0.0
  %4330 = vmatprep.subr.mxu0 0.0
  %4331 = vmatpush1.msra.mxu0 0.0
  %4332 = vmatprep.subr.mxu0 0.0
  %4333 = vmatpush1.msra.mxu0 0.0
  %4334 = vmatprep.subr.mxu0 0.0
  %4335 = vmatpush1.msra.mxu0 0.0
  %4336 = vmatprep.subr.mxu0 0.0
  %4337 = vmatpush1.msra.mxu0 0.0
  %4338 = vmatprep.subr.mxu0 0.0
  %4339 = vmatpush1.msra.mxu0 0.0
  %4340 = vmatprep.subr.mxu0 0.0
  %4341 = vmatpush1.msra.mxu0 0.0
  %4342 = vmatprep.subr.mxu0 0.0
  %4343 = vmatpush1.msra.mxu0 0.0
  %4344 = vmatprep.subr.mxu0 0.0
  %4345 = vmatpush1.msra.mxu0 0.0
  %4346 = vmatprep.subr.mxu0 0.0
  %4347 = vmatpush1.msra.mxu0 0.0
  %4348 = vmatprep.subr.mxu0 0.0
  %4349 = vmatpush1.msra.mxu0 0.0
  %4350 = vmatprep.subr.mxu0 0.0
  %4351 = vmatpush1.msra.mxu0 0.0
  %4352 = vmatprep.subr.mxu0 0.0
  %4353 = vmatpush1.msra.mxu0 0.0
  %4354 = vmatprep.subr.mxu0 0.0
  %4355 = vmatpush1.msra.mxu0 0.0
  %4356 = vmatprep.subr.mxu0 0.0
  %4357 = vmatpush1.msra.mxu0 0.0
  %4358 = vmatprep.subr.mxu0 0.0
  %4359 = vmatpush1.msra.mxu0 0.0
  %4360 = vmatprep.subr.mxu0 0.0
  %4361 = vmatpush1.msra.mxu0 0.0
  %4362 = vmatprep.mubr.f32.mxu0 0.0
  %4363 = vmatmul.mubr.f32.gmra.mrb[0].mxu0 %v4296
  %v4364 = vpop.f32.mrb[0].mxu0
  %v4365 = vadd.f32 0.0, %v4364
  %v4366 = vpop.f32.mrb[0].mxu0
  %4367 = vdwg.mxu0
  %4369 = vrot.lane.b32.xlu0 %v4292, 32
  %v4370 = vpop.permute.xlu0 %4369
  %v4371 = vsel %vm2603, %v4370, 0
  %4373 = vmatprep.subr.mxu0 0.0
  %4374 = vmatpush1.msra.mxu0 %v2574
  %4375 = vmatprep.subr.mxu0 0.0
  %4376 = vmatpush1.msra.mxu0 %v2575
  %4377 = vmatprep.subr.mxu0 0.0
  %4378 = vmatpush1.msra.mxu0 %v2576
  %4379 = vmatprep.subr.mxu0 0.0
  %4380 = vmatpush1.msra.mxu0 %v2577
  %4381 = vmatprep.subr.mxu0 0.0
  %4382 = vmatpush1.msra.mxu0 0.0
  %4383 = vmatprep.subr.mxu0 0.0
  %4384 = vmatpush1.msra.mxu0 0.0
  %4385 = vmatprep.subr.mxu0 0.0
  %4386 = vmatpush1.msra.mxu0 0.0
  %4387 = vmatprep.subr.mxu0 0.0
  %4388 = vmatpush1.msra.mxu0 0.0
  %4389 = vmatprep.subr.mxu0 0.0
  %4390 = vmatpush1.msra.mxu0 0.0
  %4391 = vmatprep.subr.mxu0 0.0
  %4392 = vmatpush1.msra.mxu0 0.0
  %4393 = vmatprep.subr.mxu0 0.0
  %4394 = vmatpush1.msra.mxu0 0.0
  %4395 = vmatprep.subr.mxu0 0.0
  %4396 = vmatpush1.msra.mxu0 0.0
  %4397 = vmatprep.subr.mxu0 0.0
  %4398 = vmatpush1.msra.mxu0 0.0
  %4399 = vmatprep.subr.mxu0 0.0
  %4400 = vmatpush1.msra.mxu0 0.0
  %4401 = vmatprep.subr.mxu0 0.0
  %4402 = vmatpush1.msra.mxu0 0.0
  %4403 = vmatprep.subr.mxu0 0.0
  %4404 = vmatpush1.msra.mxu0 0.0
  %4405 = vmatprep.subr.mxu0 0.0
  %4406 = vmatpush1.msra.mxu0 0.0
  %4407 = vmatprep.subr.mxu0 0.0
  %4408 = vmatpush1.msra.mxu0 0.0
  %4409 = vmatprep.subr.mxu0 0.0
  %4410 = vmatpush1.msra.mxu0 0.0
  %4411 = vmatprep.subr.mxu0 0.0
  %4412 = vmatpush1.msra.mxu0 0.0
  %4413 = vmatprep.subr.mxu0 0.0
  %4414 = vmatpush1.msra.mxu0 0.0
  %4415 = vmatprep.subr.mxu0 0.0
  %4416 = vmatpush1.msra.mxu0 0.0
  %4417 = vmatprep.subr.mxu0 0.0
  %4418 = vmatpush1.msra.mxu0 0.0
  %4419 = vmatprep.subr.mxu0 0.0
  %4420 = vmatpush1.msra.mxu0 0.0
  %4421 = vmatprep.subr.mxu0 0.0
  %4422 = vmatpush1.msra.mxu0 0.0
  %4423 = vmatprep.subr.mxu0 0.0
  %4424 = vmatpush1.msra.mxu0 0.0
  %4425 = vmatprep.subr.mxu0 0.0
  %4426 = vmatpush1.msra.mxu0 0.0
  %4427 = vmatprep.subr.mxu0 0.0
  %4428 = vmatpush1.msra.mxu0 0.0
  %4429 = vmatprep.subr.mxu0 0.0
  %4430 = vmatpush1.msra.mxu0 0.0
  %4431 = vmatprep.subr.mxu0 0.0
  %4432 = vmatpush1.msra.mxu0 0.0
  %4433 = vmatprep.subr.mxu0 0.0
  %4434 = vmatpush1.msra.mxu0 0.0
  %4435 = vmatprep.subr.mxu0 0.0
  %4436 = vmatpush1.msra.mxu0 0.0
  %4437 = vmatprep.mubr.f32.mxu0 0.0
  %4438 = vmatmul.mubr.f32.gmra.mrb[0].mxu0 %v4371
  %v4439 = vpop.f32.mrb[0].mxu0
  %v4440 = vadd.f32 %v4365, %v4439
  %v4441 = vpop.f32.mrb[0].mxu0
  %4442 = vdwg.mxu0
  %v4443 = vadd.f32 %v4440, %v3100
  %v4444 = vxor.u32 %v4443, 2147483648
  %v4445 = vmul.f32 %v4444, 1.442695
  %v4446 = vpow.pop %v4445
  %v4447 = vadd.f32 %v4446, 1.0
  %v4448 = vrcp.pop %v4447
  %v4449 = vmul.f32 1.0, %v4448
  %v4450 = vtanh.pop %v4443
  %v4451 = vmul.f32 %v4449, %v4014
  %4453 = vrot.lane.b32.xlu0 %v4450, 64
  %v4454 = vpop.permute.xlu0 %4453
  %v4456 = vmul.f32 %v4449, %v4454
  %4458 = vrot.lane.b32.xlu0 %v4456, 32
  %v4459 = vpop.permute.xlu0 %4458
  %v4461 = vadd.f32 %v4451, %v4459
  %v4462 = vtanh.pop %v4461
  %4464 = vrot.lane.b32.xlu0 %v4462, 64
  %v4465 = vpop.permute.xlu0 %4464
  %v4467 = vmul.f32 %v4449, %v4465
  %v4468 = vld [vmem:[%s13] sm:$0xff]
  %v4469 = vld [vmem:[%s13 + $0x8] sm:$0xff]
  %v4470 = vld [vmem:[%s13 + $0x10] sm:$0xff]
  %v4471 = vld [vmem:[%s13 + $0x18] sm:$0xff]
  %v4472 = vld [vmem:[%s14] sm:$0x1]
  %v4474 = vlaneseq
  %v4475 = vshrl.u32 %v4474, 7
  %v4476 = vsub.s32 0, %v4475
  %v4477 = vrot.slane %v4472, %v4476
  %4480 = vrot.lane.b32.xlu0 %v4467, 32
  %v4481 = vpop.permute.xlu0 %4480
  %v4482 = vsel %vm2603, %v4481, 0
  %4484 = vmatprep.subr.mxu0 0.0
  %4485 = vmatpush1.msra.mxu0 %v4468
  %4486 = vmatprep.subr.mxu0 0.0
  %4487 = vmatpush1.msra.mxu0 %v4469
  %4488 = vmatprep.subr.mxu0 0.0
  %4489 = vmatpush1.msra.mxu0 %v4470
  %4490 = vmatprep.subr.mxu0 0.0
  %4491 = vmatpush1.msra.mxu0 %v4471
  %4492 = vmatprep.subr.mxu0 0.0
  %4493 = vmatpush1.msra.mxu0 0.0
  %4494 = vmatprep.subr.mxu0 0.0
  %4495 = vmatpush1.msra.mxu0 0.0
  %4496 = vmatprep.subr.mxu0 0.0
  %4497 = vmatpush1.msra.mxu0 0.0
  %4498 = vmatprep.subr.mxu0 0.0
  %4499 = vmatpush1.msra.mxu0 0.0
  %4500 = vmatprep.subr.mxu0 0.0
  %4501 = vmatpush1.msra.mxu0 0.0
  %4502 = vmatprep.subr.mxu0 0.0
  %4503 = vmatpush1.msra.mxu0 0.0
  %4504 = vmatprep.subr.mxu0 0.0
  %4505 = vmatpush1.msra.mxu0 0.0
  %4506 = vmatprep.subr.mxu0 0.0
  %4507 = vmatpush1.msra.mxu0 0.0
  %4508 = vmatprep.subr.mxu0 0.0
  %4509 = vmatpush1.msra.mxu0 0.0
  %4510 = vmatprep.subr.mxu0 0.0
  %4511 = vmatpush1.msra.mxu0 0.0
  %4512 = vmatprep.subr.mxu0 0.0
  %4513 = vmatpush1.msra.mxu0 0.0
  %4514 = vmatprep.subr.mxu0 0.0
  %4515 = vmatpush1.msra.mxu0 0.0
  %4516 = vmatprep.subr.mxu0 0.0
  %4517 = vmatpush1.msra.mxu0 0.0
  %4518 = vmatprep.subr.mxu0 0.0
  %4519 = vmatpush1.msra.mxu0 0.0
  %4520 = vmatprep.subr.mxu0 0.0
  %4521 = vmatpush1.msra.mxu0 0.0
  %4522 = vmatprep.subr.mxu0 0.0
  %4523 = vmatpush1.msra.mxu0 0.0
  %4524 = vmatprep.subr.mxu0 0.0
  %4525 = vmatpush1.msra.mxu0 0.0
  %4526 = vmatprep.subr.mxu0 0.0
  %4527 = vmatpush1.msra.mxu0 0.0
  %4528 = vmatprep.subr.mxu0 0.0
  %4529 = vmatpush1.msra.mxu0 0.0
  %4530 = vmatprep.subr.mxu0 0.0
  %4531 = vmatpush1.msra.mxu0 0.0
  %4532 = vmatprep.subr.mxu0 0.0
  %4533 = vmatpush1.msra.mxu0 0.0
  %4534 = vmatprep.subr.mxu0 0.0
  %4535 = vmatpush1.msra.mxu0 0.0
  %4536 = vmatprep.subr.mxu0 0.0
  %4537 = vmatpush1.msra.mxu0 0.0
  %4538 = vmatprep.subr.mxu0 0.0
  %4539 = vmatpush1.msra.mxu0 0.0
  %4540 = vmatprep.subr.mxu0 0.0
  %4541 = vmatpush1.msra.mxu0 0.0
  %4542 = vmatprep.subr.mxu0 0.0
  %4543 = vmatpush1.msra.mxu0 0.0
  %4544 = vmatprep.subr.mxu0 0.0
  %4545 = vmatpush1.msra.mxu0 0.0
  %4546 = vmatprep.subr.mxu0 0.0
  %4547 = vmatpush1.msra.mxu0 0.0
  %4548 = vmatprep.mubr.f32.mxu0 0.0
  %4549 = vmatmul.mubr.f32.gmra.mrb[0].mxu0 %v4482
  %v4550 = vpop.f32.mrb[0].mxu0
  %v4551 = vadd.f32 %v4477, %v4550
  %v4552 = vpop.f32.mrb[0].mxu0
  %4553 = vdwg.mxu0
  %v4554 = vmax.f32 %v4551, 0.0
  %v4555 = vld [vmem:[%s15] sm:$0xff]
  %v4556 = vld [vmem:[%s15 + $0x8] sm:$0xff]
  %v4557 = vld [vmem:[%s15 + $0x10] sm:$0xff]
  %v4558 = vld [vmem:[%s15 + $0x18] sm:$0xff]
  %v4559 = vld [vmem:[%s16] sm:$0x1]
  %v4561 = vlaneseq
  %v4562 = vshrl.u32 %v4561, 7
  %v4563 = vsub.s32 0, %v4562
  %v4564 = vrot.slane %v4559, %v4563
  %v4567 = vsel %vm2603, %v4554, 0
  %4569 = vmatprep.subr.mxu0 0.0
  %4570 = vmatpush1.msra.mxu0 %v4555
  %4571 = vmatprep.subr.mxu0 0.0
  %4572 = vmatpush1.msra.mxu0 %v4556
  %4573 = vmatprep.subr.mxu0 0.0
  %4574 = vmatpush1.msra.mxu0 %v4557
  %4575 = vmatprep.subr.mxu0 0.0
  %4576 = vmatpush1.msra.mxu0 %v4558
  %4577 = vmatprep.subr.mxu0 0.0
  %4578 = vmatpush1.msra.mxu0 0.0
  %4579 = vmatprep.subr.mxu0 0.0
  %4580 = vmatpush1.msra.mxu0 0.0
  %4581 = vmatprep.subr.mxu0 0.0
  %4582 = vmatpush1.msra.mxu0 0.0
  %4583 = vmatprep.subr.mxu0 0.0
  %4584 = vmatpush1.msra.mxu0 0.0
  %4585 = vmatprep.subr.mxu0 0.0
  %4586 = vmatpush1.msra.mxu0 0.0
  %4587 = vmatprep.subr.mxu0 0.0
  %4588 = vmatpush1.msra.mxu0 0.0
  %4589 = vmatprep.subr.mxu0 0.0
  %4590 = vmatpush1.msra.mxu0 0.0
  %4591 = vmatprep.subr.mxu0 0.0
  %4592 = vmatpush1.msra.mxu0 0.0
  %4593 = vmatprep.subr.mxu0 0.0
  %4594 = vmatpush1.msra.mxu0 0.0
  %4595 = vmatprep.subr.mxu0 0.0
  %4596 = vmatpush1.msra.mxu0 0.0
  %4597 = vmatprep.subr.mxu0 0.0
  %4598 = vmatpush1.msra.mxu0 0.0
  %4599 = vmatprep.subr.mxu0 0.0
  %4600 = vmatpush1.msra.mxu0 0.0
  %4601 = vmatprep.subr.mxu0 0.0
  %4602 = vmatpush1.msra.mxu0 0.0
  %4603 = vmatprep.subr.mxu0 0.0
  %4604 = vmatpush1.msra.mxu0 0.0
  %4605 = vmatprep.subr.mxu0 0.0
  %4606 = vmatpush1.msra.mxu0 0.0
  %4607 = vmatprep.subr.mxu0 0.0
  %4608 = vmatpush1.msra.mxu0 0.0
  %4609 = vmatprep.subr.mxu0 0.0
  %4610 = vmatpush1.msra.mxu0 0.0
  %4611 = vmatprep.subr.mxu0 0.0
  %4612 = vmatpush1.msra.mxu0 0.0
  %4613 = vmatprep.subr.mxu0 0.0
  %4614 = vmatpush1.msra.mxu0 0.0
  %4615 = vmatprep.subr.mxu0 0.0
  %4616 = vmatpush1.msra.mxu0 0.0
  %4617 = vmatprep.subr.mxu0 0.0
  %4618 = vmatpush1.msra.mxu0 0.0
  %4619 = vmatprep.subr.mxu0 0.0
  %4620 = vmatpush1.msra.mxu0 0.0
  %4621 = vmatprep.subr.mxu0 0.0
  %4622 = vmatpush1.msra.mxu0 0.0
  %4623 = vmatprep.subr.mxu0 0.0
  %4624 = vmatpush1.msra.mxu0 0.0
  %4625 = vmatprep.subr.mxu0 0.0
  %4626 = vmatpush1.msra.mxu0 0.0
  %4627 = vmatprep.subr.mxu0 0.0
  %4628 = vmatpush1.msra.mxu0 0.0
  %4629 = vmatprep.subr.mxu0 0.0
  %4630 = vmatpush1.msra.mxu0 0.0
  %4631 = vmatprep.subr.mxu0 0.0
  %4632 = vmatpush1.msra.mxu0 0.0
  %4633 = vmatprep.mubr.f32.mxu0 0.0
  %4634 = vmatmul.mubr.f32.gmra.mrb[0].mxu0 %v4567
  %v4635 = vpop.f32.mrb[0].mxu0
  %v4636 = vadd.f32 %v4564, %v4635
  %v4637 = vpop.f32.mrb[0].mxu0
  %4638 = vdwg.mxu0
  %4639 = vst [vmem:[%s17] sm:$0x3] %v4636
  // Predicated region
  $region70: #{predictor_forward.1} parent=0 // pred_check
    _
  $region71: #{predictor_forward.1} parent=0 // pred_check_branch
    %4641 = sbr.rel (0) target = $region73
  $region72: #{predictor_forward.1} parent=0 // pred_region
    _
  $region73: #{predictor_forward.1} parent=0 // pred_fallthru
    _
  // Predicated region
  $region74: #{predictor_forward.1} parent=0 // pred_check
    _
  $region75: #{predictor_forward.1} parent=0 // pred_check_branch
    %4643 = sbr.rel (0) target = $region77
  $region76: #{predictor_forward.1} parent=0 // pred_region
    _
  $region77: #{predictor_forward.1} parent=0 // pred_fallthru
    _

</llo_original>
